<compile_context>
chip_gen: v7x
topology: tpu7x:2x2x1
jax: 0.10.0
libtpu: 0.0.40
codegen_flags: <defaults>
</compile_context>

<pallas_src>
import functools

import jax
import jax.numpy as jnp
from jax.experimental import pallas as pl
from jax.experimental.pallas import tpu as pltpu


# ----------------------------------------------------------------------------
# Kernel
# ----------------------------------------------------------------------------
def _sigmoid(x):
    return 1.0 / (1.0 + jnp.exp(-x))


def _elu(x):
    # alpha = 1.0 (torch default).  exp/where only -> guaranteed Mosaic lowering.
    return jnp.where(x > 0, x, jnp.exp(x) - 1.0)


def _vsn_kernel(
    emb_ref,
    # flattened-input GRN (input = n_vars*m, hidden = H, output = n_vars)
    f_skip_w, f_skip_b, f_d1_w, f_d1_b, f_d2_w, f_d2_b,
    f_ga_w, f_ga_b, f_gb_w, f_gb_b, f_bn_s, f_bn_t,
    # per-variable GRNs, stacked on a leading n_vars axis (input = m, hid = out = H)
    v_skip_w, v_skip_b, v_d1_w, v_d1_b, v_d2_w, v_d2_b,
    v_ga_w, v_ga_b, v_gb_w, v_gb_b, v_bn_s, v_bn_t,
    # outputs
    combined_ref, weights_ref,
):
    f32 = jnp.float32
    emb = emb_ref[...]                      # (bB, n_vars * m)
    bB = emb.shape[0]
    n_vars, m, H = v_d1_w.shape

    # ---- flattened-input GRN -> variable selection logits -------------------
    a = jnp.dot(emb, f_skip_w[...], preferred_element_type=f32) + f_skip_b[...]
    h = jnp.dot(emb, f_d1_w[...], preferred_element_type=f32) + f_d1_b[...]
    eta2 = _elu(h)
    eta1 = jnp.dot(eta2, f_d2_w[...], preferred_element_type=f32) + f_d2_b[...]
    # dropout(p) is the identity at inference.
    # TODO(synk): for dropout > 0 in training, draw a mask with pltpu.prng_random_bits.
    gate = _sigmoid(jnp.dot(eta1, f_gb_w[...], preferred_element_type=f32) + f_gb_b[...])
    lin = jnp.dot(eta1, f_ga_w[...], preferred_element_type=f32) + f_ga_b[...]
    glu = gate * lin + a
    # eval-mode BatchNorm1d folded (host-side) into an affine scale/shift.
    logits = glu * f_bn_s[...] + f_bn_t[...]            # (bB, n_vars)

    # softmax over the variable axis (last dim), numerically stabilized
    mx = jnp.max(logits, axis=-1, keepdims=True)
    e = jnp.exp(logits - mx)
    denom = jnp.sum(e, axis=-1, keepdims=True)
    w = e * pl.reciprocal(denom, approx=True)           # (bB, n_vars)
    weights_ref[...] = w.astype(weights_ref.dtype)

    # ---- per-variable GRNs, weighted and summed in registers ----------------
    acc = jnp.zeros((bB, H), dtype=f32)
    for i in range(n_vars):                             # static unroll, n_vars is small
        x_i = emb[:, i * m:(i + 1) * m]                 # (bB, m)
        a_i = jnp.dot(x_i, v_skip_w[i], preferred_element_type=f32) + v_skip_b[i:i + 1, :]
        h_i = _elu(jnp.dot(x_i, v_d1_w[i], preferred_element_type=f32) + v_d1_b[i:i + 1, :])
        e1_i = jnp.dot(h_i, v_d2_w[i], preferred_element_type=f32) + v_d2_b[i:i + 1, :]
        g_i = _sigmoid(jnp.dot(e1_i, v_gb_w[i], preferred_element_type=f32) + v_gb_b[i:i + 1, :])
        l_i = jnp.dot(e1_i, v_ga_w[i], preferred_element_type=f32) + v_ga_b[i:i + 1, :]
        t_i = (g_i * l_i + a_i) * v_bn_s[i:i + 1, :] + v_bn_t[i:i + 1, :]   # (bB, H)
        acc = acc + t_i * w[:, i:i + 1]
    combined_ref[...] = acc.astype(combined_ref.dtype)


# ----------------------------------------------------------------------------
# Wrapper
# ----------------------------------------------------------------------------
def variable_selection_network(embedding, params, *, block_rows=128, eps=1e-5):
    """embedding: (T, N, n_vars * input_size)  -> (combined (T,N,H), weights (T,N,1,n_vars))."""
    T, N, F = embedding.shape
    flat, var = params["flat"], params["vars"]
    n_vars, m, H = var["d1_w"].shape
    assert F == n_vars * m

    def fold_bn(gamma, beta, mean, variance):
        scale = gamma / jnp.sqrt(variance + eps)
        shift = beta - mean * scale
        return scale, shift

    f_bn_s, f_bn_t = fold_bn(flat["bn_gamma"], flat["bn_beta"], flat["bn_mean"], flat["bn_var"])
    v_bn_s, v_bn_t = fold_bn(var["bn_gamma"], var["bn_beta"], var["bn_mean"], var["bn_var"])

    row2 = lambda v: v.reshape(1, -1)   # biases / BN vectors -> 2-D lane rows

    flat_args = [
        flat["skip_w"], row2(flat["skip_b"]),
        flat["d1_w"],   row2(flat["d1_b"]),
        flat["d2_w"],   row2(flat["d2_b"]),
        flat["ga_w"],   row2(flat["ga_b"]),
        flat["gb_w"],   row2(flat["gb_b"]),
        row2(f_bn_s),   row2(f_bn_t),
    ]
    var_args = [
        var["skip_w"], var["skip_b"],
        var["d1_w"],   var["d1_b"],
        var["d2_w"],   var["d2_b"],
        var["ga_w"],   var["ga_b"],
        var["gb_w"],   var["gb_b"],
        v_bn_s,        v_bn_t,
    ]

    # Flatten (T, N) -> rows and fold many rows into each grid step (amortizes the
    # ~0.35us per-step pipeline overhead; gives large contiguous DMAs).
    B = T * N
    bB = min(block_rows, ((B + 7) // 8) * 8)
    B_pad = ((B + bB - 1) // bB) * bB
    x = embedding.reshape(B, F)
    if B_pad != B:
        x = jnp.pad(x, ((0, B_pad - B), (0, 0)))

    def full_spec(shape):
        nd = len(shape)
        return pl.BlockSpec(shape, lambda r, _nd=nd: (0,) * _nd)

    out_shapes = (
        jax.ShapeDtypeStruct((B_pad, H), embedding.dtype),        # combined
        jax.ShapeDtypeStruct((B_pad, n_vars), embedding.dtype),   # selection weights
    )

    combined, weights = pl.pallas_call(
        _vsn_kernel,
        out_shape=out_shapes,
        grid_spec=pltpu.PrefetchScalarGridSpec(
            num_scalar_prefetch=0,
            grid=(B_pad // bB,),
            in_specs=[pl.BlockSpec((bB, F), lambda r: (r, 0))]
                     + [full_spec(p.shape) for p in flat_args + var_args],
            out_specs=[pl.BlockSpec((bB, H), lambda r: (r, 0)),
                       pl.BlockSpec((bB, n_vars), lambda r: (r, 0))],
        ),
        compiler_params=pltpu.CompilerParams(
            dimension_semantics=("parallel",),   # shards row-blocks across TCs on v7x
        ),
    )(x, *flat_args, *var_args)

    combined = combined[:B].reshape(T, N, H)
    weights = weights[:B].reshape(T, N, 1, n_vars)   # matches torch .unsqueeze(2)
    return combined, weights


# ----------------------------------------------------------------------------
# Parameter initialization (mirrors the PyTorch module structure, eval mode)
# ----------------------------------------------------------------------------
def init_vsn_params(key, input_size, n_vars, hidden_size, dtype=jnp.float32):
    ks = iter(jax.random.split(key, 256))

    def dense(in_dim, out_dim):
        # weights stored pre-transposed to (in, out) so the kernel never transposes
        w = 0.1 * jax.random.normal(next(ks), (in_dim, out_dim), dtype)
        b = 0.05 * jax.random.normal(next(ks), (out_dim,), dtype)
        return w, b

    def bn(dim):
        gamma = 1.0 + 0.1 * jax.random.normal(next(ks), (dim,), dtype)
        beta = 0.1 * jax.random.normal(next(ks), (dim,), dtype)
        mean = 0.1 * jax.random.normal(next(ks), (dim,), dtype)
        variance = 1.0 + 0.1 * jax.random.uniform(next(ks), (dim,), dtype)
        return gamma, beta, mean, variance

    def grn(in_dim, hid, out_dim):
        if in_dim != out_dim:
            skip_w, skip_b = dense(in_dim, out_dim)
        else:  # PyTorch GRN uses a = x when sizes match -> identity skip
            skip_w = jnp.eye(in_dim, dtype=dtype)
            skip_b = jnp.zeros((out_dim,), dtype)
        d1_w, d1_b = dense(in_dim, hid)
        d2_w, d2_b = dense(hid, out_dim)
        ga_w, ga_b = dense(out_dim, out_dim)
        gb_w, gb_b = dense(out_dim, out_dim)
        g, b_, m_, v_ = bn(out_dim)
        return dict(skip_w=skip_w, skip_b=skip_b, d1_w=d1_w, d1_b=d1_b,
                    d2_w=d2_w, d2_b=d2_b, ga_w=ga_w, ga_b=ga_b,
                    gb_w=gb_w, gb_b=gb_b,
                    bn_gamma=g, bn_beta=b_, bn_mean=m_, bn_var=v_)

    flat = grn(n_vars * input_size, hidden_size, n_vars)
    var_list = [grn(input_size, hidden_size, hidden_size) for _ in range(n_vars)]
    var = {k: jnp.stack([p[k] for p in var_list], axis=0) for k in var_list[0]}
    return dict(flat=flat, vars=var)


# ----------------------------------------------------------------------------
# Pure-JAX reference (mirrors the PyTorch forward, eval mode)
# ----------------------------------------------------------------------------
def _grn_ref(x, p, eps=1e-5):
    a = x @ p["skip_w"] + p["skip_b"]
    h = jax.nn.elu(x @ p["d1_w"] + p["d1_b"])
    e1 = h @ p["d2_w"] + p["d2_b"]
    gate = jax.nn.sigmoid(e1 @ p["gb_w"] + p["gb_b"])
    g = gate * (e1 @ p["ga_w"] + p["ga_b"]) + a
    return (g - p["bn_mean"]) / jnp.sqrt(p["bn_var"] + eps) * p["bn_gamma"] + p["bn_beta"]


def vsn_reference(embedding, params, eps=1e-5):
    T, N, F = embedding.shape
    flat, var = params["flat"], params["vars"]
    n_vars, m, H = var["d1_w"].shape
    x = embedding.reshape(T * N, F)
    weights = jax.nn.softmax(_grn_ref(x, flat, eps), axis=-1)            # (B, n_vars)
    outs = [_grn_ref(x[:, i * m:(i + 1) * m], {k: v[i] for k, v in var.items()}, eps)
            for i in range(n_vars)]
    trans = jnp.stack(outs, axis=-1)                                     # (B, H, n_vars)
    combined = jnp.sum(trans * weights[:, None, :], axis=-1)             # (B, H)
    return combined.reshape(T, N, H), weights.reshape(T, N, 1, n_vars)


# ----------------------------------------------------------------------------
if __name__ == "__main__":
    key0 = jax.random.PRNGKey(0)
    k_emb, k_par = jax.random.split(key0)

    # small, module-consistent shapes: T=8 time steps, N=4 batch,
    # n_vars=4 variables each with input_size=8 features, hidden=32
    T, N = 8, 4
    input_size, n_vars, hidden = 8, 4, 32

    embedding = jax.random.normal(k_emb, (T, N, n_vars * input_size), dtype=jnp.float32)
    params = init_vsn_params(k_par, input_size, n_vars, hidden)

    combined, weights = variable_selection_network(embedding, params)
    combined = jax.block_until_ready(combined)
    weights = jax.block_until_ready(weights)

    ref_c, ref_w = vsn_reference(embedding, params)

    assert combined.shape == (T, N, hidden)
    assert weights.shape == (T, N, 1, n_vars)
    # tolerance accounts for the EUP approximate reciprocal in the in-kernel softmax
    assert jnp.allclose(weights, ref_w, atol=5e-3, rtol=5e-3)
    assert jnp.allclose(combined, ref_c, atol=5e-3, rtol=5e-3)

    print("KERNEL_OK")
</pallas_src>

<mosaic_0001>
module attributes {stable_mosaic.version = 11 : i64} {
  func.func @_vsn_kernel(%arg0: i32, %arg1: memref<32x32xf32, #tpu.memory_space<vmem>>, %arg2: memref<32x4xf32, #tpu.memory_space<vmem>>, %arg3: memref<1x4xf32, #tpu.memory_space<vmem>>, %arg4: memref<32x32xf32, #tpu.memory_space<vmem>>, %arg5: memref<1x32xf32, #tpu.memory_space<vmem>>, %arg6: memref<32x4xf32, #tpu.memory_space<vmem>>, %arg7: memref<1x4xf32, #tpu.memory_space<vmem>>, %arg8: memref<4x4xf32, #tpu.memory_space<vmem>>, %arg9: memref<1x4xf32, #tpu.memory_space<vmem>>, %arg10: memref<4x4xf32, #tpu.memory_space<vmem>>, %arg11: memref<1x4xf32, #tpu.memory_space<vmem>>, %arg12: memref<1x4xf32, #tpu.memory_space<vmem>>, %arg13: memref<1x4xf32, #tpu.memory_space<vmem>>, %arg14: memref<4x8x32xf32, #tpu.memory_space<vmem>>, %arg15: memref<4x32xf32, #tpu.memory_space<vmem>>, %arg16: memref<4x8x32xf32, #tpu.memory_space<vmem>>, %arg17: memref<4x32xf32, #tpu.memory_space<vmem>>, %arg18: memref<4x32x32xf32, #tpu.memory_space<vmem>>, %arg19: memref<4x32xf32, #tpu.memory_space<vmem>>, %arg20: memref<4x32x32xf32, #tpu.memory_space<vmem>>, %arg21: memref<4x32xf32, #tpu.memory_space<vmem>>, %arg22: memref<4x32x32xf32, #tpu.memory_space<vmem>>, %arg23: memref<4x32xf32, #tpu.memory_space<vmem>>, %arg24: memref<4x32xf32, #tpu.memory_space<vmem>>, %arg25: memref<4x32xf32, #tpu.memory_space<vmem>>, %arg26: memref<32x32xf32, #tpu.memory_space<vmem>>, %arg27: memref<32x4xf32, #tpu.memory_space<vmem>>) attributes {dimension_semantics = [#tpu.dimension_semantics<parallel>], iteration_bounds = array<i64: 1>, scalar_prefetch = 0 : i64, scratch_operands = 0 : i64, tpu.core_type = #tpu.core_type<tc>, window_params = [{transform_indices = @transform_0, window_bounds = array<i64: 32, 32>}, {pipeline_mode = #tpu.pipeline_mode<synchronous>, transform_indices = @transform_1, window_bounds = array<i64: 32, 4>}, {pipeline_mode = #tpu.pipeline_mode<synchronous>, transform_indices = @transform_2, window_bounds = array<i64: 1, 4>}, {pipeline_mode = #tpu.pipeline_mode<synchronous>, transform_indices = @transform_3, window_bounds = array<i64: 32, 32>}, {pipeline_mode = #tpu.pipeline_mode<synchronous>, transform_indices = @transform_4, window_bounds = array<i64: 1, 32>}, {pipeline_mode = #tpu.pipeline_mode<synchronous>, transform_indices = @transform_5, window_bounds = array<i64: 32, 4>}, {pipeline_mode = #tpu.pipeline_mode<synchronous>, transform_indices = @transform_6, window_bounds = array<i64: 1, 4>}, {pipeline_mode = #tpu.pipeline_mode<synchronous>, transform_indices = @transform_7, window_bounds = array<i64: 4, 4>}, {pipeline_mode = #tpu.pipeline_mode<synchronous>, transform_indices = @transform_8, window_bounds = array<i64: 1, 4>}, {pipeline_mode = #tpu.pipeline_mode<synchronous>, transform_indices = @transform_9, window_bounds = array<i64: 4, 4>}, {pipeline_mode = #tpu.pipeline_mode<synchronous>, transform_indices = @transform_10, window_bounds = array<i64: 1, 4>}, {pipeline_mode = #tpu.pipeline_mode<synchronous>, transform_indices = @transform_11, window_bounds = array<i64: 1, 4>}, {pipeline_mode = #tpu.pipeline_mode<synchronous>, transform_indices = @transform_12, window_bounds = array<i64: 1, 4>}, {pipeline_mode = #tpu.pipeline_mode<synchronous>, transform_indices = @transform_13, window_bounds = array<i64: 4, 8, 32>}, {pipeline_mode = #tpu.pipeline_mode<synchronous>, transform_indices = @transform_14, window_bounds = array<i64: 4, 32>}, {pipeline_mode = #tpu.pipeline_mode<synchronous>, transform_indices = @transform_15, window_bounds = array<i64: 4, 8, 32>}, {pipeline_mode = #tpu.pipeline_mode<synchronous>, transform_indices = @transform_16, window_bounds = array<i64: 4, 32>}, {pipeline_mode = #tpu.pipeline_mode<synchronous>, transform_indices = @transform_17, window_bounds = array<i64: 4, 32, 32>}, {pipeline_mode = #tpu.pipeline_mode<synchronous>, transform_indices = @transform_18, window_bounds = array<i64: 4, 32>}, {pipeline_mode = #tpu.pipeline_mode<synchronous>, transform_indices = @transform_19, window_bounds = array<i64: 4, 32, 32>}, {pipeline_mode = #tpu.pipeline_mode<synchronous>, transform_indices = @transform_20, window_bounds = array<i64: 4, 32>}, {pipeline_mode = #tpu.pipeline_mode<synchronous>, transform_indices = @transform_21, window_bounds = array<i64: 4, 32, 32>}, {pipeline_mode = #tpu.pipeline_mode<synchronous>, transform_indices = @transform_22, window_bounds = array<i64: 4, 32>}, {pipeline_mode = #tpu.pipeline_mode<synchronous>, transform_indices = @transform_23, window_bounds = array<i64: 4, 32>}, {pipeline_mode = #tpu.pipeline_mode<synchronous>, transform_indices = @transform_24, window_bounds = array<i64: 4, 32>}, {transform_indices = @transform_25, window_bounds = array<i64: 32, 32>}, {transform_indices = @transform_26, window_bounds = array<i64: 32, 4>}]} {
    %c0 = arith.constant 0 : index
    %c0_0 = arith.constant 0 : index
    %0 = vector.load %arg1[%c0, %c0_0] : memref<32x32xf32, #tpu.memory_space<vmem>>, vector<32x32xf32>
    %c0_1 = arith.constant 0 : index
    %c0_2 = arith.constant 0 : index
    %1 = vector.load %arg2[%c0_1, %c0_2] : memref<32x4xf32, #tpu.memory_space<vmem>>, vector<32x4xf32>
    %cst = arith.constant dense<0.000000e+00> : vector<32x4xf32>
    %2 = tpu.matmul %0, %1, %cst {dimension_numbers = #tpu.dot_dimension_numbers<[1], [0], [0], [1], [0, 0, 1, 1], [], []>} : vector<32x32xf32>, vector<32x4xf32>, vector<32x4xf32> -> vector<32x4xf32>
    %c0_3 = arith.constant 0 : index
    %c0_4 = arith.constant 0 : index
    %3 = vector.load %arg3[%c0_3, %c0_4] : memref<1x4xf32, #tpu.memory_space<vmem>>, vector<1x4xf32>
    %4 = vector.broadcast %3 : vector<1x4xf32> to vector<32x4xf32>
    %5 = arith.addf %2, %4 : vector<32x4xf32>
    %c0_5 = arith.constant 0 : index
    %c0_6 = arith.constant 0 : index
    %6 = vector.load %arg4[%c0_5, %c0_6] : memref<32x32xf32, #tpu.memory_space<vmem>>, vector<32x32xf32>
    %cst_7 = arith.constant dense<0.000000e+00> : vector<32x32xf32>
    %7 = tpu.matmul %0, %6, %cst_7 {dimension_numbers = #tpu.dot_dimension_numbers<[1], [0], [0], [1], [0, 0, 1, 1], [], []>} : vector<32x32xf32>, vector<32x32xf32>, vector<32x32xf32> -> vector<32x32xf32>
    %c0_8 = arith.constant 0 : index
    %c0_9 = arith.constant 0 : index
    %8 = vector.load %arg5[%c0_8, %c0_9] : memref<1x32xf32, #tpu.memory_space<vmem>>, vector<1x32xf32>
    %9 = vector.broadcast %8 : vector<1x32xf32> to vector<32x32xf32>
    %10 = arith.addf %7, %9 : vector<32x32xf32>
    %cst_10 = arith.constant 0.000000e+00 : f32
    %11 = vector.broadcast %cst_10 : f32 to vector<32x32xf32>
    %12 = arith.cmpf ogt, %10, %11 : vector<32x32xf32>
    %13 = math.exp %10 : vector<32x32xf32>
    %cst_11 = arith.constant 1.000000e+00 : f32
    %14 = vector.broadcast %cst_11 : f32 to vector<32x32xf32>
    %15 = arith.subf %13, %14 : vector<32x32xf32>
    %16 = arith.select %12, %10, %15 : vector<32x32xi1>, vector<32x32xf32>
    %c0_12 = arith.constant 0 : index
    %c0_13 = arith.constant 0 : index
    %17 = vector.load %arg6[%c0_12, %c0_13] : memref<32x4xf32, #tpu.memory_space<vmem>>, vector<32x4xf32>
    %cst_14 = arith.constant dense<0.000000e+00> : vector<32x4xf32>
    %18 = tpu.matmul %16, %17, %cst_14 {dimension_numbers = #tpu.dot_dimension_numbers<[1], [0], [0], [1], [0, 0, 1, 1], [], []>} : vector<32x32xf32>, vector<32x4xf32>, vector<32x4xf32> -> vector<32x4xf32>
    %c0_15 = arith.constant 0 : index
    %c0_16 = arith.constant 0 : index
    %19 = vector.load %arg7[%c0_15, %c0_16] : memref<1x4xf32, #tpu.memory_space<vmem>>, vector<1x4xf32>
    %20 = vector.broadcast %19 : vector<1x4xf32> to vector<32x4xf32>
    %21 = arith.addf %18, %20 : vector<32x4xf32>
    %c0_17 = arith.constant 0 : index
    %c0_18 = arith.constant 0 : index
    %22 = vector.load %arg10[%c0_17, %c0_18] : memref<4x4xf32, #tpu.memory_space<vmem>>, vector<4x4xf32>
    %cst_19 = arith.constant dense<0.000000e+00> : vector<32x4xf32>
    %23 = tpu.matmul %21, %22, %cst_19 {dimension_numbers = #tpu.dot_dimension_numbers<[1], [0], [0], [1], [0, 0, 1, 1], [], []>} : vector<32x4xf32>, vector<4x4xf32>, vector<32x4xf32> -> vector<32x4xf32>
    %c0_20 = arith.constant 0 : index
    %c0_21 = arith.constant 0 : index
    %24 = vector.load %arg11[%c0_20, %c0_21] : memref<1x4xf32, #tpu.memory_space<vmem>>, vector<1x4xf32>
    %25 = vector.broadcast %24 : vector<1x4xf32> to vector<32x4xf32>
    %26 = arith.addf %23, %25 : vector<32x4xf32>
    %cst_22 = arith.constant 0.000000e+00 : f32
    %27 = vector.broadcast %cst_22 : f32 to vector<32x4xf32>
    %28 = arith.subf %27, %26 : vector<32x4xf32>
    %29 = math.exp %28 : vector<32x4xf32>
    %cst_23 = arith.constant 1.000000e+00 : f32
    %30 = vector.broadcast %cst_23 : f32 to vector<32x4xf32>
    %31 = arith.addf %30, %29 : vector<32x4xf32>
    %cst_24 = arith.constant 1.000000e+00 : f32
    %32 = vector.broadcast %cst_24 : f32 to vector<32x4xf32>
    %33 = arith.divf %32, %31 : vector<32x4xf32>
    %c0_25 = arith.constant 0 : index
    %c0_26 = arith.constant 0 : index
    %34 = vector.load %arg8[%c0_25, %c0_26] : memref<4x4xf32, #tpu.memory_space<vmem>>, vector<4x4xf32>
    %cst_27 = arith.constant dense<0.000000e+00> : vector<32x4xf32>
    %35 = tpu.matmul %21, %34, %cst_27 {dimension_numbers = #tpu.dot_dimension_numbers<[1], [0], [0], [1], [0, 0, 1, 1], [], []>} : vector<32x4xf32>, vector<4x4xf32>, vector<32x4xf32> -> vector<32x4xf32>
    %c0_28 = arith.constant 0 : index
    %c0_29 = arith.constant 0 : index
    %36 = vector.load %arg9[%c0_28, %c0_29] : memref<1x4xf32, #tpu.memory_space<vmem>>, vector<1x4xf32>
    %37 = vector.broadcast %36 : vector<1x4xf32> to vector<32x4xf32>
    %38 = arith.addf %35, %37 : vector<32x4xf32>
    %39 = arith.mulf %33, %38 : vector<32x4xf32>
    %40 = arith.addf %39, %5 : vector<32x4xf32>
    %c0_30 = arith.constant 0 : index
    %c0_31 = arith.constant 0 : index
    %41 = vector.load %arg12[%c0_30, %c0_31] : memref<1x4xf32, #tpu.memory_space<vmem>>, vector<1x4xf32>
    %42 = vector.broadcast %41 : vector<1x4xf32> to vector<32x4xf32>
    %43 = arith.mulf %40, %42 : vector<32x4xf32>
    %c0_32 = arith.constant 0 : index
    %c0_33 = arith.constant 0 : index
    %44 = vector.load %arg13[%c0_32, %c0_33] : memref<1x4xf32, #tpu.memory_space<vmem>>, vector<1x4xf32>
    %45 = vector.broadcast %44 : vector<1x4xf32> to vector<32x4xf32>
    %46 = arith.addf %43, %45 : vector<32x4xf32>
    %cst_34 = arith.constant dense<0xFF800000> : vector<32xf32>
    %47 = vector.multi_reduction <maximumf>, %46, %cst_34 [1] : vector<32x4xf32> to vector<32xf32>
    %48 = vector.shape_cast %47 : vector<32xf32> to vector<32x1xf32>
    %49 = vector.broadcast %48 : vector<32x1xf32> to vector<32x4xf32>
    %50 = arith.subf %46, %49 : vector<32x4xf32>
    %51 = math.exp %50 : vector<32x4xf32>
    %cst_35 = arith.constant dense<0.000000e+00> : vector<32xf32>
    %52 = vector.multi_reduction <add>, %51, %cst_35 [1] : vector<32x4xf32> to vector<32xf32>
    %53 = vector.shape_cast %52 : vector<32xf32> to vector<32x1xf32>
    %54 = tpu.reciprocal %53 {approx = true} : vector<32x1xf32> -> vector<32x1xf32>
    %55 = vector.broadcast %54 : vector<32x1xf32> to vector<32x4xf32>
    %56 = arith.mulf %51, %55 : vector<32x4xf32>
    %c0_36 = arith.constant 0 : index
    %c0_37 = arith.constant 0 : index
    %57 = vector.load %arg27[%c0_36, %c0_37] : memref<32x4xf32, #tpu.memory_space<vmem>>, vector<32x4xf32>
    tpu.vector_store %arg27[%c0_36, %c0_37], %56 {strides = array<i32>} : memref<32x4xf32, #tpu.memory_space<vmem>>, vector<32x4xf32>,
    %cst_38 = arith.constant 0.000000e+00 : f32
    %58 = vector.broadcast %cst_38 : f32 to vector<32x32xf32>
    %59 = vector.extract_strided_slice %0 {offsets = [0, 0], sizes = [32, 8], strides = [1, 1]} : vector<32x32xf32> to vector<32x8xf32>
    %c0_39 = arith.constant 0 : index
    %c0_40 = arith.constant 0 : index
    %c0_41 = arith.constant 0 : index
    %60 = vector.load %arg14[%c0_39, %c0_40, %c0_41] : memref<4x8x32xf32, #tpu.memory_space<vmem>>, vector<1x8x32xf32>
    %61 = vector.shape_cast %60 : vector<1x8x32xf32> to vector<8x32xf32>
    %cst_42 = arith.constant dense<0.000000e+00> : vector<32x32xf32>
    %62 = tpu.matmul %59, %61, %cst_42 {dimension_numbers = #tpu.dot_dimension_numbers<[1], [0], [0], [1], [0, 0, 1, 1], [], []>} : vector<32x8xf32>, vector<8x32xf32>, vector<32x32xf32> -> vector<32x32xf32>
    %c0_43 = arith.constant 0 : index
    %c0_44 = arith.constant 0 : index
    %63 = vector.load %arg15[%c0_43, %c0_44] : memref<4x32xf32, #tpu.memory_space<vmem>>, vector<1x32xf32>
    %64 = vector.broadcast %63 : vector<1x32xf32> to vector<32x32xf32>
    %65 = arith.addf %62, %64 : vector<32x32xf32>
    %c0_45 = arith.constant 0 : index
    %c0_46 = arith.constant 0 : index
    %c0_47 = arith.constant 0 : index
    %66 = vector.load %arg16[%c0_45, %c0_46, %c0_47] : memref<4x8x32xf32, #tpu.memory_space<vmem>>, vector<1x8x32xf32>
    %67 = vector.shape_cast %66 : vector<1x8x32xf32> to vector<8x32xf32>
    %cst_48 = arith.constant dense<0.000000e+00> : vector<32x32xf32>
    %68 = tpu.matmul %59, %67, %cst_48 {dimension_numbers = #tpu.dot_dimension_numbers<[1], [0], [0], [1], [0, 0, 1, 1], [], []>} : vector<32x8xf32>, vector<8x32xf32>, vector<32x32xf32> -> vector<32x32xf32>
    %c0_49 = arith.constant 0 : index
    %c0_50 = arith.constant 0 : index
    %69 = vector.load %arg17[%c0_49, %c0_50] : memref<4x32xf32, #tpu.memory_space<vmem>>, vector<1x32xf32>
    %70 = vector.broadcast %69 : vector<1x32xf32> to vector<32x32xf32>
    %71 = arith.addf %68, %70 : vector<32x32xf32>
    %cst_51 = arith.constant 0.000000e+00 : f32
    %72 = vector.broadcast %cst_51 : f32 to vector<32x32xf32>
    %73 = arith.cmpf ogt, %71, %72 : vector<32x32xf32>
    %74 = math.exp %71 : vector<32x32xf32>
    %cst_52 = arith.constant 1.000000e+00 : f32
    %75 = vector.broadcast %cst_52 : f32 to vector<32x32xf32>
    %76 = arith.subf %74, %75 : vector<32x32xf32>
    %77 = arith.select %73, %71, %76 : vector<32x32xi1>, vector<32x32xf32>
    %c0_53 = arith.constant 0 : index
    %c0_54 = arith.constant 0 : index
    %c0_55 = arith.constant 0 : index
    %78 = vector.load %arg18[%c0_53, %c0_54, %c0_55] : memref<4x32x32xf32, #tpu.memory_space<vmem>>, vector<1x32x32xf32>
    %79 = vector.shape_cast %78 : vector<1x32x32xf32> to vector<32x32xf32>
    %cst_56 = arith.constant dense<0.000000e+00> : vector<32x32xf32>
    %80 = tpu.matmul %77, %79, %cst_56 {dimension_numbers = #tpu.dot_dimension_numbers<[1], [0], [0], [1], [0, 0, 1, 1], [], []>} : vector<32x32xf32>, vector<32x32xf32>, vector<32x32xf32> -> vector<32x32xf32>
    %c0_57 = arith.constant 0 : index
    %c0_58 = arith.constant 0 : index
    %81 = vector.load %arg19[%c0_57, %c0_58] : memref<4x32xf32, #tpu.memory_space<vmem>>, vector<1x32xf32>
    %82 = vector.broadcast %81 : vector<1x32xf32> to vector<32x32xf32>
    %83 = arith.addf %80, %82 : vector<32x32xf32>
    %c0_59 = arith.constant 0 : index
    %c0_60 = arith.constant 0 : index
    %c0_61 = arith.constant 0 : index
    %84 = vector.load %arg22[%c0_59, %c0_60, %c0_61] : memref<4x32x32xf32, #tpu.memory_space<vmem>>, vector<1x32x32xf32>
    %85 = vector.shape_cast %84 : vector<1x32x32xf32> to vector<32x32xf32>
    %cst_62 = arith.constant dense<0.000000e+00> : vector<32x32xf32>
    %86 = tpu.matmul %83, %85, %cst_62 {dimension_numbers = #tpu.dot_dimension_numbers<[1], [0], [0], [1], [0, 0, 1, 1], [], []>} : vector<32x32xf32>, vector<32x32xf32>, vector<32x32xf32> -> vector<32x32xf32>
    %c0_63 = arith.constant 0 : index
    %c0_64 = arith.constant 0 : index
    %87 = vector.load %arg23[%c0_63, %c0_64] : memref<4x32xf32, #tpu.memory_space<vmem>>, vector<1x32xf32>
    %88 = vector.broadcast %87 : vector<1x32xf32> to vector<32x32xf32>
    %89 = arith.addf %86, %88 : vector<32x32xf32>
    %cst_65 = arith.constant 0.000000e+00 : f32
    %90 = vector.broadcast %cst_65 : f32 to vector<32x32xf32>
    %91 = arith.subf %90, %89 : vector<32x32xf32>
    %92 = math.exp %91 : vector<32x32xf32>
    %cst_66 = arith.constant 1.000000e+00 : f32
    %93 = vector.broadcast %cst_66 : f32 to vector<32x32xf32>
    %94 = arith.addf %93, %92 : vector<32x32xf32>
    %cst_67 = arith.constant 1.000000e+00 : f32
    %95 = vector.broadcast %cst_67 : f32 to vector<32x32xf32>
    %96 = arith.divf %95, %94 : vector<32x32xf32>
    %c0_68 = arith.constant 0 : index
    %c0_69 = arith.constant 0 : index
    %c0_70 = arith.constant 0 : index
    %97 = vector.load %arg20[%c0_68, %c0_69, %c0_70] : memref<4x32x32xf32, #tpu.memory_space<vmem>>, vector<1x32x32xf32>
    %98 = vector.shape_cast %97 : vector<1x32x32xf32> to vector<32x32xf32>
    %cst_71 = arith.constant dense<0.000000e+00> : vector<32x32xf32>
    %99 = tpu.matmul %83, %98, %cst_71 {dimension_numbers = #tpu.dot_dimension_numbers<[1], [0], [0], [1], [0, 0, 1, 1], [], []>} : vector<32x32xf32>, vector<32x32xf32>, vector<32x32xf32> -> vector<32x32xf32>
    %c0_72 = arith.constant 0 : index
    %c0_73 = arith.constant 0 : index
    %100 = vector.load %arg21[%c0_72, %c0_73] : memref<4x32xf32, #tpu.memory_space<vmem>>, vector<1x32xf32>
    %101 = vector.broadcast %100 : vector<1x32xf32> to vector<32x32xf32>
    %102 = arith.addf %99, %101 : vector<32x32xf32>
    %103 = arith.mulf %96, %102 : vector<32x32xf32>
    %104 = arith.addf %103, %65 : vector<32x32xf32>
    %c0_74 = arith.constant 0 : index
    %c0_75 = arith.constant 0 : index
    %105 = vector.load %arg24[%c0_74, %c0_75] : memref<4x32xf32, #tpu.memory_space<vmem>>, vector<1x32xf32>
    %106 = vector.broadcast %105 : vector<1x32xf32> to vector<32x32xf32>
    %107 = arith.mulf %104, %106 : vector<32x32xf32>
    %c0_76 = arith.constant 0 : index
    %c0_77 = arith.constant 0 : index
    %108 = vector.load %arg25[%c0_76, %c0_77] : memref<4x32xf32, #tpu.memory_space<vmem>>, vector<1x32xf32>
    %109 = vector.broadcast %108 : vector<1x32xf32> to vector<32x32xf32>
    %110 = arith.addf %107, %109 : vector<32x32xf32>
    %111 = vector.extract_strided_slice %56 {offsets = [0, 0], sizes = [32, 1], strides = [1, 1]} : vector<32x4xf32> to vector<32x1xf32>
    %112 = vector.broadcast %111 : vector<32x1xf32> to vector<32x32xf32>
    %113 = arith.mulf %110, %112 : vector<32x32xf32>
    %114 = arith.addf %58, %113 : vector<32x32xf32>
    %115 = vector.extract_strided_slice %0 {offsets = [0, 8], sizes = [32, 8], strides = [1, 1]} : vector<32x32xf32> to vector<32x8xf32>
    %c1 = arith.constant 1 : index
    %c0_78 = arith.constant 0 : index
    %c0_79 = arith.constant 0 : index
    %116 = vector.load %arg14[%c1, %c0_78, %c0_79] : memref<4x8x32xf32, #tpu.memory_space<vmem>>, vector<1x8x32xf32>
    %117 = vector.shape_cast %116 : vector<1x8x32xf32> to vector<8x32xf32>
    %cst_80 = arith.constant dense<0.000000e+00> : vector<32x32xf32>
    %118 = tpu.matmul %115, %117, %cst_80 {dimension_numbers = #tpu.dot_dimension_numbers<[1], [0], [0], [1], [0, 0, 1, 1], [], []>} : vector<32x8xf32>, vector<8x32xf32>, vector<32x32xf32> -> vector<32x32xf32>
    %c1_81 = arith.constant 1 : index
    %c0_82 = arith.constant 0 : index
    %119 = vector.load %arg15[%c1_81, %c0_82] : memref<4x32xf32, #tpu.memory_space<vmem>>, vector<1x32xf32>
    %120 = vector.broadcast %119 : vector<1x32xf32> to vector<32x32xf32>
    %121 = arith.addf %118, %120 : vector<32x32xf32>
    %c1_83 = arith.constant 1 : index
    %c0_84 = arith.constant 0 : index
    %c0_85 = arith.constant 0 : index
    %122 = vector.load %arg16[%c1_83, %c0_84, %c0_85] : memref<4x8x32xf32, #tpu.memory_space<vmem>>, vector<1x8x32xf32>
    %123 = vector.shape_cast %122 : vector<1x8x32xf32> to vector<8x32xf32>
    %cst_86 = arith.constant dense<0.000000e+00> : vector<32x32xf32>
    %124 = tpu.matmul %115, %123, %cst_86 {dimension_numbers = #tpu.dot_dimension_numbers<[1], [0], [0], [1], [0, 0, 1, 1], [], []>} : vector<32x8xf32>, vector<8x32xf32>, vector<32x32xf32> -> vector<32x32xf32>
    %c1_87 = arith.constant 1 : index
    %c0_88 = arith.constant 0 : index
    %125 = vector.load %arg17[%c1_87, %c0_88] : memref<4x32xf32, #tpu.memory_space<vmem>>, vector<1x32xf32>
    %126 = vector.broadcast %125 : vector<1x32xf32> to vector<32x32xf32>
    %127 = arith.addf %124, %126 : vector<32x32xf32>
    %cst_89 = arith.constant 0.000000e+00 : f32
    %128 = vector.broadcast %cst_89 : f32 to vector<32x32xf32>
    %129 = arith.cmpf ogt, %127, %128 : vector<32x32xf32>
    %130 = math.exp %127 : vector<32x32xf32>
    %cst_90 = arith.constant 1.000000e+00 : f32
    %131 = vector.broadcast %cst_90 : f32 to vector<32x32xf32>
    %132 = arith.subf %130, %131 : vector<32x32xf32>
    %133 = arith.select %129, %127, %132 : vector<32x32xi1>, vector<32x32xf32>
    %c1_91 = arith.constant 1 : index
    %c0_92 = arith.constant 0 : index
    %c0_93 = arith.constant 0 : index
    %134 = vector.load %arg18[%c1_91, %c0_92, %c0_93] : memref<4x32x32xf32, #tpu.memory_space<vmem>>, vector<1x32x32xf32>
    %135 = vector.shape_cast %134 : vector<1x32x32xf32> to vector<32x32xf32>
    %cst_94 = arith.constant dense<0.000000e+00> : vector<32x32xf32>
    %136 = tpu.matmul %133, %135, %cst_94 {dimension_numbers = #tpu.dot_dimension_numbers<[1], [0], [0], [1], [0, 0, 1, 1], [], []>} : vector<32x32xf32>, vector<32x32xf32>, vector<32x32xf32> -> vector<32x32xf32>
    %c1_95 = arith.constant 1 : index
    %c0_96 = arith.constant 0 : index
    %137 = vector.load %arg19[%c1_95, %c0_96] : memref<4x32xf32, #tpu.memory_space<vmem>>, vector<1x32xf32>
    %138 = vector.broadcast %137 : vector<1x32xf32> to vector<32x32xf32>
    %139 = arith.addf %136, %138 : vector<32x32xf32>
    %c1_97 = arith.constant 1 : index
    %c0_98 = arith.constant 0 : index
    %c0_99 = arith.constant 0 : index
    %140 = vector.load %arg22[%c1_97, %c0_98, %c0_99] : memref<4x32x32xf32, #tpu.memory_space<vmem>>, vector<1x32x32xf32>
    %141 = vector.shape_cast %140 : vector<1x32x32xf32> to vector<32x32xf32>
    %cst_100 = arith.constant dense<0.000000e+00> : vector<32x32xf32>
    %142 = tpu.matmul %139, %141, %cst_100 {dimension_numbers = #tpu.dot_dimension_numbers<[1], [0], [0], [1], [0, 0, 1, 1], [], []>} : vector<32x32xf32>, vector<32x32xf32>, vector<32x32xf32> -> vector<32x32xf32>
    %c1_101 = arith.constant 1 : index
    %c0_102 = arith.constant 0 : index
    %143 = vector.load %arg23[%c1_101, %c0_102] : memref<4x32xf32, #tpu.memory_space<vmem>>, vector<1x32xf32>
    %144 = vector.broadcast %143 : vector<1x32xf32> to vector<32x32xf32>
    %145 = arith.addf %142, %144 : vector<32x32xf32>
    %cst_103 = arith.constant 0.000000e+00 : f32
    %146 = vector.broadcast %cst_103 : f32 to vector<32x32xf32>
    %147 = arith.subf %146, %145 : vector<32x32xf32>
    %148 = math.exp %147 : vector<32x32xf32>
    %cst_104 = arith.constant 1.000000e+00 : f32
    %149 = vector.broadcast %cst_104 : f32 to vector<32x32xf32>
    %150 = arith.addf %149, %148 : vector<32x32xf32>
    %cst_105 = arith.constant 1.000000e+00 : f32
    %151 = vector.broadcast %cst_105 : f32 to vector<32x32xf32>
    %152 = arith.divf %151, %150 : vector<32x32xf32>
    %c1_106 = arith.constant 1 : index
    %c0_107 = arith.constant 0 : index
    %c0_108 = arith.constant 0 : index
    %153 = vector.load %arg20[%c1_106, %c0_107, %c0_108] : memref<4x32x32xf32, #tpu.memory_space<vmem>>, vector<1x32x32xf32>
    %154 = vector.shape_cast %153 : vector<1x32x32xf32> to vector<32x32xf32>
    %cst_109 = arith.constant dense<0.000000e+00> : vector<32x32xf32>
    %155 = tpu.matmul %139, %154, %cst_109 {dimension_numbers = #tpu.dot_dimension_numbers<[1], [0], [0], [1], [0, 0, 1, 1], [], []>} : vector<32x32xf32>, vector<32x32xf32>, vector<32x32xf32> -> vector<32x32xf32>
    %c1_110 = arith.constant 1 : index
    %c0_111 = arith.constant 0 : index
    %156 = vector.load %arg21[%c1_110, %c0_111] : memref<4x32xf32, #tpu.memory_space<vmem>>, vector<1x32xf32>
    %157 = vector.broadcast %156 : vector<1x32xf32> to vector<32x32xf32>
    %158 = arith.addf %155, %157 : vector<32x32xf32>
    %159 = arith.mulf %152, %158 : vector<32x32xf32>
    %160 = arith.addf %159, %121 : vector<32x32xf32>
    %c1_112 = arith.constant 1 : index
    %c0_113 = arith.constant 0 : index
    %161 = vector.load %arg24[%c1_112, %c0_113] : memref<4x32xf32, #tpu.memory_space<vmem>>, vector<1x32xf32>
    %162 = vector.broadcast %161 : vector<1x32xf32> to vector<32x32xf32>
    %163 = arith.mulf %160, %162 : vector<32x32xf32>
    %c1_114 = arith.constant 1 : index
    %c0_115 = arith.constant 0 : index
    %164 = vector.load %arg25[%c1_114, %c0_115] : memref<4x32xf32, #tpu.memory_space<vmem>>, vector<1x32xf32>
    %165 = vector.broadcast %164 : vector<1x32xf32> to vector<32x32xf32>
    %166 = arith.addf %163, %165 : vector<32x32xf32>
    %167 = vector.extract_strided_slice %56 {offsets = [0, 1], sizes = [32, 1], strides = [1, 1]} : vector<32x4xf32> to vector<32x1xf32>
    %168 = vector.broadcast %167 : vector<32x1xf32> to vector<32x32xf32>
    %169 = arith.mulf %166, %168 : vector<32x32xf32>
    %170 = arith.addf %114, %169 : vector<32x32xf32>
    %171 = vector.extract_strided_slice %0 {offsets = [0, 16], sizes = [32, 8], strides = [1, 1]} : vector<32x32xf32> to vector<32x8xf32>
    %c2 = arith.constant 2 : index
    %c0_116 = arith.constant 0 : index
    %c0_117 = arith.constant 0 : index
    %172 = vector.load %arg14[%c2, %c0_116, %c0_117] : memref<4x8x32xf32, #tpu.memory_space<vmem>>, vector<1x8x32xf32>
    %173 = vector.shape_cast %172 : vector<1x8x32xf32> to vector<8x32xf32>
    %cst_118 = arith.constant dense<0.000000e+00> : vector<32x32xf32>
    %174 = tpu.matmul %171, %173, %cst_118 {dimension_numbers = #tpu.dot_dimension_numbers<[1], [0], [0], [1], [0, 0, 1, 1], [], []>} : vector<32x8xf32>, vector<8x32xf32>, vector<32x32xf32> -> vector<32x32xf32>
    %c2_119 = arith.constant 2 : index
    %c0_120 = arith.constant 0 : index
    %175 = vector.load %arg15[%c2_119, %c0_120] : memref<4x32xf32, #tpu.memory_space<vmem>>, vector<1x32xf32>
    %176 = vector.broadcast %175 : vector<1x32xf32> to vector<32x32xf32>
    %177 = arith.addf %174, %176 : vector<32x32xf32>
    %c2_121 = arith.constant 2 : index
    %c0_122 = arith.constant 0 : index
    %c0_123 = arith.constant 0 : index
    %178 = vector.load %arg16[%c2_121, %c0_122, %c0_123] : memref<4x8x32xf32, #tpu.memory_space<vmem>>, vector<1x8x32xf32>
    %179 = vector.shape_cast %178 : vector<1x8x32xf32> to vector<8x32xf32>
    %cst_124 = arith.constant dense<0.000000e+00> : vector<32x32xf32>
    %180 = tpu.matmul %171, %179, %cst_124 {dimension_numbers = #tpu.dot_dimension_numbers<[1], [0], [0], [1], [0, 0, 1, 1], [], []>} : vector<32x8xf32>, vector<8x32xf32>, vector<32x32xf32> -> vector<32x32xf32>
    %c2_125 = arith.constant 2 : index
    %c0_126 = arith.constant 0 : index
    %181 = vector.load %arg17[%c2_125, %c0_126] : memref<4x32xf32, #tpu.memory_space<vmem>>, vector<1x32xf32>
    %182 = vector.broadcast %181 : vector<1x32xf32> to vector<32x32xf32>
    %183 = arith.addf %180, %182 : vector<32x32xf32>
    %cst_127 = arith.constant 0.000000e+00 : f32
    %184 = vector.broadcast %cst_127 : f32 to vector<32x32xf32>
    %185 = arith.cmpf ogt, %183, %184 : vector<32x32xf32>
    %186 = math.exp %183 : vector<32x32xf32>
    %cst_128 = arith.constant 1.000000e+00 : f32
    %187 = vector.broadcast %cst_128 : f32 to vector<32x32xf32>
    %188 = arith.subf %186, %187 : vector<32x32xf32>
    %189 = arith.select %185, %183, %188 : vector<32x32xi1>, vector<32x32xf32>
    %c2_129 = arith.constant 2 : index
    %c0_130 = arith.constant 0 : index
    %c0_131 = arith.constant 0 : index
    %190 = vector.load %arg18[%c2_129, %c0_130, %c0_131] : memref<4x32x32xf32, #tpu.memory_space<vmem>>, vector<1x32x32xf32>
    %191 = vector.shape_cast %190 : vector<1x32x32xf32> to vector<32x32xf32>
    %cst_132 = arith.constant dense<0.000000e+00> : vector<32x32xf32>
    %192 = tpu.matmul %189, %191, %cst_132 {dimension_numbers = #tpu.dot_dimension_numbers<[1], [0], [0], [1], [0, 0, 1, 1], [], []>} : vector<32x32xf32>, vector<32x32xf32>, vector<32x32xf32> -> vector<32x32xf32>
    %c2_133 = arith.constant 2 : index
    %c0_134 = arith.constant 0 : index
    %193 = vector.load %arg19[%c2_133, %c0_134] : memref<4x32xf32, #tpu.memory_space<vmem>>, vector<1x32xf32>
    %194 = vector.broadcast %193 : vector<1x32xf32> to vector<32x32xf32>
    %195 = arith.addf %192, %194 : vector<32x32xf32>
    %c2_135 = arith.constant 2 : index
    %c0_136 = arith.constant 0 : index
    %c0_137 = arith.constant 0 : index
    %196 = vector.load %arg22[%c2_135, %c0_136, %c0_137] : memref<4x32x32xf32, #tpu.memory_space<vmem>>, vector<1x32x32xf32>
    %197 = vector.shape_cast %196 : vector<1x32x32xf32> to vector<32x32xf32>
    %cst_138 = arith.constant dense<0.000000e+00> : vector<32x32xf32>
    %198 = tpu.matmul %195, %197, %cst_138 {dimension_numbers = #tpu.dot_dimension_numbers<[1], [0], [0], [1], [0, 0, 1, 1], [], []>} : vector<32x32xf32>, vector<32x32xf32>, vector<32x32xf32> -> vector<32x32xf32>
    %c2_139 = arith.constant 2 : index
    %c0_140 = arith.constant 0 : index
    %199 = vector.load %arg23[%c2_139, %c0_140] : memref<4x32xf32, #tpu.memory_space<vmem>>, vector<1x32xf32>
    %200 = vector.broadcast %199 : vector<1x32xf32> to vector<32x32xf32>
    %201 = arith.addf %198, %200 : vector<32x32xf32>
    %cst_141 = arith.constant 0.000000e+00 : f32
    %202 = vector.broadcast %cst_141 : f32 to vector<32x32xf32>
    %203 = arith.subf %202, %201 : vector<32x32xf32>
    %204 = math.exp %203 : vector<32x32xf32>
    %cst_142 = arith.constant 1.000000e+00 : f32
    %205 = vector.broadcast %cst_142 : f32 to vector<32x32xf32>
    %206 = arith.addf %205, %204 : vector<32x32xf32>
    %cst_143 = arith.constant 1.000000e+00 : f32
    %207 = vector.broadcast %cst_143 : f32 to vector<32x32xf32>
    %208 = arith.divf %207, %206 : vector<32x32xf32>
    %c2_144 = arith.constant 2 : index
    %c0_145 = arith.constant 0 : index
    %c0_146 = arith.constant 0 : index
    %209 = vector.load %arg20[%c2_144, %c0_145, %c0_146] : memref<4x32x32xf32, #tpu.memory_space<vmem>>, vector<1x32x32xf32>
    %210 = vector.shape_cast %209 : vector<1x32x32xf32> to vector<32x32xf32>
    %cst_147 = arith.constant dense<0.000000e+00> : vector<32x32xf32>
    %211 = tpu.matmul %195, %210, %cst_147 {dimension_numbers = #tpu.dot_dimension_numbers<[1], [0], [0], [1], [0, 0, 1, 1], [], []>} : vector<32x32xf32>, vector<32x32xf32>, vector<32x32xf32> -> vector<32x32xf32>
    %c2_148 = arith.constant 2 : index
    %c0_149 = arith.constant 0 : index
    %212 = vector.load %arg21[%c2_148, %c0_149] : memref<4x32xf32, #tpu.memory_space<vmem>>, vector<1x32xf32>
    %213 = vector.broadcast %212 : vector<1x32xf32> to vector<32x32xf32>
    %214 = arith.addf %211, %213 : vector<32x32xf32>
    %215 = arith.mulf %208, %214 : vector<32x32xf32>
    %216 = arith.addf %215, %177 : vector<32x32xf32>
    %c2_150 = arith.constant 2 : index
    %c0_151 = arith.constant 0 : index
    %217 = vector.load %arg24[%c2_150, %c0_151] : memref<4x32xf32, #tpu.memory_space<vmem>>, vector<1x32xf32>
    %218 = vector.broadcast %217 : vector<1x32xf32> to vector<32x32xf32>
    %219 = arith.mulf %216, %218 : vector<32x32xf32>
    %c2_152 = arith.constant 2 : index
    %c0_153 = arith.constant 0 : index
    %220 = vector.load %arg25[%c2_152, %c0_153] : memref<4x32xf32, #tpu.memory_space<vmem>>, vector<1x32xf32>
    %221 = vector.broadcast %220 : vector<1x32xf32> to vector<32x32xf32>
    %222 = arith.addf %219, %221 : vector<32x32xf32>
    %223 = vector.extract_strided_slice %56 {offsets = [0, 2], sizes = [32, 1], strides = [1, 1]} : vector<32x4xf32> to vector<32x1xf32>
    %224 = vector.broadcast %223 : vector<32x1xf32> to vector<32x32xf32>
    %225 = arith.mulf %222, %224 : vector<32x32xf32>
    %226 = arith.addf %170, %225 : vector<32x32xf32>
    %227 = vector.extract_strided_slice %0 {offsets = [0, 24], sizes = [32, 8], strides = [1, 1]} : vector<32x32xf32> to vector<32x8xf32>
    %c3 = arith.constant 3 : index
    %c0_154 = arith.constant 0 : index
    %c0_155 = arith.constant 0 : index
    %228 = vector.load %arg14[%c3, %c0_154, %c0_155] : memref<4x8x32xf32, #tpu.memory_space<vmem>>, vector<1x8x32xf32>
    %229 = vector.shape_cast %228 : vector<1x8x32xf32> to vector<8x32xf32>
    %cst_156 = arith.constant dense<0.000000e+00> : vector<32x32xf32>
    %230 = tpu.matmul %227, %229, %cst_156 {dimension_numbers = #tpu.dot_dimension_numbers<[1], [0], [0], [1], [0, 0, 1, 1], [], []>} : vector<32x8xf32>, vector<8x32xf32>, vector<32x32xf32> -> vector<32x32xf32>
    %c3_157 = arith.constant 3 : index
    %c0_158 = arith.constant 0 : index
    %231 = vector.load %arg15[%c3_157, %c0_158] : memref<4x32xf32, #tpu.memory_space<vmem>>, vector<1x32xf32>
    %232 = vector.broadcast %231 : vector<1x32xf32> to vector<32x32xf32>
    %233 = arith.addf %230, %232 : vector<32x32xf32>
    %c3_159 = arith.constant 3 : index
    %c0_160 = arith.constant 0 : index
    %c0_161 = arith.constant 0 : index
    %234 = vector.load %arg16[%c3_159, %c0_160, %c0_161] : memref<4x8x32xf32, #tpu.memory_space<vmem>>, vector<1x8x32xf32>
    %235 = vector.shape_cast %234 : vector<1x8x32xf32> to vector<8x32xf32>
    %cst_162 = arith.constant dense<0.000000e+00> : vector<32x32xf32>
    %236 = tpu.matmul %227, %235, %cst_162 {dimension_numbers = #tpu.dot_dimension_numbers<[1], [0], [0], [1], [0, 0, 1, 1], [], []>} : vector<32x8xf32>, vector<8x32xf32>, vector<32x32xf32> -> vector<32x32xf32>
    %c3_163 = arith.constant 3 : index
    %c0_164 = arith.constant 0 : index
    %237 = vector.load %arg17[%c3_163, %c0_164] : memref<4x32xf32, #tpu.memory_space<vmem>>, vector<1x32xf32>
    %238 = vector.broadcast %237 : vector<1x32xf32> to vector<32x32xf32>
    %239 = arith.addf %236, %238 : vector<32x32xf32>
    %cst_165 = arith.constant 0.000000e+00 : f32
    %240 = vector.broadcast %cst_165 : f32 to vector<32x32xf32>
    %241 = arith.cmpf ogt, %239, %240 : vector<32x32xf32>
    %242 = math.exp %239 : vector<32x32xf32>
    %cst_166 = arith.constant 1.000000e+00 : f32
    %243 = vector.broadcast %cst_166 : f32 to vector<32x32xf32>
    %244 = arith.subf %242, %243 : vector<32x32xf32>
    %245 = arith.select %241, %239, %244 : vector<32x32xi1>, vector<32x32xf32>
    %c3_167 = arith.constant 3 : index
    %c0_168 = arith.constant 0 : index
    %c0_169 = arith.constant 0 : index
    %246 = vector.load %arg18[%c3_167, %c0_168, %c0_169] : memref<4x32x32xf32, #tpu.memory_space<vmem>>, vector<1x32x32xf32>
    %247 = vector.shape_cast %246 : vector<1x32x32xf32> to vector<32x32xf32>
    %cst_170 = arith.constant dense<0.000000e+00> : vector<32x32xf32>
    %248 = tpu.matmul %245, %247, %cst_170 {dimension_numbers = #tpu.dot_dimension_numbers<[1], [0], [0], [1], [0, 0, 1, 1], [], []>} : vector<32x32xf32>, vector<32x32xf32>, vector<32x32xf32> -> vector<32x32xf32>
    %c3_171 = arith.constant 3 : index
    %c0_172 = arith.constant 0 : index
    %249 = vector.load %arg19[%c3_171, %c0_172] : memref<4x32xf32, #tpu.memory_space<vmem>>, vector<1x32xf32>
    %250 = vector.broadcast %249 : vector<1x32xf32> to vector<32x32xf32>
    %251 = arith.addf %248, %250 : vector<32x32xf32>
    %c3_173 = arith.constant 3 : index
    %c0_174 = arith.constant 0 : index
    %c0_175 = arith.constant 0 : index
    %252 = vector.load %arg22[%c3_173, %c0_174, %c0_175] : memref<4x32x32xf32, #tpu.memory_space<vmem>>, vector<1x32x32xf32>
    %253 = vector.shape_cast %252 : vector<1x32x32xf32> to vector<32x32xf32>
    %cst_176 = arith.constant dense<0.000000e+00> : vector<32x32xf32>
    %254 = tpu.matmul %251, %253, %cst_176 {dimension_numbers = #tpu.dot_dimension_numbers<[1], [0], [0], [1], [0, 0, 1, 1], [], []>} : vector<32x32xf32>, vector<32x32xf32>, vector<32x32xf32> -> vector<32x32xf32>
    %c3_177 = arith.constant 3 : index
    %c0_178 = arith.constant 0 : index
    %255 = vector.load %arg23[%c3_177, %c0_178] : memref<4x32xf32, #tpu.memory_space<vmem>>, vector<1x32xf32>
    %256 = vector.broadcast %255 : vector<1x32xf32> to vector<32x32xf32>
    %257 = arith.addf %254, %256 : vector<32x32xf32>
    %cst_179 = arith.constant 0.000000e+00 : f32
    %258 = vector.broadcast %cst_179 : f32 to vector<32x32xf32>
    %259 = arith.subf %258, %257 : vector<32x32xf32>
    %260 = math.exp %259 : vector<32x32xf32>
    %cst_180 = arith.constant 1.000000e+00 : f32
    %261 = vector.broadcast %cst_180 : f32 to vector<32x32xf32>
    %262 = arith.addf %261, %260 : vector<32x32xf32>
    %cst_181 = arith.constant 1.000000e+00 : f32
    %263 = vector.broadcast %cst_181 : f32 to vector<32x32xf32>
    %264 = arith.divf %263, %262 : vector<32x32xf32>
    %c3_182 = arith.constant 3 : index
    %c0_183 = arith.constant 0 : index
    %c0_184 = arith.constant 0 : index
    %265 = vector.load %arg20[%c3_182, %c0_183, %c0_184] : memref<4x32x32xf32, #tpu.memory_space<vmem>>, vector<1x32x32xf32>
    %266 = vector.shape_cast %265 : vector<1x32x32xf32> to vector<32x32xf32>
    %cst_185 = arith.constant dense<0.000000e+00> : vector<32x32xf32>
    %267 = tpu.matmul %251, %266, %cst_185 {dimension_numbers = #tpu.dot_dimension_numbers<[1], [0], [0], [1], [0, 0, 1, 1], [], []>} : vector<32x32xf32>, vector<32x32xf32>, vector<32x32xf32> -> vector<32x32xf32>
    %c3_186 = arith.constant 3 : index
    %c0_187 = arith.constant 0 : index
    %268 = vector.load %arg21[%c3_186, %c0_187] : memref<4x32xf32, #tpu.memory_space<vmem>>, vector<1x32xf32>
    %269 = vector.broadcast %268 : vector<1x32xf32> to vector<32x32xf32>
    %270 = arith.addf %267, %269 : vector<32x32xf32>
    %271 = arith.mulf %264, %270 : vector<32x32xf32>
    %272 = arith.addf %271, %233 : vector<32x32xf32>
    %c3_188 = arith.constant 3 : index
    %c0_189 = arith.constant 0 : index
    %273 = vector.load %arg24[%c3_188, %c0_189] : memref<4x32xf32, #tpu.memory_space<vmem>>, vector<1x32xf32>
    %274 = vector.broadcast %273 : vector<1x32xf32> to vector<32x32xf32>
    %275 = arith.mulf %272, %274 : vector<32x32xf32>
    %c3_190 = arith.constant 3 : index
    %c0_191 = arith.constant 0 : index
    %276 = vector.load %arg25[%c3_190, %c0_191] : memref<4x32xf32, #tpu.memory_space<vmem>>, vector<1x32xf32>
    %277 = vector.broadcast %276 : vector<1x32xf32> to vector<32x32xf32>
    %278 = arith.addf %275, %277 : vector<32x32xf32>
    %279 = vector.extract_strided_slice %56 {offsets = [0, 3], sizes = [32, 1], strides = [1, 1]} : vector<32x4xf32> to vector<32x1xf32>
    %280 = vector.broadcast %279 : vector<32x1xf32> to vector<32x32xf32>
    %281 = arith.mulf %278, %280 : vector<32x32xf32>
    %282 = arith.addf %226, %281 : vector<32x32xf32>
    %c0_192 = arith.constant 0 : index
    %c0_193 = arith.constant 0 : index
    %283 = vector.load %arg26[%c0_192, %c0_193] : memref<32x32xf32, #tpu.memory_space<vmem>>, vector<32x32xf32>
    tpu.vector_store %arg26[%c0_192, %c0_193], %282 {strides = array<i32>} : memref<32x32xf32, #tpu.memory_space<vmem>>, vector<32x32xf32>,
    return
  }
  func.func @transform_0(%arg0: i32) -> (i32, i32) {
    %c0_i32 = arith.constant 0 : i32
    %c0_i32_0 = arith.constant 0 : i32
    return %arg0, %c0_i32 : i32, i32
  }
  func.func @transform_1(%arg0: i32) -> (i32, i32) {
    %c0_i32 = arith.constant 0 : i32
    %c0_i32_0 = arith.constant 0 : i32
    %c0_i32_1 = arith.constant 0 : i32
    return %c0_i32, %c0_i32_0 : i32, i32
  }
  func.func @transform_2(%arg0: i32) -> (i32, i32) {
    %c0_i32 = arith.constant 0 : i32
    %c0_i32_0 = arith.constant 0 : i32
    %c0_i32_1 = arith.constant 0 : i32
    return %c0_i32, %c0_i32_0 : i32, i32
  }
  func.func @transform_3(%arg0: i32) -> (i32, i32) {
    %c0_i32 = arith.constant 0 : i32
    %c0_i32_0 = arith.constant 0 : i32
    %c0_i32_1 = arith.constant 0 : i32
    return %c0_i32, %c0_i32_0 : i32, i32
  }
  func.func @transform_4(%arg0: i32) -> (i32, i32) {
    %c0_i32 = arith.constant 0 : i32
    %c0_i32_0 = arith.constant 0 : i32
    %c0_i32_1 = arith.constant 0 : i32
    return %c0_i32, %c0_i32_0 : i32, i32
  }
  func.func @transform_5(%arg0: i32) -> (i32, i32) {
    %c0_i32 = arith.constant 0 : i32
    %c0_i32_0 = arith.constant 0 : i32
    %c0_i32_1 = arith.constant 0 : i32
    return %c0_i32, %c0_i32_0 : i32, i32
  }
  func.func @transform_6(%arg0: i32) -> (i32, i32) {
    %c0_i32 = arith.constant 0 : i32
    %c0_i32_0 = arith.constant 0 : i32
    %c0_i32_1 = arith.constant 0 : i32
    return %c0_i32, %c0_i32_0 : i32, i32
  }
  func.func @transform_7(%arg0: i32) -> (i32, i32) {
    %c0_i32 = arith.constant 0 : i32
    %c0_i32_0 = arith.constant 0 : i32
    %c0_i32_1 = arith.constant 0 : i32
    return %c0_i32, %c0_i32_0 : i32, i32
  }
  func.func @transform_8(%arg0: i32) -> (i32, i32) {
    %c0_i32 = arith.constant 0 : i32
    %c0_i32_0 = arith.constant 0 : i32
    %c0_i32_1 = arith.constant 0 : i32
    return %c0_i32, %c0_i32_0 : i32, i32
  }
  func.func @transform_9(%arg0: i32) -> (i32, i32) {
    %c0_i32 = arith.constant 0 : i32
    %c0_i32_0 = arith.constant 0 : i32
    %c0_i32_1 = arith.constant 0 : i32
    return %c0_i32, %c0_i32_0 : i32, i32
  }
  func.func @transform_10(%arg0: i32) -> (i32, i32) {
    %c0_i32 = arith.constant 0 : i32
    %c0_i32_0 = arith.constant 0 : i32
    %c0_i32_1 = arith.constant 0 : i32
    return %c0_i32, %c0_i32_0 : i32, i32
  }
  func.func @transform_11(%arg0: i32) -> (i32, i32) {
    %c0_i32 = arith.constant 0 : i32
    %c0_i32_0 = arith.constant 0 : i32
    %c0_i32_1 = arith.constant 0 : i32
    return %c0_i32, %c0_i32_0 : i32, i32
  }
  func.func @transform_12(%arg0: i32) -> (i32, i32) {
    %c0_i32 = arith.constant 0 : i32
    %c0_i32_0 = arith.constant 0 : i32
    %c0_i32_1 = arith.constant 0 : i32
    return %c0_i32, %c0_i32_0 : i32, i32
  }
  func.func @transform_13(%arg0: i32) -> (i32, i32, i32) {
    %c0_i32 = arith.constant 0 : i32
    %c0_i32_0 = arith.constant 0 : i32
    %c0_i32_1 = arith.constant 0 : i32
    %c0_i32_2 = arith.constant 0 : i32
    return %c0_i32, %c0_i32_0, %c0_i32_1 : i32, i32, i32
  }
  func.func @transform_14(%arg0: i32) -> (i32, i32) {
    %c0_i32 = arith.constant 0 : i32
    %c0_i32_0 = arith.constant 0 : i32
    %c0_i32_1 = arith.constant 0 : i32
    return %c0_i32, %c0_i32_0 : i32, i32
  }
  func.func @transform_15(%arg0: i32) -> (i32, i32, i32) {
    %c0_i32 = arith.constant 0 : i32
    %c0_i32_0 = arith.constant 0 : i32
    %c0_i32_1 = arith.constant 0 : i32
    %c0_i32_2 = arith.constant 0 : i32
    return %c0_i32, %c0_i32_0, %c0_i32_1 : i32, i32, i32
  }
  func.func @transform_16(%arg0: i32) -> (i32, i32) {
    %c0_i32 = arith.constant 0 : i32
    %c0_i32_0 = arith.constant 0 : i32
    %c0_i32_1 = arith.constant 0 : i32
    return %c0_i32, %c0_i32_0 : i32, i32
  }
  func.func @transform_17(%arg0: i32) -> (i32, i32, i32) {
    %c0_i32 = arith.constant 0 : i32
    %c0_i32_0 = arith.constant 0 : i32
    %c0_i32_1 = arith.constant 0 : i32
    %c0_i32_2 = arith.constant 0 : i32
    return %c0_i32, %c0_i32_0, %c0_i32_1 : i32, i32, i32
  }
  func.func @transform_18(%arg0: i32) -> (i32, i32) {
    %c0_i32 = arith.constant 0 : i32
    %c0_i32_0 = arith.constant 0 : i32
    %c0_i32_1 = arith.constant 0 : i32
    return %c0_i32, %c0_i32_0 : i32, i32
  }
  func.func @transform_19(%arg0: i32) -> (i32, i32, i32) {
    %c0_i32 = arith.constant 0 : i32
    %c0_i32_0 = arith.constant 0 : i32
    %c0_i32_1 = arith.constant 0 : i32
    %c0_i32_2 = arith.constant 0 : i32
    return %c0_i32, %c0_i32_0, %c0_i32_1 : i32, i32, i32
  }
  func.func @transform_20(%arg0: i32) -> (i32, i32) {
    %c0_i32 = arith.constant 0 : i32
    %c0_i32_0 = arith.constant 0 : i32
    %c0_i32_1 = arith.constant 0 : i32
    return %c0_i32, %c0_i32_0 : i32, i32
  }
  func.func @transform_21(%arg0: i32) -> (i32, i32, i32) {
    %c0_i32 = arith.constant 0 : i32
    %c0_i32_0 = arith.constant 0 : i32
    %c0_i32_1 = arith.constant 0 : i32
    %c0_i32_2 = arith.constant 0 : i32
    return %c0_i32, %c0_i32_0, %c0_i32_1 : i32, i32, i32
  }
  func.func @transform_22(%arg0: i32) -> (i32, i32) {
    %c0_i32 = arith.constant 0 : i32
    %c0_i32_0 = arith.constant 0 : i32
    %c0_i32_1 = arith.constant 0 : i32
    return %c0_i32, %c0_i32_0 : i32, i32
  }
  func.func @transform_23(%arg0: i32) -> (i32, i32) {
    %c0_i32 = arith.constant 0 : i32
    %c0_i32_0 = arith.constant 0 : i32
    %c0_i32_1 = arith.constant 0 : i32
    return %c0_i32, %c0_i32_0 : i32, i32
  }
  func.func @transform_24(%arg0: i32) -> (i32, i32) {
    %c0_i32 = arith.constant 0 : i32
    %c0_i32_0 = arith.constant 0 : i32
    %c0_i32_1 = arith.constant 0 : i32
    return %c0_i32, %c0_i32_0 : i32, i32
  }
  func.func @transform_25(%arg0: i32) -> (i32, i32) {
    %c0_i32 = arith.constant 0 : i32
    %c0_i32_0 = arith.constant 0 : i32
    return %arg0, %c0_i32 : i32, i32
  }
  func.func @transform_26(%arg0: i32) -> (i32, i32) {
    %c0_i32 = arith.constant 0 : i32
    %c0_i32_0 = arith.constant 0 : i32
    return %arg0, %c0_i32 : i32, i32
  }
}

</mosaic_0001>

<llo_original>
// kernel: tpu_custom_call.1
$region0: #{tpu_custom_call.1}
  #allocation0 [shape = 'u32[]', space=smem, size = 0x4, offset = 0x4, fixed_abs, tag = 'smem constant byte address 0x4 - core index']
  #allocation1 [shape = 'u32[144,128]{1,0:T(1,128)}', space=vmem, size = 0x12000, scoped, tag = 'internal scratch']
  %s0 = inlined_call_operand.hbm [shape: f32[32,32], index: 0, kind: input, shape index: {}]
  %s1 = inlined_call_operand.vmem [shape: f32[32,4], index: 1, kind: input, shape index: {}]
  %s2 = inlined_call_operand.hbm [shape: f32[1,4], index: 2, kind: input, shape index: {}]
  %s3 = inlined_call_operand.hbm [shape: f32[32,32], index: 3, kind: input, shape index: {}]
  %s4 = inlined_call_operand.hbm [shape: f32[1,32], index: 4, kind: input, shape index: {}]
  %s5 = inlined_call_operand.vmem [shape: f32[32,4], index: 5, kind: input, shape index: {}]
  %s6 = inlined_call_operand.hbm [shape: f32[1,4], index: 6, kind: input, shape index: {}]
  %s7 = inlined_call_operand.vmem [shape: f32[4,4], index: 7, kind: input, shape index: {}]
  %s8 = inlined_call_operand.hbm [shape: f32[1,4], index: 8, kind: input, shape index: {}]
  %s9 = inlined_call_operand.vmem [shape: f32[4,4], index: 9, kind: input, shape index: {}]
  %s10 = inlined_call_operand.hbm [shape: f32[1,4], index: 10, kind: input, shape index: {}]
  %s11 = inlined_call_operand.hbm [shape: f32[1,4], index: 11, kind: input, shape index: {}]
  %s12 = inlined_call_operand.hbm [shape: f32[1,4], index: 12, kind: input, shape index: {}]
  %s13 = inlined_call_operand.hbm [shape: f32[4,8,32], index: 13, kind: input, shape index: {}]
  %s14 = inlined_call_operand.hbm [shape: f32[4,32], index: 14, kind: input, shape index: {}]
  %s15 = inlined_call_operand.hbm [shape: f32[4,8,32], index: 15, kind: input, shape index: {}]
  %s16 = inlined_call_operand.hbm [shape: f32[4,32], index: 16, kind: input, shape index: {}]
  %s17 = inlined_call_operand.vmem [shape: f32[4,32,32], index: 17, kind: input, shape index: {}]
  %s18 = inlined_call_operand.vmem [shape: f32[4,32], index: 18, kind: input, shape index: {}]
  %s19 = inlined_call_operand.hbm [shape: f32[4,32,32], index: 19, kind: input, shape index: {}]
  %s20 = inlined_call_operand.vmem [shape: f32[4,32], index: 20, kind: input, shape index: {}]
  %s21 = inlined_call_operand.hbm [shape: f32[4,32,32], index: 21, kind: input, shape index: {}]
  %s22 = inlined_call_operand.vmem [shape: f32[4,32], index: 22, kind: input, shape index: {}]
  %s23 = inlined_call_operand.vmem [shape: f32[4,32], index: 23, kind: input, shape index: {}]
  %s24 = inlined_call_operand.vmem [shape: f32[4,32], index: 24, kind: input, shape index: {}]
  %s25 = inlined_call_operand.hbm [shape: f32[32,32], index: 25, kind: output, shape index: {0}]
  %s26 = inlined_call_operand.vmem [shape: f32[32,4], index: 26, kind: output, shape index: {1}]
  %27 = xla_tuple %s25, %s26
  %s28 = sld [smem:[#allocation0]]
  $region178: #{tpu_custom_call.1} parent=0
    _
  %s30 = ssub.s32 1, %s28
  %s31 = scalar_select 0, %s30, %s28
  $region1: #{tpu_custom_call.1} parent=0
    #allocation2 [shape = 'u8[16384]{0}', space=vmem, size = 0x4000, scoped, tag = 'input window, operand 0, single buffered']
    #allocation3 [shape = 's32[1]{0}', space=sflag, size = 0x4, scoped, tag = 'scoped memory for tpu_custom_call.1']
    #allocation4 [shape = 's32[1]{0}', space=sflag, size = 0x4, scoped, tag = 'scoped memory for tpu_custom_call.1']
    #allocation5 [shape = 'u8[512]{0}', space=vmem, size = 0x400, scoped, tag = 'input window, operand 2, single buffered']
    #allocation6 [shape = 's32[1]{0}', space=sflag, size = 0x4, scoped, tag = 'scoped memory for tpu_custom_call.1']
    #allocation7 [shape = 'u8[16384]{0}', space=vmem, size = 0x4000, scoped, tag = 'input window, operand 3, single buffered']
    #allocation8 [shape = 'u8[512]{0}', space=vmem, size = 0x400, scoped, tag = 'input window, operand 4, single buffered']
    #allocation9 [shape = 's32[1]{0}', space=sflag, size = 0x4, scoped, tag = 'scoped memory for tpu_custom_call.1']
    #allocation10 [shape = 'u8[512]{0}', space=vmem, size = 0x400, scoped, tag = 'input window, operand 6, single buffered']
    #allocation11 [shape = 'u8[512]{0}', space=vmem, size = 0x400, scoped, tag = 'input window, operand 8, single buffered']
    #allocation12 [shape = 's32[1]{0}', space=sflag, size = 0x4, scoped, tag = 'scoped memory for tpu_custom_call.1']
    #allocation13 [shape = 'u8[512]{0}', space=vmem, size = 0x400, scoped, tag = 'input window, operand 10, single buffered']
    #allocation14 [shape = 'u8[512]{0}', space=vmem, size = 0x400, scoped, tag = 'input window, operand 11, single buffered']
    #allocation15 [shape = 's32[1]{0}', space=sflag, size = 0x4, scoped, tag = 'scoped memory for tpu_custom_call.1']
    #allocation16 [shape = 'u8[512]{0}', space=vmem, size = 0x400, scoped, tag = 'input window, operand 12, single buffered']
    #allocation17 [shape = 'u8[16384]{0}', space=vmem, size = 0x4000, scoped, tag = 'input window, operand 13, single buffered']
    #allocation18 [shape = 's32[1]{0}', space=sflag, size = 0x4, scoped, tag = 'scoped memory for tpu_custom_call.1']
    #allocation19 [shape = 'u8[2048]{0}', space=vmem, size = 0x800, scoped, tag = 'input window, operand 14, single buffered']
    #allocation20 [shape = 'u8[16384]{0}', space=vmem, size = 0x4000, scoped, tag = 'input window, operand 15, single buffered']
    #allocation21 [shape = 's32[1]{0}', space=sflag, size = 0x4, scoped, tag = 'scoped memory for tpu_custom_call.1']
    #allocation22 [shape = 'u8[2048]{0}', space=vmem, size = 0x800, scoped, tag = 'input window, operand 16, single buffered']
    #allocation23 [shape = 'u8[65536]{0}', space=vmem, size = 0x10000, scoped, tag = 'input window, operand 19, single buffered']
    #allocation24 [shape = 's32[1]{0}', space=sflag, size = 0x4, scoped, tag = 'scoped memory for tpu_custom_call.1']
    #allocation25 [shape = 'u8[65536]{0}', space=vmem, size = 0x10000, scoped, tag = 'input window, operand 21, single buffered']
    #allocation26 [shape = 'u8[16384]{0}', space=vmem, size = 0x4000, scoped, tag = 'output window, operand 0, single buffered']
    %32 = vsyncpa [#allocation3], 0
    %33 = vsyncpa [#allocation6], 0
    %34 = vsyncpa [#allocation9], 0
    %35 = vsyncpa [#allocation12], 0
    %36 = vsyncpa [#allocation15], 0
    %37 = vsyncpa [#allocation18], 0
    %38 = vsyncpa [#allocation21], 0
    %39 = vsyncpa [#allocation24], 0
    %40 = vsyncpa [#allocation4], 0
    // Predicated region
    $region2: #{tpu_custom_call.1} parent=1 // pred_check
      _
    $region3: #{tpu_custom_call.1} parent=1 // pred_check_branch
      %42 = sbr.rel (0) target = $region5
    $region4: #{tpu_custom_call.1} parent=1 // pred_region
      %s44 = ssub.s32 512, 512
      %45 = vsyncadd [#allocation3], %s44
      %s46 = sshll.u32 [#allocation2], 4
      %s47 = int_to_ptr.vmem [resolvable:$true] %s46
      %52 = dma.hbm_to_vmem [thread:$0]  %s0, 512, %s47, [#allocation3], 128, 128, 8
    $region5: #{tpu_custom_call.1} parent=1 // pred_fallthru
      _
    // Predicated region
    $region6: #{tpu_custom_call.1} parent=1 // pred_check
      _
    $region7: #{tpu_custom_call.1} parent=1 // pred_check_branch
      %54 = sbr.rel (0) target = $region9
    $region8: #{tpu_custom_call.1} parent=1 // pred_region
      _
    $region9: #{tpu_custom_call.1} parent=1 // pred_fallthru
      _
    // Predicated region
    $region10: #{tpu_custom_call.1} parent=1 // pred_check
      _
    $region11: #{tpu_custom_call.1} parent=1 // pred_check_branch
      %56 = sbr.rel (0) target = $region13
    $region12: #{tpu_custom_call.1} parent=1 // pred_region
      %s58 = ssub.s32 16, 16
      %59 = vsyncadd [#allocation6], %s58
      %s61 = sshll.u32 [#allocation5], 4
      %s62 = int_to_ptr.vmem [resolvable:$true] %s61
      %64 = dma.hbm_to_vmem [thread:$0]  %s2, 16, %s62, [#allocation6]
    $region13: #{tpu_custom_call.1} parent=1 // pred_fallthru
      _
    // Predicated region
    $region14: #{tpu_custom_call.1} parent=1 // pred_check
      _
    $region15: #{tpu_custom_call.1} parent=1 // pred_check_branch
      %66 = sbr.rel (0) target = $region17
    $region16: #{tpu_custom_call.1} parent=1 // pred_region
      %s68 = ssub.s32 512, 512
      %69 = vsyncadd [#allocation6], %s68
      %s70 = sshll.u32 [#allocation7], 4
      %s71 = int_to_ptr.vmem [resolvable:$true] %s70
      %76 = dma.hbm_to_vmem [thread:$0]  %s3, 512, %s71, [#allocation6], 128, 128, 8
    $region17: #{tpu_custom_call.1} parent=1 // pred_fallthru
      _
    // Predicated region
    $region18: #{tpu_custom_call.1} parent=1 // pred_check
      _
    $region19: #{tpu_custom_call.1} parent=1 // pred_check_branch
      %78 = sbr.rel (0) target = $region21
    $region20: #{tpu_custom_call.1} parent=1 // pred_region
      %s80 = ssub.s32 16, 16
      %81 = vsyncadd [#allocation9], %s80
      %s83 = sshll.u32 [#allocation8], 4
      %s84 = int_to_ptr.vmem [resolvable:$true] %s83
      %86 = dma.hbm_to_vmem [thread:$0]  %s4, 16, %s84, [#allocation9]
    $region21: #{tpu_custom_call.1} parent=1 // pred_fallthru
      _
    // Predicated region
    $region22: #{tpu_custom_call.1} parent=1 // pred_check
      _
    $region23: #{tpu_custom_call.1} parent=1 // pred_check_branch
      %88 = sbr.rel (0) target = $region25
    $region24: #{tpu_custom_call.1} parent=1 // pred_region
      _
    $region25: #{tpu_custom_call.1} parent=1 // pred_fallthru
      _
    // Predicated region
    $region26: #{tpu_custom_call.1} parent=1 // pred_check
      _
    $region27: #{tpu_custom_call.1} parent=1 // pred_check_branch
      %90 = sbr.rel (0) target = $region29
    $region28: #{tpu_custom_call.1} parent=1 // pred_region
      %s92 = ssub.s32 16, 16
      %93 = vsyncadd [#allocation9], %s92
      %s95 = sshll.u32 [#allocation10], 4
      %s96 = int_to_ptr.vmem [resolvable:$true] %s95
      %98 = dma.hbm_to_vmem [thread:$0]  %s6, 16, %s96, [#allocation9]
    $region29: #{tpu_custom_call.1} parent=1 // pred_fallthru
      _
    // Predicated region
    $region30: #{tpu_custom_call.1} parent=1 // pred_check
      _
    $region31: #{tpu_custom_call.1} parent=1 // pred_check_branch
      %100 = sbr.rel (0) target = $region33
    $region32: #{tpu_custom_call.1} parent=1 // pred_region
      _
    $region33: #{tpu_custom_call.1} parent=1 // pred_fallthru
      _
    // Predicated region
    $region34: #{tpu_custom_call.1} parent=1 // pred_check
      _
    $region35: #{tpu_custom_call.1} parent=1 // pred_check_branch
      %102 = sbr.rel (0) target = $region37
    $region36: #{tpu_custom_call.1} parent=1 // pred_region
      %s104 = ssub.s32 16, 16
      %105 = vsyncadd [#allocation12], %s104
      %s107 = sshll.u32 [#allocation11], 4
      %s108 = int_to_ptr.vmem [resolvable:$true] %s107
      %110 = dma.hbm_to_vmem [thread:$0]  %s8, 16, %s108, [#allocation12]
    $region37: #{tpu_custom_call.1} parent=1 // pred_fallthru
      _
    // Predicated region
    $region38: #{tpu_custom_call.1} parent=1 // pred_check
      _
    $region39: #{tpu_custom_call.1} parent=1 // pred_check_branch
      %112 = sbr.rel (0) target = $region41
    $region40: #{tpu_custom_call.1} parent=1 // pred_region
      _
    $region41: #{tpu_custom_call.1} parent=1 // pred_fallthru
      _
    // Predicated region
    $region42: #{tpu_custom_call.1} parent=1 // pred_check
      _
    $region43: #{tpu_custom_call.1} parent=1 // pred_check_branch
      %114 = sbr.rel (0) target = $region45
    $region44: #{tpu_custom_call.1} parent=1 // pred_region
      %s116 = ssub.s32 16, 16
      %117 = vsyncadd [#allocation12], %s116
      %s119 = sshll.u32 [#allocation13], 4
      %s120 = int_to_ptr.vmem [resolvable:$true] %s119
      %122 = dma.hbm_to_vmem [thread:$0]  %s10, 16, %s120, [#allocation12]
    $region45: #{tpu_custom_call.1} parent=1 // pred_fallthru
      _
    // Predicated region
    $region46: #{tpu_custom_call.1} parent=1 // pred_check
      _
    $region47: #{tpu_custom_call.1} parent=1 // pred_check_branch
      %124 = sbr.rel (0) target = $region49
    $region48: #{tpu_custom_call.1} parent=1 // pred_region
      %s126 = ssub.s32 16, 16
      %127 = vsyncadd [#allocation15], %s126
      %s129 = sshll.u32 [#allocation14], 4
      %s130 = int_to_ptr.vmem [resolvable:$true] %s129
      %132 = dma.hbm_to_vmem [thread:$0]  %s11, 16, %s130, [#allocation15]
    $region49: #{tpu_custom_call.1} parent=1 // pred_fallthru
      _
    // Predicated region
    $region50: #{tpu_custom_call.1} parent=1 // pred_check
      _
    $region51: #{tpu_custom_call.1} parent=1 // pred_check_branch
      %134 = sbr.rel (0) target = $region53
    $region52: #{tpu_custom_call.1} parent=1 // pred_region
      %s136 = ssub.s32 16, 16
      %137 = vsyncadd [#allocation15], %s136
      %s139 = sshll.u32 [#allocation16], 4
      %s140 = int_to_ptr.vmem [resolvable:$true] %s139
      %142 = dma.hbm_to_vmem [thread:$0]  %s12, 16, %s140, [#allocation15]
    $region53: #{tpu_custom_call.1} parent=1 // pred_fallthru
      _
    // Predicated region
    $region54: #{tpu_custom_call.1} parent=1 // pred_check
      _
    $region55: #{tpu_custom_call.1} parent=1 // pred_check_branch
      %144 = sbr.rel (0) target = $region57
    $region56: #{tpu_custom_call.1} parent=1 // pred_region
      %s146 = ssub.s32 512, 512
      %147 = vsyncadd [#allocation18], %s146
      %s148 = sshll.u32 [#allocation17], 4
      %s149 = int_to_ptr.vmem [resolvable:$true] %s148
      %154 = dma.hbm_to_vmem [thread:$0]  %s13, 512, %s149, [#allocation18], 128, 128, 8
    $region57: #{tpu_custom_call.1} parent=1 // pred_fallthru
      _
    // Predicated region
    $region58: #{tpu_custom_call.1} parent=1 // pred_check
      _
    $region59: #{tpu_custom_call.1} parent=1 // pred_check_branch
      %156 = sbr.rel (0) target = $region61
    $region60: #{tpu_custom_call.1} parent=1 // pred_region
      %s158 = ssub.s32 64, 64
      %159 = vsyncadd [#allocation18], %s158
      %s161 = sshll.u32 [#allocation19], 4
      %s162 = int_to_ptr.vmem [resolvable:$true] %s161
      %164 = dma.hbm_to_vmem [thread:$0]  %s14, 64, %s162, [#allocation18]
    $region61: #{tpu_custom_call.1} parent=1 // pred_fallthru
      _
    // Predicated region
    $region62: #{tpu_custom_call.1} parent=1 // pred_check
      _
    $region63: #{tpu_custom_call.1} parent=1 // pred_check_branch
      %166 = sbr.rel (0) target = $region65
    $region64: #{tpu_custom_call.1} parent=1 // pred_region
      %s168 = ssub.s32 512, 512
      %169 = vsyncadd [#allocation21], %s168
      %s170 = sshll.u32 [#allocation20], 4
      %s171 = int_to_ptr.vmem [resolvable:$true] %s170
      %176 = dma.hbm_to_vmem [thread:$0]  %s15, 512, %s171, [#allocation21], 128, 128, 8
    $region65: #{tpu_custom_call.1} parent=1 // pred_fallthru
      _
    // Predicated region
    $region66: #{tpu_custom_call.1} parent=1 // pred_check
      _
    $region67: #{tpu_custom_call.1} parent=1 // pred_check_branch
      %178 = sbr.rel (0) target = $region69
    $region68: #{tpu_custom_call.1} parent=1 // pred_region
      %s180 = ssub.s32 64, 64
      %181 = vsyncadd [#allocation21], %s180
      %s183 = sshll.u32 [#allocation22], 4
      %s184 = int_to_ptr.vmem [resolvable:$true] %s183
      %186 = dma.hbm_to_vmem [thread:$0]  %s16, 64, %s184, [#allocation21]
    $region69: #{tpu_custom_call.1} parent=1 // pred_fallthru
      _
    // Predicated region
    $region70: #{tpu_custom_call.1} parent=1 // pred_check
      _
    $region71: #{tpu_custom_call.1} parent=1 // pred_check_branch
      %188 = sbr.rel (0) target = $region73
    $region72: #{tpu_custom_call.1} parent=1 // pred_region
      _
    $region73: #{tpu_custom_call.1} parent=1 // pred_fallthru
      _
    // Predicated region
    $region74: #{tpu_custom_call.1} parent=1 // pred_check
      _
    $region75: #{tpu_custom_call.1} parent=1 // pred_check_branch
      %190 = sbr.rel (0) target = $region77
    $region76: #{tpu_custom_call.1} parent=1 // pred_region
      _
    $region77: #{tpu_custom_call.1} parent=1 // pred_fallthru
      _
    // Predicated region
    $region78: #{tpu_custom_call.1} parent=1 // pred_check
      _
    $region79: #{tpu_custom_call.1} parent=1 // pred_check_branch
      %192 = sbr.rel (0) target = $region81
    $region80: #{tpu_custom_call.1} parent=1 // pred_region
      %s194 = ssub.s32 2048, 2048
      %195 = vsyncadd [#allocation24], %s194
      %s196 = sshll.u32 [#allocation23], 4
      %s197 = int_to_ptr.vmem [resolvable:$true] %s196
      %202 = dma.hbm_to_vmem [thread:$0]  %s19, 2048, %s197, [#allocation24], 128, 128, 8
    $region81: #{tpu_custom_call.1} parent=1 // pred_fallthru
      _
    // Predicated region
    $region82: #{tpu_custom_call.1} parent=1 // pred_check
      _
    $region83: #{tpu_custom_call.1} parent=1 // pred_check_branch
      %204 = sbr.rel (0) target = $region85
    $region84: #{tpu_custom_call.1} parent=1 // pred_region
      _
    $region85: #{tpu_custom_call.1} parent=1 // pred_fallthru
      _
    // Predicated region
    $region86: #{tpu_custom_call.1} parent=1 // pred_check
      _
    $region87: #{tpu_custom_call.1} parent=1 // pred_check_branch
      %206 = sbr.rel (0) target = $region89
    $region88: #{tpu_custom_call.1} parent=1 // pred_region
      %s208 = ssub.s32 2048, 2048
      %209 = vsyncadd [#allocation24], %s208
      %s210 = sshll.u32 [#allocation25], 4
      %s211 = int_to_ptr.vmem [resolvable:$true] %s210
      %216 = dma.hbm_to_vmem [thread:$0]  %s21, 2048, %s211, [#allocation24], 128, 128, 8
    $region89: #{tpu_custom_call.1} parent=1 // pred_fallthru
      _
    // Predicated region
    $region90: #{tpu_custom_call.1} parent=1 // pred_check
      _
    $region91: #{tpu_custom_call.1} parent=1 // pred_check_branch
      %218 = sbr.rel (0) target = $region93
    $region92: #{tpu_custom_call.1} parent=1 // pred_region
      _
    $region93: #{tpu_custom_call.1} parent=1 // pred_fallthru
      _
    // Predicated region
    $region94: #{tpu_custom_call.1} parent=1 // pred_check
      _
    $region95: #{tpu_custom_call.1} parent=1 // pred_check_branch
      %220 = sbr.rel (0) target = $region97
    $region96: #{tpu_custom_call.1} parent=1 // pred_region
      _
    $region97: #{tpu_custom_call.1} parent=1 // pred_fallthru
      _
    // Predicated region
    $region98: #{tpu_custom_call.1} parent=1 // pred_check
      _
    $region99: #{tpu_custom_call.1} parent=1 // pred_check_branch
      %222 = sbr.rel (0) target = $region101
    $region100: #{tpu_custom_call.1} parent=1 // pred_region
      _
    $region101: #{tpu_custom_call.1} parent=1 // pred_fallthru
      _
    // Predicated region
    $region102: #{tpu_custom_call.1} parent=1 // pred_check
      _
    $region103: #{tpu_custom_call.1} parent=1 // pred_check_branch
      %224 = sbr.rel (0) target = $region105
    $region104: #{tpu_custom_call.1} parent=1 // pred_region
      %225 = dma.done [#allocation3], 512
    $region105: #{tpu_custom_call.1} parent=1 // pred_fallthru
      _
    // Predicated region
    $region106: #{tpu_custom_call.1} parent=1 // pred_check
      _
    $region107: #{tpu_custom_call.1} parent=1 // pred_check_branch
      %227 = sbr.rel (0) target = $region109
    $region108: #{tpu_custom_call.1} parent=1 // pred_region
      %228 = dma.done [#allocation6], 16
    $region109: #{tpu_custom_call.1} parent=1 // pred_fallthru
      _
    // Predicated region
    $region110: #{tpu_custom_call.1} parent=1 // pred_check
      _
    $region111: #{tpu_custom_call.1} parent=1 // pred_check_branch
      %230 = sbr.rel (0) target = $region113
    $region112: #{tpu_custom_call.1} parent=1 // pred_region
      %231 = dma.done [#allocation6], 512
    $region113: #{tpu_custom_call.1} parent=1 // pred_fallthru
      _
    // Predicated region
    $region114: #{tpu_custom_call.1} parent=1 // pred_check
      _
    $region115: #{tpu_custom_call.1} parent=1 // pred_check_branch
      %233 = sbr.rel (0) target = $region117
    $region116: #{tpu_custom_call.1} parent=1 // pred_region
      %234 = dma.done [#allocation9], 16
    $region117: #{tpu_custom_call.1} parent=1 // pred_fallthru
      _
    // Predicated region
    $region118: #{tpu_custom_call.1} parent=1 // pred_check
      _
    $region119: #{tpu_custom_call.1} parent=1 // pred_check_branch
      %236 = sbr.rel (0) target = $region121
    $region120: #{tpu_custom_call.1} parent=1 // pred_region
      %237 = dma.done [#allocation9], 16
    $region121: #{tpu_custom_call.1} parent=1 // pred_fallthru
      _
    // Predicated region
    $region122: #{tpu_custom_call.1} parent=1 // pred_check
      _
    $region123: #{tpu_custom_call.1} parent=1 // pred_check_branch
      %239 = sbr.rel (0) target = $region125
    $region124: #{tpu_custom_call.1} parent=1 // pred_region
      %240 = dma.done [#allocation12], 16
    $region125: #{tpu_custom_call.1} parent=1 // pred_fallthru
      _
    // Predicated region
    $region126: #{tpu_custom_call.1} parent=1 // pred_check
      _
    $region127: #{tpu_custom_call.1} parent=1 // pred_check_branch
      %242 = sbr.rel (0) target = $region129
    $region128: #{tpu_custom_call.1} parent=1 // pred_region
      %243 = dma.done [#allocation12], 16
    $region129: #{tpu_custom_call.1} parent=1 // pred_fallthru
      _
    // Predicated region
    $region130: #{tpu_custom_call.1} parent=1 // pred_check
      _
    $region131: #{tpu_custom_call.1} parent=1 // pred_check_branch
      %245 = sbr.rel (0) target = $region133
    $region132: #{tpu_custom_call.1} parent=1 // pred_region
      %246 = dma.done [#allocation15], 16
    $region133: #{tpu_custom_call.1} parent=1 // pred_fallthru
      _
    // Predicated region
    $region134: #{tpu_custom_call.1} parent=1 // pred_check
      _
    $region135: #{tpu_custom_call.1} parent=1 // pred_check_branch
      %248 = sbr.rel (0) target = $region137
    $region136: #{tpu_custom_call.1} parent=1 // pred_region
      %249 = dma.done [#allocation15], 16
    $region137: #{tpu_custom_call.1} parent=1 // pred_fallthru
      _
    // Predicated region
    $region138: #{tpu_custom_call.1} parent=1 // pred_check
      _
    $region139: #{tpu_custom_call.1} parent=1 // pred_check_branch
      %251 = sbr.rel (0) target = $region141
    $region140: #{tpu_custom_call.1} parent=1 // pred_region
      %252 = dma.done [#allocation18], 512
    $region141: #{tpu_custom_call.1} parent=1 // pred_fallthru
      _
    // Predicated region
    $region142: #{tpu_custom_call.1} parent=1 // pred_check
      _
    $region143: #{tpu_custom_call.1} parent=1 // pred_check_branch
      %254 = sbr.rel (0) target = $region145
    $region144: #{tpu_custom_call.1} parent=1 // pred_region
      %255 = dma.done [#allocation18], 64
    $region145: #{tpu_custom_call.1} parent=1 // pred_fallthru
      _
    // Predicated region
    $region146: #{tpu_custom_call.1} parent=1 // pred_check
      _
    $region147: #{tpu_custom_call.1} parent=1 // pred_check_branch
      %257 = sbr.rel (0) target = $region149
    $region148: #{tpu_custom_call.1} parent=1 // pred_region
      %258 = dma.done [#allocation21], 512
    $region149: #{tpu_custom_call.1} parent=1 // pred_fallthru
      _
    // Predicated region
    $region150: #{tpu_custom_call.1} parent=1 // pred_check
      _
    $region151: #{tpu_custom_call.1} parent=1 // pred_check_branch
      %260 = sbr.rel (0) target = $region153
    $region152: #{tpu_custom_call.1} parent=1 // pred_region
      %261 = dma.done [#allocation21], 64
    $region153: #{tpu_custom_call.1} parent=1 // pred_fallthru
      _
    // Predicated region
    $region154: #{tpu_custom_call.1} parent=1 // pred_check
      _
    $region155: #{tpu_custom_call.1} parent=1 // pred_check_branch
      %263 = sbr.rel (0) target = $region157
    $region156: #{tpu_custom_call.1} parent=1 // pred_region
      %264 = dma.done [#allocation24], 2048
    $region157: #{tpu_custom_call.1} parent=1 // pred_fallthru
      _
    // Predicated region
    $region158: #{tpu_custom_call.1} parent=1 // pred_check
      _
    $region159: #{tpu_custom_call.1} parent=1 // pred_check_branch
      %266 = sbr.rel (0) target = $region161
    $region160: #{tpu_custom_call.1} parent=1 // pred_region
      %267 = dma.done [#allocation24], 2048
    $region161: #{tpu_custom_call.1} parent=1 // pred_fallthru
      _
    %v268 = vld [vmem:[#allocation2] sm:$0xff]
    %v269 = vld [vmem:[#allocation2 + $0x8] sm:$0xff]
    %v270 = vld [vmem:[#allocation2 + $0x10] sm:$0xff]
    %v271 = vld [vmem:[#allocation2 + $0x18] sm:$0xff]
    %v272 = vld [vmem:[%s1] sm:$0xff]
    %v273 = vld [vmem:[%s1 + $0x8] sm:$0xff]
    %v274 = vld [vmem:[%s1 + $0x10] sm:$0xff]
    %v275 = vld [vmem:[%s1 + $0x18] sm:$0xff]
    %v276 = vld [vmem:[#allocation5] sm:$0x1]
    %v278 = vlaneseq
    %v279 = vshrl.u32 %v278, 7
    %v280 = vsub.s32 0, %v279
    %v281 = vrot.slane %v276, %v280
    %vm283 = vcmask 261120
    %v285 = vsel %vm283, %v268, 0
    %v288 = vsel %vm283, %v269, 0
    %v291 = vsel %vm283, %v270, 0
    %v294 = vsel %vm283, %v271, 0
    %296 = vmatprep.subr.mxu0 0.0
    %297 = vmatpush1.msra.mxu0 %v272
    %298 = vmatprep.subr.mxu0 0.0
    %299 = vmatpush1.msra.mxu0 %v273
    %300 = vmatprep.subr.mxu0 0.0
    %301 = vmatpush1.msra.mxu0 %v274
    %302 = vmatprep.subr.mxu0 0.0
    %303 = vmatpush1.msra.mxu0 %v275
    %304 = vmatprep.subr.mxu0 0.0
    %305 = vmatpush1.msra.mxu0 0.0
    %306 = vmatprep.subr.mxu0 0.0
    %307 = vmatpush1.msra.mxu0 0.0
    %308 = vmatprep.subr.mxu0 0.0
    %309 = vmatpush1.msra.mxu0 0.0
    %310 = vmatprep.subr.mxu0 0.0
    %311 = vmatpush1.msra.mxu0 0.0
    %312 = vmatprep.subr.mxu0 0.0
    %313 = vmatpush1.msra.mxu0 0.0
    %314 = vmatprep.subr.mxu0 0.0
    %315 = vmatpush1.msra.mxu0 0.0
    %316 = vmatprep.subr.mxu0 0.0
    %317 = vmatpush1.msra.mxu0 0.0
    %318 = vmatprep.subr.mxu0 0.0
    %319 = vmatpush1.msra.mxu0 0.0
    %320 = vmatprep.subr.mxu0 0.0
    %321 = vmatpush1.msra.mxu0 0.0
    %322 = vmatprep.subr.mxu0 0.0
    %323 = vmatpush1.msra.mxu0 0.0
    %324 = vmatprep.subr.mxu0 0.0
    %325 = vmatpush1.msra.mxu0 0.0
    %326 = vmatprep.subr.mxu0 0.0
    %327 = vmatpush1.msra.mxu0 0.0
    %328 = vmatprep.subr.mxu0 0.0
    %329 = vmatpush1.msra.mxu0 0.0
    %330 = vmatprep.subr.mxu0 0.0
    %331 = vmatpush1.msra.mxu0 0.0
    %332 = vmatprep.subr.mxu0 0.0
    %333 = vmatpush1.msra.mxu0 0.0
    %334 = vmatprep.subr.mxu0 0.0
    %335 = vmatpush1.msra.mxu0 0.0
    %336 = vmatprep.subr.mxu0 0.0
    %337 = vmatpush1.msra.mxu0 0.0
    %338 = vmatprep.subr.mxu0 0.0
    %339 = vmatpush1.msra.mxu0 0.0
    %340 = vmatprep.subr.mxu0 0.0
    %341 = vmatpush1.msra.mxu0 0.0
    %342 = vmatprep.subr.mxu0 0.0
    %343 = vmatpush1.msra.mxu0 0.0
    %344 = vmatprep.subr.mxu0 0.0
    %345 = vmatpush1.msra.mxu0 0.0
    %346 = vmatprep.subr.mxu0 0.0
    %347 = vmatpush1.msra.mxu0 0.0
    %348 = vmatprep.subr.mxu0 0.0
    %349 = vmatpush1.msra.mxu0 0.0
    %350 = vmatprep.subr.mxu0 0.0
    %351 = vmatpush1.msra.mxu0 0.0
    %352 = vmatprep.subr.mxu0 0.0
    %353 = vmatpush1.msra.mxu0 0.0
    %354 = vmatprep.subr.mxu0 0.0
    %355 = vmatpush1.msra.mxu0 0.0
    %356 = vmatprep.subr.mxu0 0.0
    %357 = vmatpush1.msra.mxu0 0.0
    %358 = vmatprep.subr.mxu0 0.0
    %359 = vmatpush1.msra.mxu0 0.0
    %360 = vmatprep.mubr.f32.mxu0 0.0
    %361 = vmatmul.mubr.f32.gmra.mrb[0].mxu0 %v285
    %v362 = vpop.f32.mrb[0].mxu0
    %v363 = vadd.f32 %v281, %v362
    %v364 = vpop.f32.mrb[0].mxu0
    %365 = vmatprep.mubr.f32.mxu0 0.0
    %366 = vmatmul.mubr.f32.gmra.mrb[0].mxu0 %v288
    %v367 = vpop.f32.mrb[0].mxu0
    %v368 = vadd.f32 %v281, %v367
    %v369 = vpop.f32.mrb[0].mxu0
    %370 = vmatprep.mubr.f32.mxu0 0.0
    %371 = vmatmul.mubr.f32.gmra.mrb[0].mxu0 %v291
    %v372 = vpop.f32.mrb[0].mxu0
    %v373 = vadd.f32 %v281, %v372
    %v374 = vpop.f32.mrb[0].mxu0
    %375 = vmatprep.mubr.f32.mxu0 0.0
    %376 = vmatmul.mubr.f32.gmra.mrb[0].mxu0 %v294
    %v377 = vpop.f32.mrb[0].mxu0
    %v378 = vadd.f32 %v281, %v377
    %v379 = vpop.f32.mrb[0].mxu0
    %380 = vdwg.mxu0
    %v381 = vld [vmem:[#allocation7] sm:$0xff]
    %v382 = vld [vmem:[#allocation7 + $0x8] sm:$0xff]
    %v383 = vld [vmem:[#allocation7 + $0x10] sm:$0xff]
    %v384 = vld [vmem:[#allocation7 + $0x18] sm:$0xff]
    %v385 = vld [vmem:[#allocation8] sm:$0x1]
    %v387 = vlaneseq
    %v388 = vshrl.u32 %v387, 7
    %v389 = vsub.s32 0, %v388
    %v390 = vrot.slane %v385, %v389
    %392 = vmatprep.subr.mxu0 0.0
    %393 = vmatpush1.msra.mxu0 %v381
    %394 = vmatprep.subr.mxu0 0.0
    %395 = vmatpush1.msra.mxu0 %v382
    %396 = vmatprep.subr.mxu0 0.0
    %397 = vmatpush1.msra.mxu0 %v383
    %398 = vmatprep.subr.mxu0 0.0
    %399 = vmatpush1.msra.mxu0 %v384
    %400 = vmatprep.subr.mxu0 0.0
    %401 = vmatpush1.msra.mxu0 0.0
    %402 = vmatprep.subr.mxu0 0.0
    %403 = vmatpush1.msra.mxu0 0.0
    %404 = vmatprep.subr.mxu0 0.0
    %405 = vmatpush1.msra.mxu0 0.0
    %406 = vmatprep.subr.mxu0 0.0
    %407 = vmatpush1.msra.mxu0 0.0
    %408 = vmatprep.subr.mxu0 0.0
    %409 = vmatpush1.msra.mxu0 0.0
    %410 = vmatprep.subr.mxu0 0.0
    %411 = vmatpush1.msra.mxu0 0.0
    %412 = vmatprep.subr.mxu0 0.0
    %413 = vmatpush1.msra.mxu0 0.0
    %414 = vmatprep.subr.mxu0 0.0
    %415 = vmatpush1.msra.mxu0 0.0
    %416 = vmatprep.subr.mxu0 0.0
    %417 = vmatpush1.msra.mxu0 0.0
    %418 = vmatprep.subr.mxu0 0.0
    %419 = vmatpush1.msra.mxu0 0.0
    %420 = vmatprep.subr.mxu0 0.0
    %421 = vmatpush1.msra.mxu0 0.0
    %422 = vmatprep.subr.mxu0 0.0
    %423 = vmatpush1.msra.mxu0 0.0
    %424 = vmatprep.subr.mxu0 0.0
    %425 = vmatpush1.msra.mxu0 0.0
    %426 = vmatprep.subr.mxu0 0.0
    %427 = vmatpush1.msra.mxu0 0.0
    %428 = vmatprep.subr.mxu0 0.0
    %429 = vmatpush1.msra.mxu0 0.0
    %430 = vmatprep.subr.mxu0 0.0
    %431 = vmatpush1.msra.mxu0 0.0
    %432 = vmatprep.subr.mxu0 0.0
    %433 = vmatpush1.msra.mxu0 0.0
    %434 = vmatprep.subr.mxu0 0.0
    %435 = vmatpush1.msra.mxu0 0.0
    %436 = vmatprep.subr.mxu0 0.0
    %437 = vmatpush1.msra.mxu0 0.0
    %438 = vmatprep.subr.mxu0 0.0
    %439 = vmatpush1.msra.mxu0 0.0
    %440 = vmatprep.subr.mxu0 0.0
    %441 = vmatpush1.msra.mxu0 0.0
    %442 = vmatprep.subr.mxu0 0.0
    %443 = vmatpush1.msra.mxu0 0.0
    %444 = vmatprep.subr.mxu0 0.0
    %445 = vmatpush1.msra.mxu0 0.0
    %446 = vmatprep.subr.mxu0 0.0
    %447 = vmatpush1.msra.mxu0 0.0
    %448 = vmatprep.subr.mxu0 0.0
    %449 = vmatpush1.msra.mxu0 0.0
    %450 = vmatprep.subr.mxu0 0.0
    %451 = vmatpush1.msra.mxu0 0.0
    %452 = vmatprep.subr.mxu0 0.0
    %453 = vmatpush1.msra.mxu0 0.0
    %454 = vmatprep.subr.mxu0 0.0
    %455 = vmatpush1.msra.mxu0 0.0
    %456 = vmatprep.mubr.f32.mxu0 0.0
    %457 = vmatmul.mubr.f32.gmra.mrb[0].mxu0 %v285
    %v458 = vpop.f32.mrb[0].mxu0
    %v459 = vadd.f32 %v390, %v458
    %v460 = vpop.f32.mrb[0].mxu0
    %461 = vmatprep.mubr.f32.mxu0 0.0
    %462 = vmatmul.mubr.f32.gmra.mrb[0].mxu0 %v288
    %v463 = vpop.f32.mrb[0].mxu0
    %v464 = vadd.f32 %v390, %v463
    %v465 = vpop.f32.mrb[0].mxu0
    %466 = vmatprep.mubr.f32.mxu0 0.0
    %467 = vmatmul.mubr.f32.gmra.mrb[0].mxu0 %v291
    %v468 = vpop.f32.mrb[0].mxu0
    %v469 = vadd.f32 %v390, %v468
    %v470 = vpop.f32.mrb[0].mxu0
    %471 = vmatprep.mubr.f32.mxu0 0.0
    %472 = vmatmul.mubr.f32.gmra.mrb[0].mxu0 %v294
    %v473 = vpop.f32.mrb[0].mxu0
    %v474 = vadd.f32 %v390, %v473
    %v475 = vpop.f32.mrb[0].mxu0
    %476 = vdwg.mxu0
    %vm477 = vcmp.gt.f32.partialorder %v459, 0.0
    %vm478 = vcmp.gt.f32.partialorder %v464, 0.0
    %vm479 = vcmp.gt.f32.partialorder %v469, 0.0
    %vm480 = vcmp.gt.f32.partialorder %v474, 0.0
    %v481 = vmul.f32 %v459, 1.442695
    %v482 = vpow.pop %v481
    %v483 = vmul.f32 %v464, 1.442695
    %v484 = vpow.pop %v483
    %v485 = vmul.f32 %v469, 1.442695
    %v486 = vpow.pop %v485
    %v487 = vmul.f32 %v474, 1.442695
    %v488 = vpow.pop %v487
    %v489 = vsub.f32 %v482, 1.0
    %v490 = vsub.f32 %v484, 1.0
    %v491 = vsub.f32 %v486, 1.0
    %v492 = vsub.f32 %v488, 1.0
    %v493 = vsel %vm477, %v459, %v489
    %v494 = vsel %vm478, %v464, %v490
    %v495 = vsel %vm479, %v469, %v491
    %v496 = vsel %vm480, %v474, %v492
    %v497 = vld [vmem:[%s5] sm:$0xff]
    %v498 = vld [vmem:[%s5 + $0x8] sm:$0xff]
    %v499 = vld [vmem:[%s5 + $0x10] sm:$0xff]
    %v500 = vld [vmem:[%s5 + $0x18] sm:$0xff]
    %v501 = vld [vmem:[#allocation10] sm:$0x1]
    %v503 = vlaneseq
    %v504 = vshrl.u32 %v503, 7
    %v505 = vsub.s32 0, %v504
    %v506 = vrot.slane %v501, %v505
    %v509 = vsel %vm283, %v493, 0
    %v512 = vsel %vm283, %v494, 0
    %v515 = vsel %vm283, %v495, 0
    %v518 = vsel %vm283, %v496, 0
    %520 = vmatprep.subr.mxu0 0.0
    %521 = vmatpush1.msra.mxu0 %v497
    %522 = vmatprep.subr.mxu0 0.0
    %523 = vmatpush1.msra.mxu0 %v498
    %524 = vmatprep.subr.mxu0 0.0
    %525 = vmatpush1.msra.mxu0 %v499
    %526 = vmatprep.subr.mxu0 0.0
    %527 = vmatpush1.msra.mxu0 %v500
    %528 = vmatprep.subr.mxu0 0.0
    %529 = vmatpush1.msra.mxu0 0.0
    %530 = vmatprep.subr.mxu0 0.0
    %531 = vmatpush1.msra.mxu0 0.0
    %532 = vmatprep.subr.mxu0 0.0
    %533 = vmatpush1.msra.mxu0 0.0
    %534 = vmatprep.subr.mxu0 0.0
    %535 = vmatpush1.msra.mxu0 0.0
    %536 = vmatprep.subr.mxu0 0.0
    %537 = vmatpush1.msra.mxu0 0.0
    %538 = vmatprep.subr.mxu0 0.0
    %539 = vmatpush1.msra.mxu0 0.0
    %540 = vmatprep.subr.mxu0 0.0
    %541 = vmatpush1.msra.mxu0 0.0
    %542 = vmatprep.subr.mxu0 0.0
    %543 = vmatpush1.msra.mxu0 0.0
    %544 = vmatprep.subr.mxu0 0.0
    %545 = vmatpush1.msra.mxu0 0.0
    %546 = vmatprep.subr.mxu0 0.0
    %547 = vmatpush1.msra.mxu0 0.0
    %548 = vmatprep.subr.mxu0 0.0
    %549 = vmatpush1.msra.mxu0 0.0
    %550 = vmatprep.subr.mxu0 0.0
    %551 = vmatpush1.msra.mxu0 0.0
    %552 = vmatprep.subr.mxu0 0.0
    %553 = vmatpush1.msra.mxu0 0.0
    %554 = vmatprep.subr.mxu0 0.0
    %555 = vmatpush1.msra.mxu0 0.0
    %556 = vmatprep.subr.mxu0 0.0
    %557 = vmatpush1.msra.mxu0 0.0
    %558 = vmatprep.subr.mxu0 0.0
    %559 = vmatpush1.msra.mxu0 0.0
    %560 = vmatprep.subr.mxu0 0.0
    %561 = vmatpush1.msra.mxu0 0.0
    %562 = vmatprep.subr.mxu0 0.0
    %563 = vmatpush1.msra.mxu0 0.0
    %564 = vmatprep.subr.mxu0 0.0
    %565 = vmatpush1.msra.mxu0 0.0
    %566 = vmatprep.subr.mxu0 0.0
    %567 = vmatpush1.msra.mxu0 0.0
    %568 = vmatprep.subr.mxu0 0.0
    %569 = vmatpush1.msra.mxu0 0.0
    %570 = vmatprep.subr.mxu0 0.0
    %571 = vmatpush1.msra.mxu0 0.0
    %572 = vmatprep.subr.mxu0 0.0
    %573 = vmatpush1.msra.mxu0 0.0
    %574 = vmatprep.subr.mxu0 0.0
    %575 = vmatpush1.msra.mxu0 0.0
    %576 = vmatprep.subr.mxu0 0.0
    %577 = vmatpush1.msra.mxu0 0.0
    %578 = vmatprep.subr.mxu0 0.0
    %579 = vmatpush1.msra.mxu0 0.0
    %580 = vmatprep.subr.mxu0 0.0
    %581 = vmatpush1.msra.mxu0 0.0
    %582 = vmatprep.subr.mxu0 0.0
    %583 = vmatpush1.msra.mxu0 0.0
    %584 = vmatprep.mubr.f32.mxu0 0.0
    %585 = vmatmul.mubr.f32.gmra.mrb[0].mxu0 %v509
    %v586 = vpop.f32.mrb[0].mxu0
    %v587 = vadd.f32 %v506, %v586
    %v588 = vpop.f32.mrb[0].mxu0
    %589 = vmatprep.mubr.f32.mxu0 0.0
    %590 = vmatmul.mubr.f32.gmra.mrb[0].mxu0 %v512
    %v591 = vpop.f32.mrb[0].mxu0
    %v592 = vadd.f32 %v506, %v591
    %v593 = vpop.f32.mrb[0].mxu0
    %594 = vmatprep.mubr.f32.mxu0 0.0
    %595 = vmatmul.mubr.f32.gmra.mrb[0].mxu0 %v515
    %v596 = vpop.f32.mrb[0].mxu0
    %v597 = vadd.f32 %v506, %v596
    %v598 = vpop.f32.mrb[0].mxu0
    %599 = vmatprep.mubr.f32.mxu0 0.0
    %600 = vmatmul.mubr.f32.gmra.mrb[0].mxu0 %v518
    %v601 = vpop.f32.mrb[0].mxu0
    %v602 = vadd.f32 %v506, %v601
    %v603 = vpop.f32.mrb[0].mxu0
    %604 = vdwg.mxu0
    %v605 = vld [vmem:[%s9] sm:$0xf]
    %v606 = vld [vmem:[#allocation13] sm:$0x1]
    %v608 = vlaneseq
    %v609 = vshrl.u32 %v608, 7
    %v610 = vsub.s32 0, %v609
    %v611 = vrot.slane %v606, %v610
    %vm613 = vcmask 31744
    %v615 = vsel %vm613, %v587, 0
    %v618 = vsel %vm613, %v592, 0
    %v621 = vsel %vm613, %v597, 0
    %v624 = vsel %vm613, %v602, 0
    %vm626 = vcmask 1043456
    %v628 = vsel %vm626, %v605, 0
    %630 = vmatprep.subr.mxu0 0.0
    %631 = vmatpush1.msra.mxu0 %v628
    %632 = vmatprep.subr.mxu0 0.0
    %633 = vmatpush1.msra.mxu0 0.0
    %634 = vmatprep.subr.mxu0 0.0
    %635 = vmatpush1.msra.mxu0 0.0
    %636 = vmatprep.subr.mxu0 0.0
    %637 = vmatpush1.msra.mxu0 0.0
    %638 = vmatprep.subr.mxu0 0.0
    %639 = vmatpush1.msra.mxu0 0.0
    %640 = vmatprep.subr.mxu0 0.0
    %641 = vmatpush1.msra.mxu0 0.0
    %642 = vmatprep.subr.mxu0 0.0
    %643 = vmatpush1.msra.mxu0 0.0
    %644 = vmatprep.subr.mxu0 0.0
    %645 = vmatpush1.msra.mxu0 0.0
    %646 = vmatprep.subr.mxu0 0.0
    %647 = vmatpush1.msra.mxu0 0.0
    %648 = vmatprep.subr.mxu0 0.0
    %649 = vmatpush1.msra.mxu0 0.0
    %650 = vmatprep.subr.mxu0 0.0
    %651 = vmatpush1.msra.mxu0 0.0
    %652 = vmatprep.subr.mxu0 0.0
    %653 = vmatpush1.msra.mxu0 0.0
    %654 = vmatprep.subr.mxu0 0.0
    %655 = vmatpush1.msra.mxu0 0.0
    %656 = vmatprep.subr.mxu0 0.0
    %657 = vmatpush1.msra.mxu0 0.0
    %658 = vmatprep.subr.mxu0 0.0
    %659 = vmatpush1.msra.mxu0 0.0
    %660 = vmatprep.subr.mxu0 0.0
    %661 = vmatpush1.msra.mxu0 0.0
    %662 = vmatprep.subr.mxu0 0.0
    %663 = vmatpush1.msra.mxu0 0.0
    %664 = vmatprep.subr.mxu0 0.0
    %665 = vmatpush1.msra.mxu0 0.0
    %666 = vmatprep.subr.mxu0 0.0
    %667 = vmatpush1.msra.mxu0 0.0
    %668 = vmatprep.subr.mxu0 0.0
    %669 = vmatpush1.msra.mxu0 0.0
    %670 = vmatprep.subr.mxu0 0.0
    %671 = vmatpush1.msra.mxu0 0.0
    %672 = vmatprep.subr.mxu0 0.0
    %673 = vmatpush1.msra.mxu0 0.0
    %674 = vmatprep.subr.mxu0 0.0
    %675 = vmatpush1.msra.mxu0 0.0
    %676 = vmatprep.subr.mxu0 0.0
    %677 = vmatpush1.msra.mxu0 0.0
    %678 = vmatprep.subr.mxu0 0.0
    %679 = vmatpush1.msra.mxu0 0.0
    %680 = vmatprep.subr.mxu0 0.0
    %681 = vmatpush1.msra.mxu0 0.0
    %682 = vmatprep.subr.mxu0 0.0
    %683 = vmatpush1.msra.mxu0 0.0
    %684 = vmatprep.subr.mxu0 0.0
    %685 = vmatpush1.msra.mxu0 0.0
    %686 = vmatprep.subr.mxu0 0.0
    %687 = vmatpush1.msra.mxu0 0.0
    %688 = vmatprep.subr.mxu0 0.0
    %689 = vmatpush1.msra.mxu0 0.0
    %690 = vmatprep.subr.mxu0 0.0
    %691 = vmatpush1.msra.mxu0 0.0
    %692 = vmatprep.subr.mxu0 0.0
    %693 = vmatpush1.msra.mxu0 0.0
    %694 = vmatprep.mubr.f32.mxu0 0.0
    %695 = vmatmul.mubr.f32.gmra.mrb[0].mxu0 %v615
    %v696 = vpop.f32.mrb[0].mxu0
    %v697 = vadd.f32 %v611, %v696
    %v698 = vpop.f32.mrb[0].mxu0
    %699 = vmatprep.mubr.f32.mxu0 0.0
    %700 = vmatmul.mubr.f32.gmra.mrb[0].mxu0 %v618
    %v701 = vpop.f32.mrb[0].mxu0
    %v702 = vadd.f32 %v611, %v701
    %v703 = vpop.f32.mrb[0].mxu0
    %704 = vmatprep.mubr.f32.mxu0 0.0
    %705 = vmatmul.mubr.f32.gmra.mrb[0].mxu0 %v621
    %v706 = vpop.f32.mrb[0].mxu0
    %v707 = vadd.f32 %v611, %v706
    %v708 = vpop.f32.mrb[0].mxu0
    %709 = vmatprep.mubr.f32.mxu0 0.0
    %710 = vmatmul.mubr.f32.gmra.mrb[0].mxu0 %v624
    %v711 = vpop.f32.mrb[0].mxu0
    %v712 = vadd.f32 %v611, %v711
    %v713 = vpop.f32.mrb[0].mxu0
    %714 = vdwg.mxu0
    %v715 = vsub.f32 0.0, %v697
    %v716 = vsub.f32 0.0, %v702
    %v717 = vsub.f32 0.0, %v707
    %v718 = vsub.f32 0.0, %v712
    %v719 = vmul.f32 %v715, 1.442695
    %v720 = vpow.pop %v719
    %v721 = vmul.f32 %v716, 1.442695
    %v722 = vpow.pop %v721
    %v723 = vmul.f32 %v717, 1.442695
    %v724 = vpow.pop %v723
    %v725 = vmul.f32 %v718, 1.442695
    %v726 = vpow.pop %v725
    %v727 = vadd.f32 %v720, 1.0
    %v728 = vadd.f32 %v722, 1.0
    %v729 = vadd.f32 %v724, 1.0
    %v730 = vadd.f32 %v726, 1.0
    %v731 = vrcp.pop %v727
    %v732 = vmul.f32 1.0, %v731
    %v733 = vrcp.pop %v728
    %v734 = vmul.f32 1.0, %v733
    %v735 = vrcp.pop %v729
    %v736 = vmul.f32 1.0, %v735
    %v737 = vrcp.pop %v730
    %v738 = vmul.f32 1.0, %v737
    %v739 = vld [vmem:[%s7] sm:$0xf]
    %v740 = vld [vmem:[#allocation11] sm:$0x1]
    %v742 = vlaneseq
    %v743 = vshrl.u32 %v742, 7
    %v744 = vsub.s32 0, %v743
    %v745 = vrot.slane %v740, %v744
    %v748 = vsel %vm626, %v739, 0
    %750 = vmatprep.subr.mxu0 0.0
    %751 = vmatpush1.msra.mxu0 %v748
    %752 = vmatprep.subr.mxu0 0.0
    %753 = vmatpush1.msra.mxu0 0.0
    %754 = vmatprep.subr.mxu0 0.0
    %755 = vmatpush1.msra.mxu0 0.0
    %756 = vmatprep.subr.mxu0 0.0
    %757 = vmatpush1.msra.mxu0 0.0
    %758 = vmatprep.subr.mxu0 0.0
    %759 = vmatpush1.msra.mxu0 0.0
    %760 = vmatprep.subr.mxu0 0.0
    %761 = vmatpush1.msra.mxu0 0.0
    %762 = vmatprep.subr.mxu0 0.0
    %763 = vmatpush1.msra.mxu0 0.0
    %764 = vmatprep.subr.mxu0 0.0
    %765 = vmatpush1.msra.mxu0 0.0
    %766 = vmatprep.subr.mxu0 0.0
    %767 = vmatpush1.msra.mxu0 0.0
    %768 = vmatprep.subr.mxu0 0.0
    %769 = vmatpush1.msra.mxu0 0.0
    %770 = vmatprep.subr.mxu0 0.0
    %771 = vmatpush1.msra.mxu0 0.0
    %772 = vmatprep.subr.mxu0 0.0
    %773 = vmatpush1.msra.mxu0 0.0
    %774 = vmatprep.subr.mxu0 0.0
    %775 = vmatpush1.msra.mxu0 0.0
    %776 = vmatprep.subr.mxu0 0.0
    %777 = vmatpush1.msra.mxu0 0.0
    %778 = vmatprep.subr.mxu0 0.0
    %779 = vmatpush1.msra.mxu0 0.0
    %780 = vmatprep.subr.mxu0 0.0
    %781 = vmatpush1.msra.mxu0 0.0
    %782 = vmatprep.subr.mxu0 0.0
    %783 = vmatpush1.msra.mxu0 0.0
    %784 = vmatprep.subr.mxu0 0.0
    %785 = vmatpush1.msra.mxu0 0.0
    %786 = vmatprep.subr.mxu0 0.0
    %787 = vmatpush1.msra.mxu0 0.0
    %788 = vmatprep.subr.mxu0 0.0
    %789 = vmatpush1.msra.mxu0 0.0
    %790 = vmatprep.subr.mxu0 0.0
    %791 = vmatpush1.msra.mxu0 0.0
    %792 = vmatprep.subr.mxu0 0.0
    %793 = vmatpush1.msra.mxu0 0.0
    %794 = vmatprep.subr.mxu0 0.0
    %795 = vmatpush1.msra.mxu0 0.0
    %796 = vmatprep.subr.mxu0 0.0
    %797 = vmatpush1.msra.mxu0 0.0
    %798 = vmatprep.subr.mxu0 0.0
    %799 = vmatpush1.msra.mxu0 0.0
    %800 = vmatprep.subr.mxu0 0.0
    %801 = vmatpush1.msra.mxu0 0.0
    %802 = vmatprep.subr.mxu0 0.0
    %803 = vmatpush1.msra.mxu0 0.0
    %804 = vmatprep.subr.mxu0 0.0
    %805 = vmatpush1.msra.mxu0 0.0
    %806 = vmatprep.subr.mxu0 0.0
    %807 = vmatpush1.msra.mxu0 0.0
    %808 = vmatprep.subr.mxu0 0.0
    %809 = vmatpush1.msra.mxu0 0.0
    %810 = vmatprep.subr.mxu0 0.0
    %811 = vmatpush1.msra.mxu0 0.0
    %812 = vmatprep.subr.mxu0 0.0
    %813 = vmatpush1.msra.mxu0 0.0
    %814 = vmatprep.mubr.f32.mxu0 0.0
    %815 = vmatmul.mubr.f32.gmra.mrb[0].mxu0 %v615
    %v816 = vpop.f32.mrb[0].mxu0
    %v817 = vadd.f32 %v745, %v816
    %v818 = vpop.f32.mrb[0].mxu0
    %819 = vmatprep.mubr.f32.mxu0 0.0
    %820 = vmatmul.mubr.f32.gmra.mrb[0].mxu0 %v618
    %v821 = vpop.f32.mrb[0].mxu0
    %v822 = vadd.f32 %v745, %v821
    %v823 = vpop.f32.mrb[0].mxu0
    %824 = vmatprep.mubr.f32.mxu0 0.0
    %825 = vmatmul.mubr.f32.gmra.mrb[0].mxu0 %v621
    %v826 = vpop.f32.mrb[0].mxu0
    %v827 = vadd.f32 %v745, %v826
    %v828 = vpop.f32.mrb[0].mxu0
    %829 = vmatprep.mubr.f32.mxu0 0.0
    %830 = vmatmul.mubr.f32.gmra.mrb[0].mxu0 %v624
    %v831 = vpop.f32.mrb[0].mxu0
    %v832 = vadd.f32 %v745, %v831
    %v833 = vpop.f32.mrb[0].mxu0
    %834 = vdwg.mxu0
    %v835 = vmul.f32 %v732, %v817
    %v836 = vmul.f32 %v734, %v822
    %v837 = vmul.f32 %v736, %v827
    %v838 = vmul.f32 %v738, %v832
    %v839 = vadd.f32 %v835, %v363
    %v840 = vadd.f32 %v836, %v368
    %v841 = vadd.f32 %v837, %v373
    %v842 = vadd.f32 %v838, %v378
    %v843 = vld [vmem:[#allocation14] sm:$0x1]
    %v845 = vlaneseq
    %v846 = vshrl.u32 %v845, 7
    %v847 = vsub.s32 0, %v846
    %v848 = vrot.slane %v843, %v847
    %v850 = vmul.f32 %v839, %v848
    %v851 = vmul.f32 %v840, %v848
    %v852 = vmul.f32 %v841, %v848
    %v853 = vmul.f32 %v842, %v848
    %v854 = vld [vmem:[#allocation16] sm:$0x1]
    %v856 = vlaneseq
    %v857 = vshrl.u32 %v856, 7
    %v858 = vsub.s32 0, %v857
    %v859 = vrot.slane %v854, %v858
    %v861 = vadd.f32 %v850, %v859
    %v862 = vadd.f32 %v851, %v859
    %v863 = vadd.f32 %v852, %v859
    %v864 = vadd.f32 %v853, %v859
    %v865 = vsel %vm613, %v861, -inf
    %866 = vmax.xlane.f32.xlu0 %v865
    %v867 = vpop.xlane.xlu0 %866
    %v868 = vsel %vm613, %v862, -inf
    %869 = vmax.xlane.f32.xlu0 %v868
    %v870 = vpop.xlane.xlu0 %869
    %v871 = vsel %vm613, %v863, -inf
    %872 = vmax.xlane.f32.xlu0 %v871
    %v873 = vpop.xlane.xlu0 %872
    %v874 = vsel %vm613, %v864, -inf
    %875 = vmax.xlane.f32.xlu0 %v874
    %v876 = vpop.xlane.xlu0 %875
    %v877 = vsub.f32 %v861, %v867
    %v878 = vsub.f32 %v862, %v870
    %v879 = vsub.f32 %v863, %v873
    %v880 = vsub.f32 %v864, %v876
    %v881 = vmul.f32 %v877, 1.442695
    %v882 = vpow.pop %v881
    %v883 = vmul.f32 %v878, 1.442695
    %v884 = vpow.pop %v883
    %v885 = vmul.f32 %v879, 1.442695
    %v886 = vpow.pop %v885
    %v887 = vmul.f32 %v880, 1.442695
    %v888 = vpow.pop %v887
    %v889 = vsel %vm613, %v882, 0.0
    %890 = vadd.xlane.f32.xlu0 %v889
    %v891 = vpop.xlane.xlu0 %890
    %v892 = vsel %vm613, %v884, 0.0
    %893 = vadd.xlane.f32.xlu0 %v892
    %v894 = vpop.xlane.xlu0 %893
    %v895 = vsel %vm613, %v886, 0.0
    %896 = vadd.xlane.f32.xlu0 %v895
    %v897 = vpop.xlane.xlu0 %896
    %v898 = vsel %vm613, %v888, 0.0
    %899 = vadd.xlane.f32.xlu0 %v898
    %v900 = vpop.xlane.xlu0 %899
    %v901 = vrcp.pop %v891
    %v902 = vrcp.pop %v894
    %v903 = vrcp.pop %v897
    %v904 = vrcp.pop %v900
    %v905 = vmul.f32 %v882, %v901
    %v906 = vmul.f32 %v884, %v902
    %v907 = vmul.f32 %v886, %v903
    %v908 = vmul.f32 %v888, %v904
    %909 = vst.msk [vmem:[%s26] sm:$0xff] %vm613, %v905
    %910 = vst.msk [vmem:[%s26 + $0x8] sm:$0xff] %vm613, %v906
    %911 = vst.msk [vmem:[%s26 + $0x10] sm:$0xff] %vm613, %v907
    %912 = vst.msk [vmem:[%s26 + $0x18] sm:$0xff] %vm613, %v908
    %v913 = vld [vmem:[#allocation17] sm:$0xff]
    %v914 = vld [vmem:[#allocation19] sm:$0x1]
    %v915 = vlaneseq
    %v916 = vshrl.u32 %v915, 7
    %v917 = vsub.s32 0, %v916
    %v918 = vrot.slane %v914, %v917
    %vm919 = vcmask 64512
    %v920 = vsel %vm919, %v268, 0
    %v922 = vsel %vm919, %v269, 0
    %v924 = vsel %vm919, %v270, 0
    %v926 = vsel %vm919, %v271, 0
    %928 = vmatprep.subr.mxu0 0.0
    %929 = vmatpush1.msra.mxu0 %v913
    %930 = vmatprep.subr.mxu0 0.0
    %931 = vmatpush1.msra.mxu0 0.0
    %932 = vmatprep.subr.mxu0 0.0
    %933 = vmatpush1.msra.mxu0 0.0
    %934 = vmatprep.subr.mxu0 0.0
    %935 = vmatpush1.msra.mxu0 0.0
    %936 = vmatprep.subr.mxu0 0.0
    %937 = vmatpush1.msra.mxu0 0.0
    %938 = vmatprep.subr.mxu0 0.0
    %939 = vmatpush1.msra.mxu0 0.0
    %940 = vmatprep.subr.mxu0 0.0
    %941 = vmatpush1.msra.mxu0 0.0
    %942 = vmatprep.subr.mxu0 0.0
    %943 = vmatpush1.msra.mxu0 0.0
    %944 = vmatprep.subr.mxu0 0.0
    %945 = vmatpush1.msra.mxu0 0.0
    %946 = vmatprep.subr.mxu0 0.0
    %947 = vmatpush1.msra.mxu0 0.0
    %948 = vmatprep.subr.mxu0 0.0
    %949 = vmatpush1.msra.mxu0 0.0
    %950 = vmatprep.subr.mxu0 0.0
    %951 = vmatpush1.msra.mxu0 0.0
    %952 = vmatprep.subr.mxu0 0.0
    %953 = vmatpush1.msra.mxu0 0.0
    %954 = vmatprep.subr.mxu0 0.0
    %955 = vmatpush1.msra.mxu0 0.0
    %956 = vmatprep.subr.mxu0 0.0
    %957 = vmatpush1.msra.mxu0 0.0
    %958 = vmatprep.subr.mxu0 0.0
    %959 = vmatpush1.msra.mxu0 0.0
    %960 = vmatprep.subr.mxu0 0.0
    %961 = vmatpush1.msra.mxu0 0.0
    %962 = vmatprep.subr.mxu0 0.0
    %963 = vmatpush1.msra.mxu0 0.0
    %964 = vmatprep.subr.mxu0 0.0
    %965 = vmatpush1.msra.mxu0 0.0
    %966 = vmatprep.subr.mxu0 0.0
    %967 = vmatpush1.msra.mxu0 0.0
    %968 = vmatprep.subr.mxu0 0.0
    %969 = vmatpush1.msra.mxu0 0.0
    %970 = vmatprep.subr.mxu0 0.0
    %971 = vmatpush1.msra.mxu0 0.0
    %972 = vmatprep.subr.mxu0 0.0
    %973 = vmatpush1.msra.mxu0 0.0
    %974 = vmatprep.subr.mxu0 0.0
    %975 = vmatpush1.msra.mxu0 0.0
    %976 = vmatprep.subr.mxu0 0.0
    %977 = vmatpush1.msra.mxu0 0.0
    %978 = vmatprep.subr.mxu0 0.0
    %979 = vmatpush1.msra.mxu0 0.0
    %980 = vmatprep.subr.mxu0 0.0
    %981 = vmatpush1.msra.mxu0 0.0
    %982 = vmatprep.subr.mxu0 0.0
    %983 = vmatpush1.msra.mxu0 0.0
    %984 = vmatprep.subr.mxu0 0.0
    %985 = vmatpush1.msra.mxu0 0.0
    %986 = vmatprep.subr.mxu0 0.0
    %987 = vmatpush1.msra.mxu0 0.0
    %988 = vmatprep.subr.mxu0 0.0
    %989 = vmatpush1.msra.mxu0 0.0
    %990 = vmatprep.subr.mxu0 0.0
    %991 = vmatpush1.msra.mxu0 0.0
    %992 = vmatprep.mubr.f32.mxu0 0.0
    %993 = vmatmul.mubr.f32.gmra.mrb[0].mxu0 %v920
    %v994 = vpop.f32.mrb[0].mxu0
    %v995 = vadd.f32 %v918, %v994
    %v996 = vpop.f32.mrb[0].mxu0
    %997 = vmatprep.mubr.f32.mxu0 0.0
    %998 = vmatmul.mubr.f32.gmra.mrb[0].mxu0 %v922
    %v999 = vpop.f32.mrb[0].mxu0
    %v1000 = vadd.f32 %v918, %v999
    %v1001 = vpop.f32.mrb[0].mxu0
    %1002 = vmatprep.mubr.f32.mxu0 0.0
    %1003 = vmatmul.mubr.f32.gmra.mrb[0].mxu0 %v924
    %v1004 = vpop.f32.mrb[0].mxu0
    %v1005 = vadd.f32 %v918, %v1004
    %v1006 = vpop.f32.mrb[0].mxu0
    %1007 = vmatprep.mubr.f32.mxu0 0.0
    %1008 = vmatmul.mubr.f32.gmra.mrb[0].mxu0 %v926
    %v1009 = vpop.f32.mrb[0].mxu0
    %v1010 = vadd.f32 %v918, %v1009
    %v1011 = vpop.f32.mrb[0].mxu0
    %1012 = vdwg.mxu0
    %v1013 = vld [vmem:[#allocation20] sm:$0xff]
    %v1014 = vld [vmem:[#allocation22] sm:$0x1]
    %v1015 = vlaneseq
    %v1016 = vshrl.u32 %v1015, 7
    %v1017 = vsub.s32 0, %v1016
    %v1018 = vrot.slane %v1014, %v1017
    %1019 = vmatprep.subr.mxu0 0.0
    %1020 = vmatpush1.msra.mxu0 %v1013
    %1021 = vmatprep.subr.mxu0 0.0
    %1022 = vmatpush1.msra.mxu0 0.0
    %1023 = vmatprep.subr.mxu0 0.0
    %1024 = vmatpush1.msra.mxu0 0.0
    %1025 = vmatprep.subr.mxu0 0.0
    %1026 = vmatpush1.msra.mxu0 0.0
    %1027 = vmatprep.subr.mxu0 0.0
    %1028 = vmatpush1.msra.mxu0 0.0
    %1029 = vmatprep.subr.mxu0 0.0
    %1030 = vmatpush1.msra.mxu0 0.0
    %1031 = vmatprep.subr.mxu0 0.0
    %1032 = vmatpush1.msra.mxu0 0.0
    %1033 = vmatprep.subr.mxu0 0.0
    %1034 = vmatpush1.msra.mxu0 0.0
    %1035 = vmatprep.subr.mxu0 0.0
    %1036 = vmatpush1.msra.mxu0 0.0
    %1037 = vmatprep.subr.mxu0 0.0
    %1038 = vmatpush1.msra.mxu0 0.0
    %1039 = vmatprep.subr.mxu0 0.0
    %1040 = vmatpush1.msra.mxu0 0.0
    %1041 = vmatprep.subr.mxu0 0.0
    %1042 = vmatpush1.msra.mxu0 0.0
    %1043 = vmatprep.subr.mxu0 0.0
    %1044 = vmatpush1.msra.mxu0 0.0
    %1045 = vmatprep.subr.mxu0 0.0
    %1046 = vmatpush1.msra.mxu0 0.0
    %1047 = vmatprep.subr.mxu0 0.0
    %1048 = vmatpush1.msra.mxu0 0.0
    %1049 = vmatprep.subr.mxu0 0.0
    %1050 = vmatpush1.msra.mxu0 0.0
    %1051 = vmatprep.subr.mxu0 0.0
    %1052 = vmatpush1.msra.mxu0 0.0
    %1053 = vmatprep.subr.mxu0 0.0
    %1054 = vmatpush1.msra.mxu0 0.0
    %1055 = vmatprep.subr.mxu0 0.0
    %1056 = vmatpush1.msra.mxu0 0.0
    %1057 = vmatprep.subr.mxu0 0.0
    %1058 = vmatpush1.msra.mxu0 0.0
    %1059 = vmatprep.subr.mxu0 0.0
    %1060 = vmatpush1.msra.mxu0 0.0
    %1061 = vmatprep.subr.mxu0 0.0
    %1062 = vmatpush1.msra.mxu0 0.0
    %1063 = vmatprep.subr.mxu0 0.0
    %1064 = vmatpush1.msra.mxu0 0.0
    %1065 = vmatprep.subr.mxu0 0.0
    %1066 = vmatpush1.msra.mxu0 0.0
    %1067 = vmatprep.subr.mxu0 0.0
    %1068 = vmatpush1.msra.mxu0 0.0
    %1069 = vmatprep.subr.mxu0 0.0
    %1070 = vmatpush1.msra.mxu0 0.0
    %1071 = vmatprep.subr.mxu0 0.0
    %1072 = vmatpush1.msra.mxu0 0.0
    %1073 = vmatprep.subr.mxu0 0.0
    %1074 = vmatpush1.msra.mxu0 0.0
    %1075 = vmatprep.subr.mxu0 0.0
    %1076 = vmatpush1.msra.mxu0 0.0
    %1077 = vmatprep.subr.mxu0 0.0
    %1078 = vmatpush1.msra.mxu0 0.0
    %1079 = vmatprep.subr.mxu0 0.0
    %1080 = vmatpush1.msra.mxu0 0.0
    %1081 = vmatprep.subr.mxu0 0.0
    %1082 = vmatpush1.msra.mxu0 0.0
    %1083 = vmatprep.mubr.f32.mxu0 0.0
    %1084 = vmatmul.mubr.f32.gmra.mrb[0].mxu0 %v920
    %v1085 = vpop.f32.mrb[0].mxu0
    %v1086 = vadd.f32 %v1018, %v1085
    %v1087 = vpop.f32.mrb[0].mxu0
    %1088 = vmatprep.mubr.f32.mxu0 0.0
    %1089 = vmatmul.mubr.f32.gmra.mrb[0].mxu0 %v922
    %v1090 = vpop.f32.mrb[0].mxu0
    %v1091 = vadd.f32 %v1018, %v1090
    %v1092 = vpop.f32.mrb[0].mxu0
    %1093 = vmatprep.mubr.f32.mxu0 0.0
    %1094 = vmatmul.mubr.f32.gmra.mrb[0].mxu0 %v924
    %v1095 = vpop.f32.mrb[0].mxu0
    %v1096 = vadd.f32 %v1018, %v1095
    %v1097 = vpop.f32.mrb[0].mxu0
    %1098 = vmatprep.mubr.f32.mxu0 0.0
    %1099 = vmatmul.mubr.f32.gmra.mrb[0].mxu0 %v926
    %v1100 = vpop.f32.mrb[0].mxu0
    %v1101 = vadd.f32 %v1018, %v1100
    %v1102 = vpop.f32.mrb[0].mxu0
    %1103 = vdwg.mxu0
    %vm1104 = vcmp.gt.f32.partialorder %v1086, 0.0
    %vm1105 = vcmp.gt.f32.partialorder %v1091, 0.0
    %vm1106 = vcmp.gt.f32.partialorder %v1096, 0.0
    %vm1107 = vcmp.gt.f32.partialorder %v1101, 0.0
    %v1108 = vmul.f32 %v1086, 1.442695
    %v1109 = vpow.pop %v1108
    %v1110 = vmul.f32 %v1091, 1.442695
    %v1111 = vpow.pop %v1110
    %v1112 = vmul.f32 %v1096, 1.442695
    %v1113 = vpow.pop %v1112
    %v1114 = vmul.f32 %v1101, 1.442695
    %v1115 = vpow.pop %v1114
    %v1116 = vsub.f32 %v1109, 1.0
    %v1117 = vsub.f32 %v1111, 1.0
    %v1118 = vsub.f32 %v1113, 1.0
    %v1119 = vsub.f32 %v1115, 1.0
    %v1120 = vsel %vm1104, %v1086, %v1116
    %v1121 = vsel %vm1105, %v1091, %v1117
    %v1122 = vsel %vm1106, %v1096, %v1118
    %v1123 = vsel %vm1107, %v1101, %v1119
    %v1124 = vld [vmem:[%s17] sm:$0xff]
    %v1125 = vld [vmem:[%s17 + $0x8] sm:$0xff]
    %v1126 = vld [vmem:[%s17 + $0x10] sm:$0xff]
    %v1127 = vld [vmem:[%s17 + $0x18] sm:$0xff]
    %v1128 = vld [vmem:[%s18] sm:$0x1]
    %v1129 = vlaneseq
    %v1130 = vshrl.u32 %v1129, 7
    %v1131 = vsub.s32 0, %v1130
    %v1132 = vrot.slane %v1128, %v1131
    %v1134 = vsel %vm283, %v1120, 0
    %v1137 = vsel %vm283, %v1121, 0
    %v1140 = vsel %vm283, %v1122, 0
    %v1143 = vsel %vm283, %v1123, 0
    %1145 = vmatprep.subr.mxu0 0.0
    %1146 = vmatpush1.msra.mxu0 %v1124
    %1147 = vmatprep.subr.mxu0 0.0
    %1148 = vmatpush1.msra.mxu0 %v1125
    %1149 = vmatprep.subr.mxu0 0.0
    %1150 = vmatpush1.msra.mxu0 %v1126
    %1151 = vmatprep.subr.mxu0 0.0
    %1152 = vmatpush1.msra.mxu0 %v1127
    %1153 = vmatprep.subr.mxu0 0.0
    %1154 = vmatpush1.msra.mxu0 0.0
    %1155 = vmatprep.subr.mxu0 0.0
    %1156 = vmatpush1.msra.mxu0 0.0
    %1157 = vmatprep.subr.mxu0 0.0
    %1158 = vmatpush1.msra.mxu0 0.0
    %1159 = vmatprep.subr.mxu0 0.0
    %1160 = vmatpush1.msra.mxu0 0.0
    %1161 = vmatprep.subr.mxu0 0.0
    %1162 = vmatpush1.msra.mxu0 0.0
    %1163 = vmatprep.subr.mxu0 0.0
    %1164 = vmatpush1.msra.mxu0 0.0
    %1165 = vmatprep.subr.mxu0 0.0
    %1166 = vmatpush1.msra.mxu0 0.0
    %1167 = vmatprep.subr.mxu0 0.0
    %1168 = vmatpush1.msra.mxu0 0.0
    %1169 = vmatprep.subr.mxu0 0.0
    %1170 = vmatpush1.msra.mxu0 0.0
    %1171 = vmatprep.subr.mxu0 0.0
    %1172 = vmatpush1.msra.mxu0 0.0
    %1173 = vmatprep.subr.mxu0 0.0
    %1174 = vmatpush1.msra.mxu0 0.0
    %1175 = vmatprep.subr.mxu0 0.0
    %1176 = vmatpush1.msra.mxu0 0.0
    %1177 = vmatprep.subr.mxu0 0.0
    %1178 = vmatpush1.msra.mxu0 0.0
    %1179 = vmatprep.subr.mxu0 0.0
    %1180 = vmatpush1.msra.mxu0 0.0
    %1181 = vmatprep.subr.mxu0 0.0
    %1182 = vmatpush1.msra.mxu0 0.0
    %1183 = vmatprep.subr.mxu0 0.0
    %1184 = vmatpush1.msra.mxu0 0.0
    %1185 = vmatprep.subr.mxu0 0.0
    %1186 = vmatpush1.msra.mxu0 0.0
    %1187 = vmatprep.subr.mxu0 0.0
    %1188 = vmatpush1.msra.mxu0 0.0
    %1189 = vmatprep.subr.mxu0 0.0
    %1190 = vmatpush1.msra.mxu0 0.0
    %1191 = vmatprep.subr.mxu0 0.0
    %1192 = vmatpush1.msra.mxu0 0.0
    %1193 = vmatprep.subr.mxu0 0.0
    %1194 = vmatpush1.msra.mxu0 0.0
    %1195 = vmatprep.subr.mxu0 0.0
    %1196 = vmatpush1.msra.mxu0 0.0
    %1197 = vmatprep.subr.mxu0 0.0
    %1198 = vmatpush1.msra.mxu0 0.0
    %1199 = vmatprep.subr.mxu0 0.0
    %1200 = vmatpush1.msra.mxu0 0.0
    %1201 = vmatprep.subr.mxu0 0.0
    %1202 = vmatpush1.msra.mxu0 0.0
    %1203 = vmatprep.subr.mxu0 0.0
    %1204 = vmatpush1.msra.mxu0 0.0
    %1205 = vmatprep.subr.mxu0 0.0
    %1206 = vmatpush1.msra.mxu0 0.0
    %1207 = vmatprep.subr.mxu0 0.0
    %1208 = vmatpush1.msra.mxu0 0.0
    %1209 = vmatprep.mubr.f32.mxu0 0.0
    %1210 = vmatmul.mubr.f32.gmra.mrb[0].mxu0 %v1134
    %v1211 = vpop.f32.mrb[0].mxu0
    %v1212 = vadd.f32 %v1132, %v1211
    %v1213 = vpop.f32.mrb[0].mxu0
    %1214 = vmatprep.mubr.f32.mxu0 0.0
    %1215 = vmatmul.mubr.f32.gmra.mrb[0].mxu0 %v1137
    %v1216 = vpop.f32.mrb[0].mxu0
    %v1217 = vadd.f32 %v1132, %v1216
    %v1218 = vpop.f32.mrb[0].mxu0
    %1219 = vmatprep.mubr.f32.mxu0 0.0
    %1220 = vmatmul.mubr.f32.gmra.mrb[0].mxu0 %v1140
    %v1221 = vpop.f32.mrb[0].mxu0
    %v1222 = vadd.f32 %v1132, %v1221
    %v1223 = vpop.f32.mrb[0].mxu0
    %1224 = vmatprep.mubr.f32.mxu0 0.0
    %1225 = vmatmul.mubr.f32.gmra.mrb[0].mxu0 %v1143
    %v1226 = vpop.f32.mrb[0].mxu0
    %v1227 = vadd.f32 %v1132, %v1226
    %v1228 = vpop.f32.mrb[0].mxu0
    %1229 = vdwg.mxu0
    %v1230 = vld [vmem:[#allocation25] sm:$0xff]
    %v1231 = vld [vmem:[#allocation25 + $0x8] sm:$0xff]
    %v1232 = vld [vmem:[#allocation25 + $0x10] sm:$0xff]
    %v1233 = vld [vmem:[#allocation25 + $0x18] sm:$0xff]
    %v1234 = vld [vmem:[%s22] sm:$0x1]
    %v1235 = vlaneseq
    %v1236 = vshrl.u32 %v1235, 7
    %v1237 = vsub.s32 0, %v1236
    %v1238 = vrot.slane %v1234, %v1237
    %v1240 = vsel %vm283, %v1212, 0
    %v1243 = vsel %vm283, %v1217, 0
    %v1246 = vsel %vm283, %v1222, 0
    %v1249 = vsel %vm283, %v1227, 0
    %1251 = vmatprep.subr.mxu0 0.0
    %1252 = vmatpush1.msra.mxu0 %v1230
    %1253 = vmatprep.subr.mxu0 0.0
    %1254 = vmatpush1.msra.mxu0 %v1231
    %1255 = vmatprep.subr.mxu0 0.0
    %1256 = vmatpush1.msra.mxu0 %v1232
    %1257 = vmatprep.subr.mxu0 0.0
    %1258 = vmatpush1.msra.mxu0 %v1233
    %1259 = vmatprep.subr.mxu0 0.0
    %1260 = vmatpush1.msra.mxu0 0.0
    %1261 = vmatprep.subr.mxu0 0.0
    %1262 = vmatpush1.msra.mxu0 0.0
    %1263 = vmatprep.subr.mxu0 0.0
    %1264 = vmatpush1.msra.mxu0 0.0
    %1265 = vmatprep.subr.mxu0 0.0
    %1266 = vmatpush1.msra.mxu0 0.0
    %1267 = vmatprep.subr.mxu0 0.0
    %1268 = vmatpush1.msra.mxu0 0.0
    %1269 = vmatprep.subr.mxu0 0.0
    %1270 = vmatpush1.msra.mxu0 0.0
    %1271 = vmatprep.subr.mxu0 0.0
    %1272 = vmatpush1.msra.mxu0 0.0
    %1273 = vmatprep.subr.mxu0 0.0
    %1274 = vmatpush1.msra.mxu0 0.0
    %1275 = vmatprep.subr.mxu0 0.0
    %1276 = vmatpush1.msra.mxu0 0.0
    %1277 = vmatprep.subr.mxu0 0.0
    %1278 = vmatpush1.msra.mxu0 0.0
    %1279 = vmatprep.subr.mxu0 0.0
    %1280 = vmatpush1.msra.mxu0 0.0
    %1281 = vmatprep.subr.mxu0 0.0
    %1282 = vmatpush1.msra.mxu0 0.0
    %1283 = vmatprep.subr.mxu0 0.0
    %1284 = vmatpush1.msra.mxu0 0.0
    %1285 = vmatprep.subr.mxu0 0.0
    %1286 = vmatpush1.msra.mxu0 0.0
    %1287 = vmatprep.subr.mxu0 0.0
    %1288 = vmatpush1.msra.mxu0 0.0
    %1289 = vmatprep.subr.mxu0 0.0
    %1290 = vmatpush1.msra.mxu0 0.0
    %1291 = vmatprep.subr.mxu0 0.0
    %1292 = vmatpush1.msra.mxu0 0.0
    %1293 = vmatprep.subr.mxu0 0.0
    %1294 = vmatpush1.msra.mxu0 0.0
    %1295 = vmatprep.subr.mxu0 0.0
    %1296 = vmatpush1.msra.mxu0 0.0
    %1297 = vmatprep.subr.mxu0 0.0
    %1298 = vmatpush1.msra.mxu0 0.0
    %1299 = vmatprep.subr.mxu0 0.0
    %1300 = vmatpush1.msra.mxu0 0.0
    %1301 = vmatprep.subr.mxu0 0.0
    %1302 = vmatpush1.msra.mxu0 0.0
    %1303 = vmatprep.subr.mxu0 0.0
    %1304 = vmatpush1.msra.mxu0 0.0
    %1305 = vmatprep.subr.mxu0 0.0
    %1306 = vmatpush1.msra.mxu0 0.0
    %1307 = vmatprep.subr.mxu0 0.0
    %1308 = vmatpush1.msra.mxu0 0.0
    %1309 = vmatprep.subr.mxu0 0.0
    %1310 = vmatpush1.msra.mxu0 0.0
    %1311 = vmatprep.subr.mxu0 0.0
    %1312 = vmatpush1.msra.mxu0 0.0
    %1313 = vmatprep.subr.mxu0 0.0
    %1314 = vmatpush1.msra.mxu0 0.0
    %1315 = vmatprep.mubr.f32.mxu0 0.0
    %1316 = vmatmul.mubr.f32.gmra.mrb[0].mxu0 %v1240
    %v1317 = vpop.f32.mrb[0].mxu0
    %v1318 = vadd.f32 %v1238, %v1317
    %v1319 = vpop.f32.mrb[0].mxu0
    %1320 = vmatprep.mubr.f32.mxu0 0.0
    %1321 = vmatmul.mubr.f32.gmra.mrb[0].mxu0 %v1243
    %v1322 = vpop.f32.mrb[0].mxu0
    %v1323 = vadd.f32 %v1238, %v1322
    %v1324 = vpop.f32.mrb[0].mxu0
    %1325 = vmatprep.mubr.f32.mxu0 0.0
    %1326 = vmatmul.mubr.f32.gmra.mrb[0].mxu0 %v1246
    %v1327 = vpop.f32.mrb[0].mxu0
    %v1328 = vadd.f32 %v1238, %v1327
    %v1329 = vpop.f32.mrb[0].mxu0
    %1330 = vmatprep.mubr.f32.mxu0 0.0
    %1331 = vmatmul.mubr.f32.gmra.mrb[0].mxu0 %v1249
    %v1332 = vpop.f32.mrb[0].mxu0
    %v1333 = vadd.f32 %v1238, %v1332
    %v1334 = vpop.f32.mrb[0].mxu0
    %1335 = vdwg.mxu0
    %v1336 = vsub.f32 0.0, %v1318
    %v1337 = vsub.f32 0.0, %v1323
    %v1338 = vsub.f32 0.0, %v1328
    %v1339 = vsub.f32 0.0, %v1333
    %v1340 = vmul.f32 %v1336, 1.442695
    %v1341 = vpow.pop %v1340
    %v1342 = vmul.f32 %v1337, 1.442695
    %v1343 = vpow.pop %v1342
    %v1344 = vmul.f32 %v1338, 1.442695
    %v1345 = vpow.pop %v1344
    %v1346 = vmul.f32 %v1339, 1.442695
    %v1347 = vpow.pop %v1346
    %v1348 = vadd.f32 %v1341, 1.0
    %v1349 = vadd.f32 %v1343, 1.0
    %v1350 = vadd.f32 %v1345, 1.0
    %v1351 = vadd.f32 %v1347, 1.0
    %v1352 = vrcp.pop %v1348
    %v1353 = vmul.f32 1.0, %v1352
    %v1354 = vrcp.pop %v1349
    %v1355 = vmul.f32 1.0, %v1354
    %v1356 = vrcp.pop %v1350
    %v1357 = vmul.f32 1.0, %v1356
    %v1358 = vrcp.pop %v1351
    %v1359 = vmul.f32 1.0, %v1358
    %v1360 = vld [vmem:[#allocation23] sm:$0xff]
    %v1361 = vld [vmem:[#allocation23 + $0x8] sm:$0xff]
    %v1362 = vld [vmem:[#allocation23 + $0x10] sm:$0xff]
    %v1363 = vld [vmem:[#allocation23 + $0x18] sm:$0xff]
    %v1364 = vld [vmem:[%s20] sm:$0x1]
    %v1365 = vlaneseq
    %v1366 = vshrl.u32 %v1365, 7
    %v1367 = vsub.s32 0, %v1366
    %v1368 = vrot.slane %v1364, %v1367
    %1369 = vmatprep.subr.mxu0 0.0
    %1370 = vmatpush1.msra.mxu0 %v1360
    %1371 = vmatprep.subr.mxu0 0.0
    %1372 = vmatpush1.msra.mxu0 %v1361
    %1373 = vmatprep.subr.mxu0 0.0
    %1374 = vmatpush1.msra.mxu0 %v1362
    %1375 = vmatprep.subr.mxu0 0.0
    %1376 = vmatpush1.msra.mxu0 %v1363
    %1377 = vmatprep.subr.mxu0 0.0
    %1378 = vmatpush1.msra.mxu0 0.0
    %1379 = vmatprep.subr.mxu0 0.0
    %1380 = vmatpush1.msra.mxu0 0.0
    %1381 = vmatprep.subr.mxu0 0.0
    %1382 = vmatpush1.msra.mxu0 0.0
    %1383 = vmatprep.subr.mxu0 0.0
    %1384 = vmatpush1.msra.mxu0 0.0
    %1385 = vmatprep.subr.mxu0 0.0
    %1386 = vmatpush1.msra.mxu0 0.0
    %1387 = vmatprep.subr.mxu0 0.0
    %1388 = vmatpush1.msra.mxu0 0.0
    %1389 = vmatprep.subr.mxu0 0.0
    %1390 = vmatpush1.msra.mxu0 0.0
    %1391 = vmatprep.subr.mxu0 0.0
    %1392 = vmatpush1.msra.mxu0 0.0
    %1393 = vmatprep.subr.mxu0 0.0
    %1394 = vmatpush1.msra.mxu0 0.0
    %1395 = vmatprep.subr.mxu0 0.0
    %1396 = vmatpush1.msra.mxu0 0.0
    %1397 = vmatprep.subr.mxu0 0.0
    %1398 = vmatpush1.msra.mxu0 0.0
    %1399 = vmatprep.subr.mxu0 0.0
    %1400 = vmatpush1.msra.mxu0 0.0
    %1401 = vmatprep.subr.mxu0 0.0
    %1402 = vmatpush1.msra.mxu0 0.0
    %1403 = vmatprep.subr.mxu0 0.0
    %1404 = vmatpush1.msra.mxu0 0.0
    %1405 = vmatprep.subr.mxu0 0.0
    %1406 = vmatpush1.msra.mxu0 0.0
    %1407 = vmatprep.subr.mxu0 0.0
    %1408 = vmatpush1.msra.mxu0 0.0
    %1409 = vmatprep.subr.mxu0 0.0
    %1410 = vmatpush1.msra.mxu0 0.0
    %1411 = vmatprep.subr.mxu0 0.0
    %1412 = vmatpush1.msra.mxu0 0.0
    %1413 = vmatprep.subr.mxu0 0.0
    %1414 = vmatpush1.msra.mxu0 0.0
    %1415 = vmatprep.subr.mxu0 0.0
    %1416 = vmatpush1.msra.mxu0 0.0
    %1417 = vmatprep.subr.mxu0 0.0
    %1418 = vmatpush1.msra.mxu0 0.0
    %1419 = vmatprep.subr.mxu0 0.0
    %1420 = vmatpush1.msra.mxu0 0.0
    %1421 = vmatprep.subr.mxu0 0.0
    %1422 = vmatpush1.msra.mxu0 0.0
    %1423 = vmatprep.subr.mxu0 0.0
    %1424 = vmatpush1.msra.mxu0 0.0
    %1425 = vmatprep.subr.mxu0 0.0
    %1426 = vmatpush1.msra.mxu0 0.0
    %1427 = vmatprep.subr.mxu0 0.0
    %1428 = vmatpush1.msra.mxu0 0.0
    %1429 = vmatprep.subr.mxu0 0.0
    %1430 = vmatpush1.msra.mxu0 0.0
    %1431 = vmatprep.subr.mxu0 0.0
    %1432 = vmatpush1.msra.mxu0 0.0
    %1433 = vmatprep.mubr.f32.mxu0 0.0
    %1434 = vmatmul.mubr.f32.gmra.mrb[0].mxu0 %v1240
    %v1435 = vpop.f32.mrb[0].mxu0
    %v1436 = vadd.f32 %v1368, %v1435
    %v1437 = vpop.f32.mrb[0].mxu0
    %1438 = vmatprep.mubr.f32.mxu0 0.0
    %1439 = vmatmul.mubr.f32.gmra.mrb[0].mxu0 %v1243
    %v1440 = vpop.f32.mrb[0].mxu0
    %v1441 = vadd.f32 %v1368, %v1440
    %v1442 = vpop.f32.mrb[0].mxu0
    %1443 = vmatprep.mubr.f32.mxu0 0.0
    %1444 = vmatmul.mubr.f32.gmra.mrb[0].mxu0 %v1246
    %v1445 = vpop.f32.mrb[0].mxu0
    %v1446 = vadd.f32 %v1368, %v1445
    %v1447 = vpop.f32.mrb[0].mxu0
    %1448 = vmatprep.mubr.f32.mxu0 0.0
    %1449 = vmatmul.mubr.f32.gmra.mrb[0].mxu0 %v1249
    %v1450 = vpop.f32.mrb[0].mxu0
    %v1451 = vadd.f32 %v1368, %v1450
    %v1452 = vpop.f32.mrb[0].mxu0
    %1453 = vdwg.mxu0
    %v1454 = vmul.f32 %v1353, %v1436
    %v1455 = vmul.f32 %v1355, %v1441
    %v1456 = vmul.f32 %v1357, %v1446
    %v1457 = vmul.f32 %v1359, %v1451
    %v1458 = vadd.f32 %v1454, %v995
    %v1459 = vadd.f32 %v1455, %v1000
    %v1460 = vadd.f32 %v1456, %v1005
    %v1461 = vadd.f32 %v1457, %v1010
    %v1462 = vld [vmem:[%s23] sm:$0x1]
    %v1463 = vlaneseq
    %v1464 = vshrl.u32 %v1463, 7
    %v1465 = vsub.s32 0, %v1464
    %v1466 = vrot.slane %v1462, %v1465
    %v1467 = vmul.f32 %v1458, %v1466
    %v1468 = vmul.f32 %v1459, %v1466
    %v1469 = vmul.f32 %v1460, %v1466
    %v1470 = vmul.f32 %v1461, %v1466
    %v1471 = vld [vmem:[%s24] sm:$0x1]
    %v1472 = vlaneseq
    %v1473 = vshrl.u32 %v1472, 7
    %v1474 = vsub.s32 0, %v1473
    %v1475 = vrot.slane %v1471, %v1474
    %v1476 = vadd.f32 %v1467, %v1475
    %v1477 = vadd.f32 %v1468, %v1475
    %v1478 = vadd.f32 %v1469, %v1475
    %v1479 = vadd.f32 %v1470, %v1475
    %1481 = vset.pattern.permute.xlu0 0
    %1482 = vperm.xlu0 %1481, %v905
    %v1483 = vpop.permute.xlu0 %1482
    %1486 = vset.pattern.permute.xlu0 0
    %1487 = vperm.xlu0 %1486, %v906
    %v1488 = vpop.permute.xlu0 %1487
    %1491 = vset.pattern.permute.xlu0 0
    %1492 = vperm.xlu0 %1491, %v907
    %v1493 = vpop.permute.xlu0 %1492
    %1496 = vset.pattern.permute.xlu0 0
    %1497 = vperm.xlu0 %1496, %v908
    %v1498 = vpop.permute.xlu0 %1497
    %v1500 = vmul.f32 %v1476, %v1483
    %v1501 = vmul.f32 %v1477, %v1488
    %v1502 = vmul.f32 %v1478, %v1493
    %v1503 = vmul.f32 %v1479, %v1498
    %v1504 = vadd.f32 %v1500, 0.0
    %v1505 = vadd.f32 %v1501, 0.0
    %v1506 = vadd.f32 %v1502, 0.0
    %v1507 = vadd.f32 %v1503, 0.0
    %s1508 = scalar_lea.vmem [#allocation17], 8
    %v1509 = vld [vmem:[%s1508] sm:$0xff]
    %v1510 = vld [vmem:[#allocation19 + $0x1] sm:$0x1]
    %v1511 = vlaneseq
    %v1512 = vshrl.u32 %v1511, 7
    %v1513 = vsub.s32 0, %v1512
    %v1514 = vrot.slane %v1510, %v1513
    %1515 = vrot.lane.b32.xlu0 %v268, 120
    %v1516 = vpop.permute.xlu0 %1515
    %1517 = vrot.lane.b32.xlu0 %v269, 120
    %v1518 = vpop.permute.xlu0 %1517
    %1519 = vrot.lane.b32.xlu0 %v270, 120
    %v1520 = vpop.permute.xlu0 %1519
    %1521 = vrot.lane.b32.xlu0 %v271, 120
    %v1522 = vpop.permute.xlu0 %1521
    %v1523 = vsel %vm919, %v1516, 0
    %v1525 = vsel %vm919, %v1518, 0
    %v1527 = vsel %vm919, %v1520, 0
    %v1529 = vsel %vm919, %v1522, 0
    %1531 = vmatprep.subr.mxu0 0.0
    %1532 = vmatpush1.msra.mxu0 %v1509
    %1533 = vmatprep.subr.mxu0 0.0
    %1534 = vmatpush1.msra.mxu0 0.0
    %1535 = vmatprep.subr.mxu0 0.0
    %1536 = vmatpush1.msra.mxu0 0.0
    %1537 = vmatprep.subr.mxu0 0.0
    %1538 = vmatpush1.msra.mxu0 0.0
    %1539 = vmatprep.subr.mxu0 0.0
    %1540 = vmatpush1.msra.mxu0 0.0
    %1541 = vmatprep.subr.mxu0 0.0
    %1542 = vmatpush1.msra.mxu0 0.0
    %1543 = vmatprep.subr.mxu0 0.0
    %1544 = vmatpush1.msra.mxu0 0.0
    %1545 = vmatprep.subr.mxu0 0.0
    %1546 = vmatpush1.msra.mxu0 0.0
    %1547 = vmatprep.subr.mxu0 0.0
    %1548 = vmatpush1.msra.mxu0 0.0
    %1549 = vmatprep.subr.mxu0 0.0
    %1550 = vmatpush1.msra.mxu0 0.0
    %1551 = vmatprep.subr.mxu0 0.0
    %1552 = vmatpush1.msra.mxu0 0.0
    %1553 = vmatprep.subr.mxu0 0.0
    %1554 = vmatpush1.msra.mxu0 0.0
    %1555 = vmatprep.subr.mxu0 0.0
    %1556 = vmatpush1.msra.mxu0 0.0
    %1557 = vmatprep.subr.mxu0 0.0
    %1558 = vmatpush1.msra.mxu0 0.0
    %1559 = vmatprep.subr.mxu0 0.0
    %1560 = vmatpush1.msra.mxu0 0.0
    %1561 = vmatprep.subr.mxu0 0.0
    %1562 = vmatpush1.msra.mxu0 0.0
    %1563 = vmatprep.subr.mxu0 0.0
    %1564 = vmatpush1.msra.mxu0 0.0
    %1565 = vmatprep.subr.mxu0 0.0
    %1566 = vmatpush1.msra.mxu0 0.0
    %1567 = vmatprep.subr.mxu0 0.0
    %1568 = vmatpush1.msra.mxu0 0.0
    %1569 = vmatprep.subr.mxu0 0.0
    %1570 = vmatpush1.msra.mxu0 0.0
    %1571 = vmatprep.subr.mxu0 0.0
    %1572 = vmatpush1.msra.mxu0 0.0
    %1573 = vmatprep.subr.mxu0 0.0
    %1574 = vmatpush1.msra.mxu0 0.0
    %1575 = vmatprep.subr.mxu0 0.0
    %1576 = vmatpush1.msra.mxu0 0.0
    %1577 = vmatprep.subr.mxu0 0.0
    %1578 = vmatpush1.msra.mxu0 0.0
    %1579 = vmatprep.subr.mxu0 0.0
    %1580 = vmatpush1.msra.mxu0 0.0
    %1581 = vmatprep.subr.mxu0 0.0
    %1582 = vmatpush1.msra.mxu0 0.0
    %1583 = vmatprep.subr.mxu0 0.0
    %1584 = vmatpush1.msra.mxu0 0.0
    %1585 = vmatprep.subr.mxu0 0.0
    %1586 = vmatpush1.msra.mxu0 0.0
    %1587 = vmatprep.subr.mxu0 0.0
    %1588 = vmatpush1.msra.mxu0 0.0
    %1589 = vmatprep.subr.mxu0 0.0
    %1590 = vmatpush1.msra.mxu0 0.0
    %1591 = vmatprep.subr.mxu0 0.0
    %1592 = vmatpush1.msra.mxu0 0.0
    %1593 = vmatprep.subr.mxu0 0.0
    %1594 = vmatpush1.msra.mxu0 0.0
    %1595 = vmatprep.mubr.f32.mxu0 0.0
    %1596 = vmatmul.mubr.f32.gmra.mrb[0].mxu0 %v1523
    %v1597 = vpop.f32.mrb[0].mxu0
    %v1598 = vadd.f32 %v1514, %v1597
    %v1599 = vpop.f32.mrb[0].mxu0
    %1600 = vmatprep.mubr.f32.mxu0 0.0
    %1601 = vmatmul.mubr.f32.gmra.mrb[0].mxu0 %v1525
    %v1602 = vpop.f32.mrb[0].mxu0
    %v1603 = vadd.f32 %v1514, %v1602
    %v1604 = vpop.f32.mrb[0].mxu0
    %1605 = vmatprep.mubr.f32.mxu0 0.0
    %1606 = vmatmul.mubr.f32.gmra.mrb[0].mxu0 %v1527
    %v1607 = vpop.f32.mrb[0].mxu0
    %v1608 = vadd.f32 %v1514, %v1607
    %v1609 = vpop.f32.mrb[0].mxu0
    %1610 = vmatprep.mubr.f32.mxu0 0.0
    %1611 = vmatmul.mubr.f32.gmra.mrb[0].mxu0 %v1529
    %v1612 = vpop.f32.mrb[0].mxu0
    %v1613 = vadd.f32 %v1514, %v1612
    %v1614 = vpop.f32.mrb[0].mxu0
    %1615 = vdwg.mxu0
    %s1616 = scalar_lea.vmem [#allocation20], 8
    %v1617 = vld [vmem:[%s1616] sm:$0xff]
    %v1618 = vld [vmem:[#allocation22 + $0x1] sm:$0x1]
    %v1619 = vlaneseq
    %v1620 = vshrl.u32 %v1619, 7
    %v1621 = vsub.s32 0, %v1620
    %v1622 = vrot.slane %v1618, %v1621
    %1623 = vmatprep.subr.mxu0 0.0
    %1624 = vmatpush1.msra.mxu0 %v1617
    %1625 = vmatprep.subr.mxu0 0.0
    %1626 = vmatpush1.msra.mxu0 0.0
    %1627 = vmatprep.subr.mxu0 0.0
    %1628 = vmatpush1.msra.mxu0 0.0
    %1629 = vmatprep.subr.mxu0 0.0
    %1630 = vmatpush1.msra.mxu0 0.0
    %1631 = vmatprep.subr.mxu0 0.0
    %1632 = vmatpush1.msra.mxu0 0.0
    %1633 = vmatprep.subr.mxu0 0.0
    %1634 = vmatpush1.msra.mxu0 0.0
    %1635 = vmatprep.subr.mxu0 0.0
    %1636 = vmatpush1.msra.mxu0 0.0
    %1637 = vmatprep.subr.mxu0 0.0
    %1638 = vmatpush1.msra.mxu0 0.0
    %1639 = vmatprep.subr.mxu0 0.0
    %1640 = vmatpush1.msra.mxu0 0.0
    %1641 = vmatprep.subr.mxu0 0.0
    %1642 = vmatpush1.msra.mxu0 0.0
    %1643 = vmatprep.subr.mxu0 0.0
    %1644 = vmatpush1.msra.mxu0 0.0
    %1645 = vmatprep.subr.mxu0 0.0
    %1646 = vmatpush1.msra.mxu0 0.0
    %1647 = vmatprep.subr.mxu0 0.0
    %1648 = vmatpush1.msra.mxu0 0.0
    %1649 = vmatprep.subr.mxu0 0.0
    %1650 = vmatpush1.msra.mxu0 0.0
    %1651 = vmatprep.subr.mxu0 0.0
    %1652 = vmatpush1.msra.mxu0 0.0
    %1653 = vmatprep.subr.mxu0 0.0
    %1654 = vmatpush1.msra.mxu0 0.0
    %1655 = vmatprep.subr.mxu0 0.0
    %1656 = vmatpush1.msra.mxu0 0.0
    %1657 = vmatprep.subr.mxu0 0.0
    %1658 = vmatpush1.msra.mxu0 0.0
    %1659 = vmatprep.subr.mxu0 0.0
    %1660 = vmatpush1.msra.mxu0 0.0
    %1661 = vmatprep.subr.mxu0 0.0
    %1662 = vmatpush1.msra.mxu0 0.0
    %1663 = vmatprep.subr.mxu0 0.0
    %1664 = vmatpush1.msra.mxu0 0.0
    %1665 = vmatprep.subr.mxu0 0.0
    %1666 = vmatpush1.msra.mxu0 0.0
    %1667 = vmatprep.subr.mxu0 0.0
    %1668 = vmatpush1.msra.mxu0 0.0
    %1669 = vmatprep.subr.mxu0 0.0
    %1670 = vmatpush1.msra.mxu0 0.0
    %1671 = vmatprep.subr.mxu0 0.0
    %1672 = vmatpush1.msra.mxu0 0.0
    %1673 = vmatprep.subr.mxu0 0.0
    %1674 = vmatpush1.msra.mxu0 0.0
    %1675 = vmatprep.subr.mxu0 0.0
    %1676 = vmatpush1.msra.mxu0 0.0
    %1677 = vmatprep.subr.mxu0 0.0
    %1678 = vmatpush1.msra.mxu0 0.0
    %1679 = vmatprep.subr.mxu0 0.0
    %1680 = vmatpush1.msra.mxu0 0.0
    %1681 = vmatprep.subr.mxu0 0.0
    %1682 = vmatpush1.msra.mxu0 0.0
    %1683 = vmatprep.subr.mxu0 0.0
    %1684 = vmatpush1.msra.mxu0 0.0
    %1685 = vmatprep.subr.mxu0 0.0
    %1686 = vmatpush1.msra.mxu0 0.0
    %1687 = vmatprep.mubr.f32.mxu0 0.0
    %1688 = vmatmul.mubr.f32.gmra.mrb[0].mxu0 %v1523
    %v1689 = vpop.f32.mrb[0].mxu0
    %v1690 = vadd.f32 %v1622, %v1689
    %v1691 = vpop.f32.mrb[0].mxu0
    %1692 = vmatprep.mubr.f32.mxu0 0.0
    %1693 = vmatmul.mubr.f32.gmra.mrb[0].mxu0 %v1525
    %v1694 = vpop.f32.mrb[0].mxu0
    %v1695 = vadd.f32 %v1622, %v1694
    %v1696 = vpop.f32.mrb[0].mxu0
    %1697 = vmatprep.mubr.f32.mxu0 0.0
    %1698 = vmatmul.mubr.f32.gmra.mrb[0].mxu0 %v1527
    %v1699 = vpop.f32.mrb[0].mxu0
    %v1700 = vadd.f32 %v1622, %v1699
    %v1701 = vpop.f32.mrb[0].mxu0
    %1702 = vmatprep.mubr.f32.mxu0 0.0
    %1703 = vmatmul.mubr.f32.gmra.mrb[0].mxu0 %v1529
    %v1704 = vpop.f32.mrb[0].mxu0
    %v1705 = vadd.f32 %v1622, %v1704
    %v1706 = vpop.f32.mrb[0].mxu0
    %1707 = vdwg.mxu0
    %vm1708 = vcmp.gt.f32.partialorder %v1690, 0.0
    %vm1709 = vcmp.gt.f32.partialorder %v1695, 0.0
    %vm1710 = vcmp.gt.f32.partialorder %v1700, 0.0
    %vm1711 = vcmp.gt.f32.partialorder %v1705, 0.0
    %v1712 = vmul.f32 %v1690, 1.442695
    %v1713 = vpow.pop %v1712
    %v1714 = vmul.f32 %v1695, 1.442695
    %v1715 = vpow.pop %v1714
    %v1716 = vmul.f32 %v1700, 1.442695
    %v1717 = vpow.pop %v1716
    %v1718 = vmul.f32 %v1705, 1.442695
    %v1719 = vpow.pop %v1718
    %v1720 = vsub.f32 %v1713, 1.0
    %v1721 = vsub.f32 %v1715, 1.0
    %v1722 = vsub.f32 %v1717, 1.0
    %v1723 = vsub.f32 %v1719, 1.0
    %v1724 = vsel %vm1708, %v1690, %v1720
    %v1725 = vsel %vm1709, %v1695, %v1721
    %v1726 = vsel %vm1710, %v1700, %v1722
    %v1727 = vsel %vm1711, %v1705, %v1723
    %s1728 = scalar_lea.vmem %s17, 32
    %v1729 = vld [vmem:[%s1728] sm:$0xff]
    %v1730 = vld [vmem:[%s1728 + $0x8] sm:$0xff]
    %v1731 = vld [vmem:[%s1728 + $0x10] sm:$0xff]
    %v1732 = vld [vmem:[%s1728 + $0x18] sm:$0xff]
    %v1733 = vld [vmem:[%s18 + $0x1] sm:$0x1]
    %v1734 = vlaneseq
    %v1735 = vshrl.u32 %v1734, 7
    %v1736 = vsub.s32 0, %v1735
    %v1737 = vrot.slane %v1733, %v1736
    %v1739 = vsel %vm283, %v1724, 0
    %v1742 = vsel %vm283, %v1725, 0
    %v1745 = vsel %vm283, %v1726, 0
    %v1748 = vsel %vm283, %v1727, 0
    %1750 = vmatprep.subr.mxu0 0.0
    %1751 = vmatpush1.msra.mxu0 %v1729
    %1752 = vmatprep.subr.mxu0 0.0
    %1753 = vmatpush1.msra.mxu0 %v1730
    %1754 = vmatprep.subr.mxu0 0.0
    %1755 = vmatpush1.msra.mxu0 %v1731
    %1756 = vmatprep.subr.mxu0 0.0
    %1757 = vmatpush1.msra.mxu0 %v1732
    %1758 = vmatprep.subr.mxu0 0.0
    %1759 = vmatpush1.msra.mxu0 0.0
    %1760 = vmatprep.subr.mxu0 0.0
    %1761 = vmatpush1.msra.mxu0 0.0
    %1762 = vmatprep.subr.mxu0 0.0
    %1763 = vmatpush1.msra.mxu0 0.0
    %1764 = vmatprep.subr.mxu0 0.0
    %1765 = vmatpush1.msra.mxu0 0.0
    %1766 = vmatprep.subr.mxu0 0.0
    %1767 = vmatpush1.msra.mxu0 0.0
    %1768 = vmatprep.subr.mxu0 0.0
    %1769 = vmatpush1.msra.mxu0 0.0
    %1770 = vmatprep.subr.mxu0 0.0
    %1771 = vmatpush1.msra.mxu0 0.0
    %1772 = vmatprep.subr.mxu0 0.0
    %1773 = vmatpush1.msra.mxu0 0.0
    %1774 = vmatprep.subr.mxu0 0.0
    %1775 = vmatpush1.msra.mxu0 0.0
    %1776 = vmatprep.subr.mxu0 0.0
    %1777 = vmatpush1.msra.mxu0 0.0
    %1778 = vmatprep.subr.mxu0 0.0
    %1779 = vmatpush1.msra.mxu0 0.0
    %1780 = vmatprep.subr.mxu0 0.0
    %1781 = vmatpush1.msra.mxu0 0.0
    %1782 = vmatprep.subr.mxu0 0.0
    %1783 = vmatpush1.msra.mxu0 0.0
    %1784 = vmatprep.subr.mxu0 0.0
    %1785 = vmatpush1.msra.mxu0 0.0
    %1786 = vmatprep.subr.mxu0 0.0
    %1787 = vmatpush1.msra.mxu0 0.0
    %1788 = vmatprep.subr.mxu0 0.0
    %1789 = vmatpush1.msra.mxu0 0.0
    %1790 = vmatprep.subr.mxu0 0.0
    %1791 = vmatpush1.msra.mxu0 0.0
    %1792 = vmatprep.subr.mxu0 0.0
    %1793 = vmatpush1.msra.mxu0 0.0
    %1794 = vmatprep.subr.mxu0 0.0
    %1795 = vmatpush1.msra.mxu0 0.0
    %1796 = vmatprep.subr.mxu0 0.0
    %1797 = vmatpush1.msra.mxu0 0.0
    %1798 = vmatprep.subr.mxu0 0.0
    %1799 = vmatpush1.msra.mxu0 0.0
    %1800 = vmatprep.subr.mxu0 0.0
    %1801 = vmatpush1.msra.mxu0 0.0
    %1802 = vmatprep.subr.mxu0 0.0
    %1803 = vmatpush1.msra.mxu0 0.0
    %1804 = vmatprep.subr.mxu0 0.0
    %1805 = vmatpush1.msra.mxu0 0.0
    %1806 = vmatprep.subr.mxu0 0.0
    %1807 = vmatpush1.msra.mxu0 0.0
    %1808 = vmatprep.subr.mxu0 0.0
    %1809 = vmatpush1.msra.mxu0 0.0
    %1810 = vmatprep.subr.mxu0 0.0
    %1811 = vmatpush1.msra.mxu0 0.0
    %1812 = vmatprep.subr.mxu0 0.0
    %1813 = vmatpush1.msra.mxu0 0.0
    %1814 = vmatprep.mubr.f32.mxu0 0.0
    %1815 = vmatmul.mubr.f32.gmra.mrb[0].mxu0 %v1739
    %v1816 = vpop.f32.mrb[0].mxu0
    %v1817 = vadd.f32 %v1737, %v1816
    %v1818 = vpop.f32.mrb[0].mxu0
    %1819 = vmatprep.mubr.f32.mxu0 0.0
    %1820 = vmatmul.mubr.f32.gmra.mrb[0].mxu0 %v1742
    %v1821 = vpop.f32.mrb[0].mxu0
    %v1822 = vadd.f32 %v1737, %v1821
    %v1823 = vpop.f32.mrb[0].mxu0
    %1824 = vmatprep.mubr.f32.mxu0 0.0
    %1825 = vmatmul.mubr.f32.gmra.mrb[0].mxu0 %v1745
    %v1826 = vpop.f32.mrb[0].mxu0
    %v1827 = vadd.f32 %v1737, %v1826
    %v1828 = vpop.f32.mrb[0].mxu0
    %1829 = vmatprep.mubr.f32.mxu0 0.0
    %1830 = vmatmul.mubr.f32.gmra.mrb[0].mxu0 %v1748
    %v1831 = vpop.f32.mrb[0].mxu0
    %v1832 = vadd.f32 %v1737, %v1831
    %v1833 = vpop.f32.mrb[0].mxu0
    %1834 = vdwg.mxu0
    %s1835 = scalar_lea.vmem [#allocation25], 32
    %v1836 = vld [vmem:[%s1835] sm:$0xff]
    %v1837 = vld [vmem:[%s1835 + $0x8] sm:$0xff]
    %v1838 = vld [vmem:[%s1835 + $0x10] sm:$0xff]
    %v1839 = vld [vmem:[%s1835 + $0x18] sm:$0xff]
    %v1840 = vld [vmem:[%s22 + $0x1] sm:$0x1]
    %v1841 = vlaneseq
    %v1842 = vshrl.u32 %v1841, 7
    %v1843 = vsub.s32 0, %v1842
    %v1844 = vrot.slane %v1840, %v1843
    %v1846 = vsel %vm283, %v1817, 0
    %v1849 = vsel %vm283, %v1822, 0
    %v1852 = vsel %vm283, %v1827, 0
    %v1855 = vsel %vm283, %v1832, 0
    %1857 = vmatprep.subr.mxu0 0.0
    %1858 = vmatpush1.msra.mxu0 %v1836
    %1859 = vmatprep.subr.mxu0 0.0
    %1860 = vmatpush1.msra.mxu0 %v1837
    %1861 = vmatprep.subr.mxu0 0.0
    %1862 = vmatpush1.msra.mxu0 %v1838
    %1863 = vmatprep.subr.mxu0 0.0
    %1864 = vmatpush1.msra.mxu0 %v1839
    %1865 = vmatprep.subr.mxu0 0.0
    %1866 = vmatpush1.msra.mxu0 0.0
    %1867 = vmatprep.subr.mxu0 0.0
    %1868 = vmatpush1.msra.mxu0 0.0
    %1869 = vmatprep.subr.mxu0 0.0
    %1870 = vmatpush1.msra.mxu0 0.0
    %1871 = vmatprep.subr.mxu0 0.0
    %1872 = vmatpush1.msra.mxu0 0.0
    %1873 = vmatprep.subr.mxu0 0.0
    %1874 = vmatpush1.msra.mxu0 0.0
    %1875 = vmatprep.subr.mxu0 0.0
    %1876 = vmatpush1.msra.mxu0 0.0
    %1877 = vmatprep.subr.mxu0 0.0
    %1878 = vmatpush1.msra.mxu0 0.0
    %1879 = vmatprep.subr.mxu0 0.0
    %1880 = vmatpush1.msra.mxu0 0.0
    %1881 = vmatprep.subr.mxu0 0.0
    %1882 = vmatpush1.msra.mxu0 0.0
    %1883 = vmatprep.subr.mxu0 0.0
    %1884 = vmatpush1.msra.mxu0 0.0
    %1885 = vmatprep.subr.mxu0 0.0
    %1886 = vmatpush1.msra.mxu0 0.0
    %1887 = vmatprep.subr.mxu0 0.0
    %1888 = vmatpush1.msra.mxu0 0.0
    %1889 = vmatprep.subr.mxu0 0.0
    %1890 = vmatpush1.msra.mxu0 0.0
    %1891 = vmatprep.subr.mxu0 0.0
    %1892 = vmatpush1.msra.mxu0 0.0
    %1893 = vmatprep.subr.mxu0 0.0
    %1894 = vmatpush1.msra.mxu0 0.0
    %1895 = vmatprep.subr.mxu0 0.0
    %1896 = vmatpush1.msra.mxu0 0.0
    %1897 = vmatprep.subr.mxu0 0.0
    %1898 = vmatpush1.msra.mxu0 0.0
    %1899 = vmatprep.subr.mxu0 0.0
    %1900 = vmatpush1.msra.mxu0 0.0
    %1901 = vmatprep.subr.mxu0 0.0
    %1902 = vmatpush1.msra.mxu0 0.0
    %1903 = vmatprep.subr.mxu0 0.0
    %1904 = vmatpush1.msra.mxu0 0.0
    %1905 = vmatprep.subr.mxu0 0.0
    %1906 = vmatpush1.msra.mxu0 0.0
    %1907 = vmatprep.subr.mxu0 0.0
    %1908 = vmatpush1.msra.mxu0 0.0
    %1909 = vmatprep.subr.mxu0 0.0
    %1910 = vmatpush1.msra.mxu0 0.0
    %1911 = vmatprep.subr.mxu0 0.0
    %1912 = vmatpush1.msra.mxu0 0.0
    %1913 = vmatprep.subr.mxu0 0.0
    %1914 = vmatpush1.msra.mxu0 0.0
    %1915 = vmatprep.subr.mxu0 0.0
    %1916 = vmatpush1.msra.mxu0 0.0
    %1917 = vmatprep.subr.mxu0 0.0
    %1918 = vmatpush1.msra.mxu0 0.0
    %1919 = vmatprep.subr.mxu0 0.0
    %1920 = vmatpush1.msra.mxu0 0.0
    %1921 = vmatprep.mubr.f32.mxu0 0.0
    %1922 = vmatmul.mubr.f32.gmra.mrb[0].mxu0 %v1846
    %v1923 = vpop.f32.mrb[0].mxu0
    %v1924 = vadd.f32 %v1844, %v1923
    %v1925 = vpop.f32.mrb[0].mxu0
    %1926 = vmatprep.mubr.f32.mxu0 0.0
    %1927 = vmatmul.mubr.f32.gmra.mrb[0].mxu0 %v1849
    %v1928 = vpop.f32.mrb[0].mxu0
    %v1929 = vadd.f32 %v1844, %v1928
    %v1930 = vpop.f32.mrb[0].mxu0
    %1931 = vmatprep.mubr.f32.mxu0 0.0
    %1932 = vmatmul.mubr.f32.gmra.mrb[0].mxu0 %v1852
    %v1933 = vpop.f32.mrb[0].mxu0
    %v1934 = vadd.f32 %v1844, %v1933
    %v1935 = vpop.f32.mrb[0].mxu0
    %1936 = vmatprep.mubr.f32.mxu0 0.0
    %1937 = vmatmul.mubr.f32.gmra.mrb[0].mxu0 %v1855
    %v1938 = vpop.f32.mrb[0].mxu0
    %v1939 = vadd.f32 %v1844, %v1938
    %v1940 = vpop.f32.mrb[0].mxu0
    %1941 = vdwg.mxu0
    %v1942 = vsub.f32 0.0, %v1924
    %v1943 = vsub.f32 0.0, %v1929
    %v1944 = vsub.f32 0.0, %v1934
    %v1945 = vsub.f32 0.0, %v1939
    %v1946 = vmul.f32 %v1942, 1.442695
    %v1947 = vpow.pop %v1946
    %v1948 = vmul.f32 %v1943, 1.442695
    %v1949 = vpow.pop %v1948
    %v1950 = vmul.f32 %v1944, 1.442695
    %v1951 = vpow.pop %v1950
    %v1952 = vmul.f32 %v1945, 1.442695
    %v1953 = vpow.pop %v1952
    %v1954 = vadd.f32 %v1947, 1.0
    %v1955 = vadd.f32 %v1949, 1.0
    %v1956 = vadd.f32 %v1951, 1.0
    %v1957 = vadd.f32 %v1953, 1.0
    %v1958 = vrcp.pop %v1954
    %v1959 = vmul.f32 1.0, %v1958
    %v1960 = vrcp.pop %v1955
    %v1961 = vmul.f32 1.0, %v1960
    %v1962 = vrcp.pop %v1956
    %v1963 = vmul.f32 1.0, %v1962
    %v1964 = vrcp.pop %v1957
    %v1965 = vmul.f32 1.0, %v1964
    %s1966 = scalar_lea.vmem [#allocation23], 32
    %v1967 = vld [vmem:[%s1966] sm:$0xff]
    %v1968 = vld [vmem:[%s1966 + $0x8] sm:$0xff]
    %v1969 = vld [vmem:[%s1966 + $0x10] sm:$0xff]
    %v1970 = vld [vmem:[%s1966 + $0x18] sm:$0xff]
    %v1971 = vld [vmem:[%s20 + $0x1] sm:$0x1]
    %v1972 = vlaneseq
    %v1973 = vshrl.u32 %v1972, 7
    %v1974 = vsub.s32 0, %v1973
    %v1975 = vrot.slane %v1971, %v1974
    %1976 = vmatprep.subr.mxu0 0.0
    %1977 = vmatpush1.msra.mxu0 %v1967
    %1978 = vmatprep.subr.mxu0 0.0
    %1979 = vmatpush1.msra.mxu0 %v1968
    %1980 = vmatprep.subr.mxu0 0.0
    %1981 = vmatpush1.msra.mxu0 %v1969
    %1982 = vmatprep.subr.mxu0 0.0
    %1983 = vmatpush1.msra.mxu0 %v1970
    %1984 = vmatprep.subr.mxu0 0.0
    %1985 = vmatpush1.msra.mxu0 0.0
    %1986 = vmatprep.subr.mxu0 0.0
    %1987 = vmatpush1.msra.mxu0 0.0
    %1988 = vmatprep.subr.mxu0 0.0
    %1989 = vmatpush1.msra.mxu0 0.0
    %1990 = vmatprep.subr.mxu0 0.0
    %1991 = vmatpush1.msra.mxu0 0.0
    %1992 = vmatprep.subr.mxu0 0.0
    %1993 = vmatpush1.msra.mxu0 0.0
    %1994 = vmatprep.subr.mxu0 0.0
    %1995 = vmatpush1.msra.mxu0 0.0
    %1996 = vmatprep.subr.mxu0 0.0
    %1997 = vmatpush1.msra.mxu0 0.0
    %1998 = vmatprep.subr.mxu0 0.0
    %1999 = vmatpush1.msra.mxu0 0.0
    %2000 = vmatprep.subr.mxu0 0.0
    %2001 = vmatpush1.msra.mxu0 0.0
    %2002 = vmatprep.subr.mxu0 0.0
    %2003 = vmatpush1.msra.mxu0 0.0
    %2004 = vmatprep.subr.mxu0 0.0
    %2005 = vmatpush1.msra.mxu0 0.0
    %2006 = vmatprep.subr.mxu0 0.0
    %2007 = vmatpush1.msra.mxu0 0.0
    %2008 = vmatprep.subr.mxu0 0.0
    %2009 = vmatpush1.msra.mxu0 0.0
    %2010 = vmatprep.subr.mxu0 0.0
    %2011 = vmatpush1.msra.mxu0 0.0
    %2012 = vmatprep.subr.mxu0 0.0
    %2013 = vmatpush1.msra.mxu0 0.0
    %2014 = vmatprep.subr.mxu0 0.0
    %2015 = vmatpush1.msra.mxu0 0.0
    %2016 = vmatprep.subr.mxu0 0.0
    %2017 = vmatpush1.msra.mxu0 0.0
    %2018 = vmatprep.subr.mxu0 0.0
    %2019 = vmatpush1.msra.mxu0 0.0
    %2020 = vmatprep.subr.mxu0 0.0
    %2021 = vmatpush1.msra.mxu0 0.0
    %2022 = vmatprep.subr.mxu0 0.0
    %2023 = vmatpush1.msra.mxu0 0.0
    %2024 = vmatprep.subr.mxu0 0.0
    %2025 = vmatpush1.msra.mxu0 0.0
    %2026 = vmatprep.subr.mxu0 0.0
    %2027 = vmatpush1.msra.mxu0 0.0
    %2028 = vmatprep.subr.mxu0 0.0
    %2029 = vmatpush1.msra.mxu0 0.0
    %2030 = vmatprep.subr.mxu0 0.0
    %2031 = vmatpush1.msra.mxu0 0.0
    %2032 = vmatprep.subr.mxu0 0.0
    %2033 = vmatpush1.msra.mxu0 0.0
    %2034 = vmatprep.subr.mxu0 0.0
    %2035 = vmatpush1.msra.mxu0 0.0
    %2036 = vmatprep.subr.mxu0 0.0
    %2037 = vmatpush1.msra.mxu0 0.0
    %2038 = vmatprep.subr.mxu0 0.0
    %2039 = vmatpush1.msra.mxu0 0.0
    %2040 = vmatprep.mubr.f32.mxu0 0.0
    %2041 = vmatmul.mubr.f32.gmra.mrb[0].mxu0 %v1846
    %v2042 = vpop.f32.mrb[0].mxu0
    %v2043 = vadd.f32 %v1975, %v2042
    %v2044 = vpop.f32.mrb[0].mxu0
    %2045 = vmatprep.mubr.f32.mxu0 0.0
    %2046 = vmatmul.mubr.f32.gmra.mrb[0].mxu0 %v1849
    %v2047 = vpop.f32.mrb[0].mxu0
    %v2048 = vadd.f32 %v1975, %v2047
    %v2049 = vpop.f32.mrb[0].mxu0
    %2050 = vmatprep.mubr.f32.mxu0 0.0
    %2051 = vmatmul.mubr.f32.gmra.mrb[0].mxu0 %v1852
    %v2052 = vpop.f32.mrb[0].mxu0
    %v2053 = vadd.f32 %v1975, %v2052
    %v2054 = vpop.f32.mrb[0].mxu0
    %2055 = vmatprep.mubr.f32.mxu0 0.0
    %2056 = vmatmul.mubr.f32.gmra.mrb[0].mxu0 %v1855
    %v2057 = vpop.f32.mrb[0].mxu0
    %v2058 = vadd.f32 %v1975, %v2057
    %v2059 = vpop.f32.mrb[0].mxu0
    %2060 = vdwg.mxu0
    %v2061 = vmul.f32 %v1959, %v2043
    %v2062 = vmul.f32 %v1961, %v2048
    %v2063 = vmul.f32 %v1963, %v2053
    %v2064 = vmul.f32 %v1965, %v2058
    %v2065 = vadd.f32 %v2061, %v1598
    %v2066 = vadd.f32 %v2062, %v1603
    %v2067 = vadd.f32 %v2063, %v1608
    %v2068 = vadd.f32 %v2064, %v1613
    %v2069 = vld [vmem:[%s23 + $0x1] sm:$0x1]
    %v2070 = vlaneseq
    %v2071 = vshrl.u32 %v2070, 7
    %v2072 = vsub.s32 0, %v2071
    %v2073 = vrot.slane %v2069, %v2072
    %v2074 = vmul.f32 %v2065, %v2073
    %v2075 = vmul.f32 %v2066, %v2073
    %v2076 = vmul.f32 %v2067, %v2073
    %v2077 = vmul.f32 %v2068, %v2073
    %v2078 = vld [vmem:[%s24 + $0x1] sm:$0x1]
    %v2079 = vlaneseq
    %v2080 = vshrl.u32 %v2079, 7
    %v2081 = vsub.s32 0, %v2080
    %v2082 = vrot.slane %v2078, %v2081
    %v2083 = vadd.f32 %v2074, %v2082
    %v2084 = vadd.f32 %v2075, %v2082
    %v2085 = vadd.f32 %v2076, %v2082
    %v2086 = vadd.f32 %v2077, %v2082
    %2087 = vset.pattern.permute.xlu0 1
    %2088 = vperm.xlu0 %2087, %v905
    %v2089 = vpop.permute.xlu0 %2088
    %2091 = vset.pattern.permute.xlu0 1
    %2092 = vperm.xlu0 %2091, %v906
    %v2093 = vpop.permute.xlu0 %2092
    %2095 = vset.pattern.permute.xlu0 1
    %2096 = vperm.xlu0 %2095, %v907
    %v2097 = vpop.permute.xlu0 %2096
    %2099 = vset.pattern.permute.xlu0 1
    %2100 = vperm.xlu0 %2099, %v908
    %v2101 = vpop.permute.xlu0 %2100
    %v2103 = vmul.f32 %v2083, %v2089
    %v2104 = vmul.f32 %v2084, %v2093
    %v2105 = vmul.f32 %v2085, %v2097
    %v2106 = vmul.f32 %v2086, %v2101
    %v2107 = vadd.f32 %v1504, %v2103
    %v2108 = vadd.f32 %v1505, %v2104
    %v2109 = vadd.f32 %v1506, %v2105
    %v2110 = vadd.f32 %v1507, %v2106
    %s2111 = scalar_lea.vmem [#allocation17], 16
    %v2112 = vld [vmem:[%s2111] sm:$0xff]
    %v2113 = vld [vmem:[#allocation19 + $0x2] sm:$0x1]
    %v2114 = vlaneseq
    %v2115 = vshrl.u32 %v2114, 7
    %v2116 = vsub.s32 0, %v2115
    %v2117 = vrot.slane %v2113, %v2116
    %2118 = vrot.lane.b32.xlu0 %v268, 112
    %v2119 = vpop.permute.xlu0 %2118
    %2120 = vrot.lane.b32.xlu0 %v269, 112
    %v2121 = vpop.permute.xlu0 %2120
    %2122 = vrot.lane.b32.xlu0 %v270, 112
    %v2123 = vpop.permute.xlu0 %2122
    %2124 = vrot.lane.b32.xlu0 %v271, 112
    %v2125 = vpop.permute.xlu0 %2124
    %v2126 = vsel %vm919, %v2119, 0
    %v2128 = vsel %vm919, %v2121, 0
    %v2130 = vsel %vm919, %v2123, 0
    %v2132 = vsel %vm919, %v2125, 0
    %2134 = vmatprep.subr.mxu0 0.0
    %2135 = vmatpush1.msra.mxu0 %v2112
    %2136 = vmatprep.subr.mxu0 0.0
    %2137 = vmatpush1.msra.mxu0 0.0
    %2138 = vmatprep.subr.mxu0 0.0
    %2139 = vmatpush1.msra.mxu0 0.0
    %2140 = vmatprep.subr.mxu0 0.0
    %2141 = vmatpush1.msra.mxu0 0.0
    %2142 = vmatprep.subr.mxu0 0.0
    %2143 = vmatpush1.msra.mxu0 0.0
    %2144 = vmatprep.subr.mxu0 0.0
    %2145 = vmatpush1.msra.mxu0 0.0
    %2146 = vmatprep.subr.mxu0 0.0
    %2147 = vmatpush1.msra.mxu0 0.0
    %2148 = vmatprep.subr.mxu0 0.0
    %2149 = vmatpush1.msra.mxu0 0.0
    %2150 = vmatprep.subr.mxu0 0.0
    %2151 = vmatpush1.msra.mxu0 0.0
    %2152 = vmatprep.subr.mxu0 0.0
    %2153 = vmatpush1.msra.mxu0 0.0
    %2154 = vmatprep.subr.mxu0 0.0
    %2155 = vmatpush1.msra.mxu0 0.0
    %2156 = vmatprep.subr.mxu0 0.0
    %2157 = vmatpush1.msra.mxu0 0.0
    %2158 = vmatprep.subr.mxu0 0.0
    %2159 = vmatpush1.msra.mxu0 0.0
    %2160 = vmatprep.subr.mxu0 0.0
    %2161 = vmatpush1.msra.mxu0 0.0
    %2162 = vmatprep.subr.mxu0 0.0
    %2163 = vmatpush1.msra.mxu0 0.0
    %2164 = vmatprep.subr.mxu0 0.0
    %2165 = vmatpush1.msra.mxu0 0.0
    %2166 = vmatprep.subr.mxu0 0.0
    %2167 = vmatpush1.msra.mxu0 0.0
    %2168 = vmatprep.subr.mxu0 0.0
    %2169 = vmatpush1.msra.mxu0 0.0
    %2170 = vmatprep.subr.mxu0 0.0
    %2171 = vmatpush1.msra.mxu0 0.0
    %2172 = vmatprep.subr.mxu0 0.0
    %2173 = vmatpush1.msra.mxu0 0.0
    %2174 = vmatprep.subr.mxu0 0.0
    %2175 = vmatpush1.msra.mxu0 0.0
    %2176 = vmatprep.subr.mxu0 0.0
    %2177 = vmatpush1.msra.mxu0 0.0
    %2178 = vmatprep.subr.mxu0 0.0
    %2179 = vmatpush1.msra.mxu0 0.0
    %2180 = vmatprep.subr.mxu0 0.0
    %2181 = vmatpush1.msra.mxu0 0.0
    %2182 = vmatprep.subr.mxu0 0.0
    %2183 = vmatpush1.msra.mxu0 0.0
    %2184 = vmatprep.subr.mxu0 0.0
    %2185 = vmatpush1.msra.mxu0 0.0
    %2186 = vmatprep.subr.mxu0 0.0
    %2187 = vmatpush1.msra.mxu0 0.0
    %2188 = vmatprep.subr.mxu0 0.0
    %2189 = vmatpush1.msra.mxu0 0.0
    %2190 = vmatprep.subr.mxu0 0.0
    %2191 = vmatpush1.msra.mxu0 0.0
    %2192 = vmatprep.subr.mxu0 0.0
    %2193 = vmatpush1.msra.mxu0 0.0
    %2194 = vmatprep.subr.mxu0 0.0
    %2195 = vmatpush1.msra.mxu0 0.0
    %2196 = vmatprep.subr.mxu0 0.0
    %2197 = vmatpush1.msra.mxu0 0.0
    %2198 = vmatprep.mubr.f32.mxu0 0.0
    %2199 = vmatmul.mubr.f32.gmra.mrb[0].mxu0 %v2126
    %v2200 = vpop.f32.mrb[0].mxu0
    %v2201 = vadd.f32 %v2117, %v2200
    %v2202 = vpop.f32.mrb[0].mxu0
    %2203 = vmatprep.mubr.f32.mxu0 0.0
    %2204 = vmatmul.mubr.f32.gmra.mrb[0].mxu0 %v2128
    %v2205 = vpop.f32.mrb[0].mxu0
    %v2206 = vadd.f32 %v2117, %v2205
    %v2207 = vpop.f32.mrb[0].mxu0
    %2208 = vmatprep.mubr.f32.mxu0 0.0
    %2209 = vmatmul.mubr.f32.gmra.mrb[0].mxu0 %v2130
    %v2210 = vpop.f32.mrb[0].mxu0
    %v2211 = vadd.f32 %v2117, %v2210
    %v2212 = vpop.f32.mrb[0].mxu0
    %2213 = vmatprep.mubr.f32.mxu0 0.0
    %2214 = vmatmul.mubr.f32.gmra.mrb[0].mxu0 %v2132
    %v2215 = vpop.f32.mrb[0].mxu0
    %v2216 = vadd.f32 %v2117, %v2215
    %v2217 = vpop.f32.mrb[0].mxu0
    %2218 = vdwg.mxu0
    %s2219 = scalar_lea.vmem [#allocation20], 16
    %v2220 = vld [vmem:[%s2219] sm:$0xff]
    %v2221 = vld [vmem:[#allocation22 + $0x2] sm:$0x1]
    %v2222 = vlaneseq
    %v2223 = vshrl.u32 %v2222, 7
    %v2224 = vsub.s32 0, %v2223
    %v2225 = vrot.slane %v2221, %v2224
    %2226 = vmatprep.subr.mxu0 0.0
    %2227 = vmatpush1.msra.mxu0 %v2220
    %2228 = vmatprep.subr.mxu0 0.0
    %2229 = vmatpush1.msra.mxu0 0.0
    %2230 = vmatprep.subr.mxu0 0.0
    %2231 = vmatpush1.msra.mxu0 0.0
    %2232 = vmatprep.subr.mxu0 0.0
    %2233 = vmatpush1.msra.mxu0 0.0
    %2234 = vmatprep.subr.mxu0 0.0
    %2235 = vmatpush1.msra.mxu0 0.0
    %2236 = vmatprep.subr.mxu0 0.0
    %2237 = vmatpush1.msra.mxu0 0.0
    %2238 = vmatprep.subr.mxu0 0.0
    %2239 = vmatpush1.msra.mxu0 0.0
    %2240 = vmatprep.subr.mxu0 0.0
    %2241 = vmatpush1.msra.mxu0 0.0
    %2242 = vmatprep.subr.mxu0 0.0
    %2243 = vmatpush1.msra.mxu0 0.0
    %2244 = vmatprep.subr.mxu0 0.0
    %2245 = vmatpush1.msra.mxu0 0.0
    %2246 = vmatprep.subr.mxu0 0.0
    %2247 = vmatpush1.msra.mxu0 0.0
    %2248 = vmatprep.subr.mxu0 0.0
    %2249 = vmatpush1.msra.mxu0 0.0
    %2250 = vmatprep.subr.mxu0 0.0
    %2251 = vmatpush1.msra.mxu0 0.0
    %2252 = vmatprep.subr.mxu0 0.0
    %2253 = vmatpush1.msra.mxu0 0.0
    %2254 = vmatprep.subr.mxu0 0.0
    %2255 = vmatpush1.msra.mxu0 0.0
    %2256 = vmatprep.subr.mxu0 0.0
    %2257 = vmatpush1.msra.mxu0 0.0
    %2258 = vmatprep.subr.mxu0 0.0
    %2259 = vmatpush1.msra.mxu0 0.0
    %2260 = vmatprep.subr.mxu0 0.0
    %2261 = vmatpush1.msra.mxu0 0.0
    %2262 = vmatprep.subr.mxu0 0.0
    %2263 = vmatpush1.msra.mxu0 0.0
    %2264 = vmatprep.subr.mxu0 0.0
    %2265 = vmatpush1.msra.mxu0 0.0
    %2266 = vmatprep.subr.mxu0 0.0
    %2267 = vmatpush1.msra.mxu0 0.0
    %2268 = vmatprep.subr.mxu0 0.0
    %2269 = vmatpush1.msra.mxu0 0.0
    %2270 = vmatprep.subr.mxu0 0.0
    %2271 = vmatpush1.msra.mxu0 0.0
    %2272 = vmatprep.subr.mxu0 0.0
    %2273 = vmatpush1.msra.mxu0 0.0
    %2274 = vmatprep.subr.mxu0 0.0
    %2275 = vmatpush1.msra.mxu0 0.0
    %2276 = vmatprep.subr.mxu0 0.0
    %2277 = vmatpush1.msra.mxu0 0.0
    %2278 = vmatprep.subr.mxu0 0.0
    %2279 = vmatpush1.msra.mxu0 0.0
    %2280 = vmatprep.subr.mxu0 0.0
    %2281 = vmatpush1.msra.mxu0 0.0
    %2282 = vmatprep.subr.mxu0 0.0
    %2283 = vmatpush1.msra.mxu0 0.0
    %2284 = vmatprep.subr.mxu0 0.0
    %2285 = vmatpush1.msra.mxu0 0.0
    %2286 = vmatprep.subr.mxu0 0.0
    %2287 = vmatpush1.msra.mxu0 0.0
    %2288 = vmatprep.subr.mxu0 0.0
    %2289 = vmatpush1.msra.mxu0 0.0
    %2290 = vmatprep.mubr.f32.mxu0 0.0
    %2291 = vmatmul.mubr.f32.gmra.mrb[0].mxu0 %v2126
    %v2292 = vpop.f32.mrb[0].mxu0
    %v2293 = vadd.f32 %v2225, %v2292
    %v2294 = vpop.f32.mrb[0].mxu0
    %2295 = vmatprep.mubr.f32.mxu0 0.0
    %2296 = vmatmul.mubr.f32.gmra.mrb[0].mxu0 %v2128
    %v2297 = vpop.f32.mrb[0].mxu0
    %v2298 = vadd.f32 %v2225, %v2297
    %v2299 = vpop.f32.mrb[0].mxu0
    %2300 = vmatprep.mubr.f32.mxu0 0.0
    %2301 = vmatmul.mubr.f32.gmra.mrb[0].mxu0 %v2130
    %v2302 = vpop.f32.mrb[0].mxu0
    %v2303 = vadd.f32 %v2225, %v2302
    %v2304 = vpop.f32.mrb[0].mxu0
    %2305 = vmatprep.mubr.f32.mxu0 0.0
    %2306 = vmatmul.mubr.f32.gmra.mrb[0].mxu0 %v2132
    %v2307 = vpop.f32.mrb[0].mxu0
    %v2308 = vadd.f32 %v2225, %v2307
    %v2309 = vpop.f32.mrb[0].mxu0
    %2310 = vdwg.mxu0
    %vm2311 = vcmp.gt.f32.partialorder %v2293, 0.0
    %vm2312 = vcmp.gt.f32.partialorder %v2298, 0.0
    %vm2313 = vcmp.gt.f32.partialorder %v2303, 0.0
    %vm2314 = vcmp.gt.f32.partialorder %v2308, 0.0
    %v2315 = vmul.f32 %v2293, 1.442695
    %v2316 = vpow.pop %v2315
    %v2317 = vmul.f32 %v2298, 1.442695
    %v2318 = vpow.pop %v2317
    %v2319 = vmul.f32 %v2303, 1.442695
    %v2320 = vpow.pop %v2319
    %v2321 = vmul.f32 %v2308, 1.442695
    %v2322 = vpow.pop %v2321
    %v2323 = vsub.f32 %v2316, 1.0
    %v2324 = vsub.f32 %v2318, 1.0
    %v2325 = vsub.f32 %v2320, 1.0
    %v2326 = vsub.f32 %v2322, 1.0
    %v2327 = vsel %vm2311, %v2293, %v2323
    %v2328 = vsel %vm2312, %v2298, %v2324
    %v2329 = vsel %vm2313, %v2303, %v2325
    %v2330 = vsel %vm2314, %v2308, %v2326
    %s2331 = scalar_lea.vmem %s17, 64
    %v2332 = vld [vmem:[%s2331] sm:$0xff]
    %v2333 = vld [vmem:[%s2331 + $0x8] sm:$0xff]
    %v2334 = vld [vmem:[%s2331 + $0x10] sm:$0xff]
    %v2335 = vld [vmem:[%s2331 + $0x18] sm:$0xff]
    %v2336 = vld [vmem:[%s18 + $0x2] sm:$0x1]
    %v2337 = vlaneseq
    %v2338 = vshrl.u32 %v2337, 7
    %v2339 = vsub.s32 0, %v2338
    %v2340 = vrot.slane %v2336, %v2339
    %v2342 = vsel %vm283, %v2327, 0
    %v2345 = vsel %vm283, %v2328, 0
    %v2348 = vsel %vm283, %v2329, 0
    %v2351 = vsel %vm283, %v2330, 0
    %2353 = vmatprep.subr.mxu0 0.0
    %2354 = vmatpush1.msra.mxu0 %v2332
    %2355 = vmatprep.subr.mxu0 0.0
    %2356 = vmatpush1.msra.mxu0 %v2333
    %2357 = vmatprep.subr.mxu0 0.0
    %2358 = vmatpush1.msra.mxu0 %v2334
    %2359 = vmatprep.subr.mxu0 0.0
    %2360 = vmatpush1.msra.mxu0 %v2335
    %2361 = vmatprep.subr.mxu0 0.0
    %2362 = vmatpush1.msra.mxu0 0.0
    %2363 = vmatprep.subr.mxu0 0.0
    %2364 = vmatpush1.msra.mxu0 0.0
    %2365 = vmatprep.subr.mxu0 0.0
    %2366 = vmatpush1.msra.mxu0 0.0
    %2367 = vmatprep.subr.mxu0 0.0
    %2368 = vmatpush1.msra.mxu0 0.0
    %2369 = vmatprep.subr.mxu0 0.0
    %2370 = vmatpush1.msra.mxu0 0.0
    %2371 = vmatprep.subr.mxu0 0.0
    %2372 = vmatpush1.msra.mxu0 0.0
    %2373 = vmatprep.subr.mxu0 0.0
    %2374 = vmatpush1.msra.mxu0 0.0
    %2375 = vmatprep.subr.mxu0 0.0
    %2376 = vmatpush1.msra.mxu0 0.0
    %2377 = vmatprep.subr.mxu0 0.0
    %2378 = vmatpush1.msra.mxu0 0.0
    %2379 = vmatprep.subr.mxu0 0.0
    %2380 = vmatpush1.msra.mxu0 0.0
    %2381 = vmatprep.subr.mxu0 0.0
    %2382 = vmatpush1.msra.mxu0 0.0
    %2383 = vmatprep.subr.mxu0 0.0
    %2384 = vmatpush1.msra.mxu0 0.0
    %2385 = vmatprep.subr.mxu0 0.0
    %2386 = vmatpush1.msra.mxu0 0.0
    %2387 = vmatprep.subr.mxu0 0.0
    %2388 = vmatpush1.msra.mxu0 0.0
    %2389 = vmatprep.subr.mxu0 0.0
    %2390 = vmatpush1.msra.mxu0 0.0
    %2391 = vmatprep.subr.mxu0 0.0
    %2392 = vmatpush1.msra.mxu0 0.0
    %2393 = vmatprep.subr.mxu0 0.0
    %2394 = vmatpush1.msra.mxu0 0.0
    %2395 = vmatprep.subr.mxu0 0.0
    %2396 = vmatpush1.msra.mxu0 0.0
    %2397 = vmatprep.subr.mxu0 0.0
    %2398 = vmatpush1.msra.mxu0 0.0
    %2399 = vmatprep.subr.mxu0 0.0
    %2400 = vmatpush1.msra.mxu0 0.0
    %2401 = vmatprep.subr.mxu0 0.0
    %2402 = vmatpush1.msra.mxu0 0.0
    %2403 = vmatprep.subr.mxu0 0.0
    %2404 = vmatpush1.msra.mxu0 0.0
    %2405 = vmatprep.subr.mxu0 0.0
    %2406 = vmatpush1.msra.mxu0 0.0
    %2407 = vmatprep.subr.mxu0 0.0
    %2408 = vmatpush1.msra.mxu0 0.0
    %2409 = vmatprep.subr.mxu0 0.0
    %2410 = vmatpush1.msra.mxu0 0.0
    %2411 = vmatprep.subr.mxu0 0.0
    %2412 = vmatpush1.msra.mxu0 0.0
    %2413 = vmatprep.subr.mxu0 0.0
    %2414 = vmatpush1.msra.mxu0 0.0
    %2415 = vmatprep.subr.mxu0 0.0
    %2416 = vmatpush1.msra.mxu0 0.0
    %2417 = vmatprep.mubr.f32.mxu0 0.0
    %2418 = vmatmul.mubr.f32.gmra.mrb[0].mxu0 %v2342
    %v2419 = vpop.f32.mrb[0].mxu0
    %v2420 = vadd.f32 %v2340, %v2419
    %v2421 = vpop.f32.mrb[0].mxu0
    %2422 = vmatprep.mubr.f32.mxu0 0.0
    %2423 = vmatmul.mubr.f32.gmra.mrb[0].mxu0 %v2345
    %v2424 = vpop.f32.mrb[0].mxu0
    %v2425 = vadd.f32 %v2340, %v2424
    %v2426 = vpop.f32.mrb[0].mxu0
    %2427 = vmatprep.mubr.f32.mxu0 0.0
    %2428 = vmatmul.mubr.f32.gmra.mrb[0].mxu0 %v2348
    %v2429 = vpop.f32.mrb[0].mxu0
    %v2430 = vadd.f32 %v2340, %v2429
    %v2431 = vpop.f32.mrb[0].mxu0
    %2432 = vmatprep.mubr.f32.mxu0 0.0
    %2433 = vmatmul.mubr.f32.gmra.mrb[0].mxu0 %v2351
    %v2434 = vpop.f32.mrb[0].mxu0
    %v2435 = vadd.f32 %v2340, %v2434
    %v2436 = vpop.f32.mrb[0].mxu0
    %2437 = vdwg.mxu0
    %s2438 = scalar_lea.vmem [#allocation25], 64
    %v2439 = vld [vmem:[%s2438] sm:$0xff]
    %v2440 = vld [vmem:[%s2438 + $0x8] sm:$0xff]
    %v2441 = vld [vmem:[%s2438 + $0x10] sm:$0xff]
    %v2442 = vld [vmem:[%s2438 + $0x18] sm:$0xff]
    %v2443 = vld [vmem:[%s22 + $0x2] sm:$0x1]
    %v2444 = vlaneseq
    %v2445 = vshrl.u32 %v2444, 7
    %v2446 = vsub.s32 0, %v2445
    %v2447 = vrot.slane %v2443, %v2446
    %v2449 = vsel %vm283, %v2420, 0
    %v2452 = vsel %vm283, %v2425, 0
    %v2455 = vsel %vm283, %v2430, 0
    %v2458 = vsel %vm283, %v2435, 0
    %2460 = vmatprep.subr.mxu0 0.0
    %2461 = vmatpush1.msra.mxu0 %v2439
    %2462 = vmatprep.subr.mxu0 0.0
    %2463 = vmatpush1.msra.mxu0 %v2440
    %2464 = vmatprep.subr.mxu0 0.0
    %2465 = vmatpush1.msra.mxu0 %v2441
    %2466 = vmatprep.subr.mxu0 0.0
    %2467 = vmatpush1.msra.mxu0 %v2442
    %2468 = vmatprep.subr.mxu0 0.0
    %2469 = vmatpush1.msra.mxu0 0.0
    %2470 = vmatprep.subr.mxu0 0.0
    %2471 = vmatpush1.msra.mxu0 0.0
    %2472 = vmatprep.subr.mxu0 0.0
    %2473 = vmatpush1.msra.mxu0 0.0
    %2474 = vmatprep.subr.mxu0 0.0
    %2475 = vmatpush1.msra.mxu0 0.0
    %2476 = vmatprep.subr.mxu0 0.0
    %2477 = vmatpush1.msra.mxu0 0.0
    %2478 = vmatprep.subr.mxu0 0.0
    %2479 = vmatpush1.msra.mxu0 0.0
    %2480 = vmatprep.subr.mxu0 0.0
    %2481 = vmatpush1.msra.mxu0 0.0
    %2482 = vmatprep.subr.mxu0 0.0
    %2483 = vmatpush1.msra.mxu0 0.0
    %2484 = vmatprep.subr.mxu0 0.0
    %2485 = vmatpush1.msra.mxu0 0.0
    %2486 = vmatprep.subr.mxu0 0.0
    %2487 = vmatpush1.msra.mxu0 0.0
    %2488 = vmatprep.subr.mxu0 0.0
    %2489 = vmatpush1.msra.mxu0 0.0
    %2490 = vmatprep.subr.mxu0 0.0
    %2491 = vmatpush1.msra.mxu0 0.0
    %2492 = vmatprep.subr.mxu0 0.0
    %2493 = vmatpush1.msra.mxu0 0.0
    %2494 = vmatprep.subr.mxu0 0.0
    %2495 = vmatpush1.msra.mxu0 0.0
    %2496 = vmatprep.subr.mxu0 0.0
    %2497 = vmatpush1.msra.mxu0 0.0
    %2498 = vmatprep.subr.mxu0 0.0
    %2499 = vmatpush1.msra.mxu0 0.0
    %2500 = vmatprep.subr.mxu0 0.0
    %2501 = vmatpush1.msra.mxu0 0.0
    %2502 = vmatprep.subr.mxu0 0.0
    %2503 = vmatpush1.msra.mxu0 0.0
    %2504 = vmatprep.subr.mxu0 0.0
    %2505 = vmatpush1.msra.mxu0 0.0
    %2506 = vmatprep.subr.mxu0 0.0
    %2507 = vmatpush1.msra.mxu0 0.0
    %2508 = vmatprep.subr.mxu0 0.0
    %2509 = vmatpush1.msra.mxu0 0.0
    %2510 = vmatprep.subr.mxu0 0.0
    %2511 = vmatpush1.msra.mxu0 0.0
    %2512 = vmatprep.subr.mxu0 0.0
    %2513 = vmatpush1.msra.mxu0 0.0
    %2514 = vmatprep.subr.mxu0 0.0
    %2515 = vmatpush1.msra.mxu0 0.0
    %2516 = vmatprep.subr.mxu0 0.0
    %2517 = vmatpush1.msra.mxu0 0.0
    %2518 = vmatprep.subr.mxu0 0.0
    %2519 = vmatpush1.msra.mxu0 0.0
    %2520 = vmatprep.subr.mxu0 0.0
    %2521 = vmatpush1.msra.mxu0 0.0
    %2522 = vmatprep.subr.mxu0 0.0
    %2523 = vmatpush1.msra.mxu0 0.0
    %2524 = vmatprep.mubr.f32.mxu0 0.0
    %2525 = vmatmul.mubr.f32.gmra.mrb[0].mxu0 %v2449
    %v2526 = vpop.f32.mrb[0].mxu0
    %v2527 = vadd.f32 %v2447, %v2526
    %v2528 = vpop.f32.mrb[0].mxu0
    %2529 = vmatprep.mubr.f32.mxu0 0.0
    %2530 = vmatmul.mubr.f32.gmra.mrb[0].mxu0 %v2452
    %v2531 = vpop.f32.mrb[0].mxu0
    %v2532 = vadd.f32 %v2447, %v2531
    %v2533 = vpop.f32.mrb[0].mxu0
    %2534 = vmatprep.mubr.f32.mxu0 0.0
    %2535 = vmatmul.mubr.f32.gmra.mrb[0].mxu0 %v2455
    %v2536 = vpop.f32.mrb[0].mxu0
    %v2537 = vadd.f32 %v2447, %v2536
    %v2538 = vpop.f32.mrb[0].mxu0
    %2539 = vmatprep.mubr.f32.mxu0 0.0
    %2540 = vmatmul.mubr.f32.gmra.mrb[0].mxu0 %v2458
    %v2541 = vpop.f32.mrb[0].mxu0
    %v2542 = vadd.f32 %v2447, %v2541
    %v2543 = vpop.f32.mrb[0].mxu0
    %2544 = vdwg.mxu0
    %v2545 = vsub.f32 0.0, %v2527
    %v2546 = vsub.f32 0.0, %v2532
    %v2547 = vsub.f32 0.0, %v2537
    %v2548 = vsub.f32 0.0, %v2542
    %v2549 = vmul.f32 %v2545, 1.442695
    %v2550 = vpow.pop %v2549
    %v2551 = vmul.f32 %v2546, 1.442695
    %v2552 = vpow.pop %v2551
    %v2553 = vmul.f32 %v2547, 1.442695
    %v2554 = vpow.pop %v2553
    %v2555 = vmul.f32 %v2548, 1.442695
    %v2556 = vpow.pop %v2555
    %v2557 = vadd.f32 %v2550, 1.0
    %v2558 = vadd.f32 %v2552, 1.0
    %v2559 = vadd.f32 %v2554, 1.0
    %v2560 = vadd.f32 %v2556, 1.0
    %v2561 = vrcp.pop %v2557
    %v2562 = vmul.f32 1.0, %v2561
    %v2563 = vrcp.pop %v2558
    %v2564 = vmul.f32 1.0, %v2563
    %v2565 = vrcp.pop %v2559
    %v2566 = vmul.f32 1.0, %v2565
    %v2567 = vrcp.pop %v2560
    %v2568 = vmul.f32 1.0, %v2567
    %s2569 = scalar_lea.vmem [#allocation23], 64
    %v2570 = vld [vmem:[%s2569] sm:$0xff]
    %v2571 = vld [vmem:[%s2569 + $0x8] sm:$0xff]
    %v2572 = vld [vmem:[%s2569 + $0x10] sm:$0xff]
    %v2573 = vld [vmem:[%s2569 + $0x18] sm:$0xff]
    %v2574 = vld [vmem:[%s20 + $0x2] sm:$0x1]
    %v2575 = vlaneseq
    %v2576 = vshrl.u32 %v2575, 7
    %v2577 = vsub.s32 0, %v2576
    %v2578 = vrot.slane %v2574, %v2577
    %2579 = vmatprep.subr.mxu0 0.0
    %2580 = vmatpush1.msra.mxu0 %v2570
    %2581 = vmatprep.subr.mxu0 0.0
    %2582 = vmatpush1.msra.mxu0 %v2571
    %2583 = vmatprep.subr.mxu0 0.0
    %2584 = vmatpush1.msra.mxu0 %v2572
    %2585 = vmatprep.subr.mxu0 0.0
    %2586 = vmatpush1.msra.mxu0 %v2573
    %2587 = vmatprep.subr.mxu0 0.0
    %2588 = vmatpush1.msra.mxu0 0.0
    %2589 = vmatprep.subr.mxu0 0.0
    %2590 = vmatpush1.msra.mxu0 0.0
    %2591 = vmatprep.subr.mxu0 0.0
    %2592 = vmatpush1.msra.mxu0 0.0
    %2593 = vmatprep.subr.mxu0 0.0
    %2594 = vmatpush1.msra.mxu0 0.0
    %2595 = vmatprep.subr.mxu0 0.0
    %2596 = vmatpush1.msra.mxu0 0.0
    %2597 = vmatprep.subr.mxu0 0.0
    %2598 = vmatpush1.msra.mxu0 0.0
    %2599 = vmatprep.subr.mxu0 0.0
    %2600 = vmatpush1.msra.mxu0 0.0
    %2601 = vmatprep.subr.mxu0 0.0
    %2602 = vmatpush1.msra.mxu0 0.0
    %2603 = vmatprep.subr.mxu0 0.0
    %2604 = vmatpush1.msra.mxu0 0.0
    %2605 = vmatprep.subr.mxu0 0.0
    %2606 = vmatpush1.msra.mxu0 0.0
    %2607 = vmatprep.subr.mxu0 0.0
    %2608 = vmatpush1.msra.mxu0 0.0
    %2609 = vmatprep.subr.mxu0 0.0
    %2610 = vmatpush1.msra.mxu0 0.0
    %2611 = vmatprep.subr.mxu0 0.0
    %2612 = vmatpush1.msra.mxu0 0.0
    %2613 = vmatprep.subr.mxu0 0.0
    %2614 = vmatpush1.msra.mxu0 0.0
    %2615 = vmatprep.subr.mxu0 0.0
    %2616 = vmatpush1.msra.mxu0 0.0
    %2617 = vmatprep.subr.mxu0 0.0
    %2618 = vmatpush1.msra.mxu0 0.0
    %2619 = vmatprep.subr.mxu0 0.0
    %2620 = vmatpush1.msra.mxu0 0.0
    %2621 = vmatprep.subr.mxu0 0.0
    %2622 = vmatpush1.msra.mxu0 0.0
    %2623 = vmatprep.subr.mxu0 0.0
    %2624 = vmatpush1.msra.mxu0 0.0
    %2625 = vmatprep.subr.mxu0 0.0
    %2626 = vmatpush1.msra.mxu0 0.0
    %2627 = vmatprep.subr.mxu0 0.0
    %2628 = vmatpush1.msra.mxu0 0.0
    %2629 = vmatprep.subr.mxu0 0.0
    %2630 = vmatpush1.msra.mxu0 0.0
    %2631 = vmatprep.subr.mxu0 0.0
    %2632 = vmatpush1.msra.mxu0 0.0
    %2633 = vmatprep.subr.mxu0 0.0
    %2634 = vmatpush1.msra.mxu0 0.0
    %2635 = vmatprep.subr.mxu0 0.0
    %2636 = vmatpush1.msra.mxu0 0.0
    %2637 = vmatprep.subr.mxu0 0.0
    %2638 = vmatpush1.msra.mxu0 0.0
    %2639 = vmatprep.subr.mxu0 0.0
    %2640 = vmatpush1.msra.mxu0 0.0
    %2641 = vmatprep.subr.mxu0 0.0
    %2642 = vmatpush1.msra.mxu0 0.0
    %2643 = vmatprep.mubr.f32.mxu0 0.0
    %2644 = vmatmul.mubr.f32.gmra.mrb[0].mxu0 %v2449
    %v2645 = vpop.f32.mrb[0].mxu0
    %v2646 = vadd.f32 %v2578, %v2645
    %v2647 = vpop.f32.mrb[0].mxu0
    %2648 = vmatprep.mubr.f32.mxu0 0.0
    %2649 = vmatmul.mubr.f32.gmra.mrb[0].mxu0 %v2452
    %v2650 = vpop.f32.mrb[0].mxu0
    %v2651 = vadd.f32 %v2578, %v2650
    %v2652 = vpop.f32.mrb[0].mxu0
    %2653 = vmatprep.mubr.f32.mxu0 0.0
    %2654 = vmatmul.mubr.f32.gmra.mrb[0].mxu0 %v2455
    %v2655 = vpop.f32.mrb[0].mxu0
    %v2656 = vadd.f32 %v2578, %v2655
    %v2657 = vpop.f32.mrb[0].mxu0
    %2658 = vmatprep.mubr.f32.mxu0 0.0
    %2659 = vmatmul.mubr.f32.gmra.mrb[0].mxu0 %v2458
    %v2660 = vpop.f32.mrb[0].mxu0
    %v2661 = vadd.f32 %v2578, %v2660
    %v2662 = vpop.f32.mrb[0].mxu0
    %2663 = vdwg.mxu0
    %v2664 = vmul.f32 %v2562, %v2646
    %v2665 = vmul.f32 %v2564, %v2651
    %v2666 = vmul.f32 %v2566, %v2656
    %v2667 = vmul.f32 %v2568, %v2661
    %v2668 = vadd.f32 %v2664, %v2201
    %v2669 = vadd.f32 %v2665, %v2206
    %v2670 = vadd.f32 %v2666, %v2211
    %v2671 = vadd.f32 %v2667, %v2216
    %v2672 = vld [vmem:[%s23 + $0x2] sm:$0x1]
    %v2673 = vlaneseq
    %v2674 = vshrl.u32 %v2673, 7
    %v2675 = vsub.s32 0, %v2674
    %v2676 = vrot.slane %v2672, %v2675
    %v2677 = vmul.f32 %v2668, %v2676
    %v2678 = vmul.f32 %v2669, %v2676
    %v2679 = vmul.f32 %v2670, %v2676
    %v2680 = vmul.f32 %v2671, %v2676
    %v2681 = vld [vmem:[%s24 + $0x2] sm:$0x1]
    %v2682 = vlaneseq
    %v2683 = vshrl.u32 %v2682, 7
    %v2684 = vsub.s32 0, %v2683
    %v2685 = vrot.slane %v2681, %v2684
    %v2686 = vadd.f32 %v2677, %v2685
    %v2687 = vadd.f32 %v2678, %v2685
    %v2688 = vadd.f32 %v2679, %v2685
    %v2689 = vadd.f32 %v2680, %v2685
    %2690 = vset.pattern.permute.xlu0 2
    %2691 = vperm.xlu0 %2690, %v905
    %v2692 = vpop.permute.xlu0 %2691
    %2694 = vset.pattern.permute.xlu0 2
    %2695 = vperm.xlu0 %2694, %v906
    %v2696 = vpop.permute.xlu0 %2695
    %2698 = vset.pattern.permute.xlu0 2
    %2699 = vperm.xlu0 %2698, %v907
    %v2700 = vpop.permute.xlu0 %2699
    %2702 = vset.pattern.permute.xlu0 2
    %2703 = vperm.xlu0 %2702, %v908
    %v2704 = vpop.permute.xlu0 %2703
    %v2706 = vmul.f32 %v2686, %v2692
    %v2707 = vmul.f32 %v2687, %v2696
    %v2708 = vmul.f32 %v2688, %v2700
    %v2709 = vmul.f32 %v2689, %v2704
    %v2710 = vadd.f32 %v2107, %v2706
    %v2711 = vadd.f32 %v2108, %v2707
    %v2712 = vadd.f32 %v2109, %v2708
    %v2713 = vadd.f32 %v2110, %v2709
    %s2714 = scalar_lea.vmem [#allocation17], 24
    %v2715 = vld [vmem:[%s2714] sm:$0xff]
    %v2716 = vld [vmem:[#allocation19 + $0x3] sm:$0x1]
    %v2717 = vlaneseq
    %v2718 = vshrl.u32 %v2717, 7
    %v2719 = vsub.s32 0, %v2718
    %v2720 = vrot.slane %v2716, %v2719
    %2721 = vrot.lane.b32.xlu0 %v268, 104
    %v2722 = vpop.permute.xlu0 %2721
    %2723 = vrot.lane.b32.xlu0 %v269, 104
    %v2724 = vpop.permute.xlu0 %2723
    %2725 = vrot.lane.b32.xlu0 %v270, 104
    %v2726 = vpop.permute.xlu0 %2725
    %2727 = vrot.lane.b32.xlu0 %v271, 104
    %v2728 = vpop.permute.xlu0 %2727
    %v2729 = vsel %vm919, %v2722, 0
    %v2731 = vsel %vm919, %v2724, 0
    %v2733 = vsel %vm919, %v2726, 0
    %v2735 = vsel %vm919, %v2728, 0
    %2737 = vmatprep.subr.mxu0 0.0
    %2738 = vmatpush1.msra.mxu0 %v2715
    %2739 = vmatprep.subr.mxu0 0.0
    %2740 = vmatpush1.msra.mxu0 0.0
    %2741 = vmatprep.subr.mxu0 0.0
    %2742 = vmatpush1.msra.mxu0 0.0
    %2743 = vmatprep.subr.mxu0 0.0
    %2744 = vmatpush1.msra.mxu0 0.0
    %2745 = vmatprep.subr.mxu0 0.0
    %2746 = vmatpush1.msra.mxu0 0.0
    %2747 = vmatprep.subr.mxu0 0.0
    %2748 = vmatpush1.msra.mxu0 0.0
    %2749 = vmatprep.subr.mxu0 0.0
    %2750 = vmatpush1.msra.mxu0 0.0
    %2751 = vmatprep.subr.mxu0 0.0
    %2752 = vmatpush1.msra.mxu0 0.0
    %2753 = vmatprep.subr.mxu0 0.0
    %2754 = vmatpush1.msra.mxu0 0.0
    %2755 = vmatprep.subr.mxu0 0.0
    %2756 = vmatpush1.msra.mxu0 0.0
    %2757 = vmatprep.subr.mxu0 0.0
    %2758 = vmatpush1.msra.mxu0 0.0
    %2759 = vmatprep.subr.mxu0 0.0
    %2760 = vmatpush1.msra.mxu0 0.0
    %2761 = vmatprep.subr.mxu0 0.0
    %2762 = vmatpush1.msra.mxu0 0.0
    %2763 = vmatprep.subr.mxu0 0.0
    %2764 = vmatpush1.msra.mxu0 0.0
    %2765 = vmatprep.subr.mxu0 0.0
    %2766 = vmatpush1.msra.mxu0 0.0
    %2767 = vmatprep.subr.mxu0 0.0
    %2768 = vmatpush1.msra.mxu0 0.0
    %2769 = vmatprep.subr.mxu0 0.0
    %2770 = vmatpush1.msra.mxu0 0.0
    %2771 = vmatprep.subr.mxu0 0.0
    %2772 = vmatpush1.msra.mxu0 0.0
    %2773 = vmatprep.subr.mxu0 0.0
    %2774 = vmatpush1.msra.mxu0 0.0
    %2775 = vmatprep.subr.mxu0 0.0
    %2776 = vmatpush1.msra.mxu0 0.0
    %2777 = vmatprep.subr.mxu0 0.0
    %2778 = vmatpush1.msra.mxu0 0.0
    %2779 = vmatprep.subr.mxu0 0.0
    %2780 = vmatpush1.msra.mxu0 0.0
    %2781 = vmatprep.subr.mxu0 0.0
    %2782 = vmatpush1.msra.mxu0 0.0
    %2783 = vmatprep.subr.mxu0 0.0
    %2784 = vmatpush1.msra.mxu0 0.0
    %2785 = vmatprep.subr.mxu0 0.0
    %2786 = vmatpush1.msra.mxu0 0.0
    %2787 = vmatprep.subr.mxu0 0.0
    %2788 = vmatpush1.msra.mxu0 0.0
    %2789 = vmatprep.subr.mxu0 0.0
    %2790 = vmatpush1.msra.mxu0 0.0
    %2791 = vmatprep.subr.mxu0 0.0
    %2792 = vmatpush1.msra.mxu0 0.0
    %2793 = vmatprep.subr.mxu0 0.0
    %2794 = vmatpush1.msra.mxu0 0.0
    %2795 = vmatprep.subr.mxu0 0.0
    %2796 = vmatpush1.msra.mxu0 0.0
    %2797 = vmatprep.subr.mxu0 0.0
    %2798 = vmatpush1.msra.mxu0 0.0
    %2799 = vmatprep.subr.mxu0 0.0
    %2800 = vmatpush1.msra.mxu0 0.0
    %2801 = vmatprep.mubr.f32.mxu0 0.0
    %2802 = vmatmul.mubr.f32.gmra.mrb[0].mxu0 %v2729
    %v2803 = vpop.f32.mrb[0].mxu0
    %v2804 = vadd.f32 %v2720, %v2803
    %v2805 = vpop.f32.mrb[0].mxu0
    %2806 = vmatprep.mubr.f32.mxu0 0.0
    %2807 = vmatmul.mubr.f32.gmra.mrb[0].mxu0 %v2731
    %v2808 = vpop.f32.mrb[0].mxu0
    %v2809 = vadd.f32 %v2720, %v2808
    %v2810 = vpop.f32.mrb[0].mxu0
    %2811 = vmatprep.mubr.f32.mxu0 0.0
    %2812 = vmatmul.mubr.f32.gmra.mrb[0].mxu0 %v2733
    %v2813 = vpop.f32.mrb[0].mxu0
    %v2814 = vadd.f32 %v2720, %v2813
    %v2815 = vpop.f32.mrb[0].mxu0
    %2816 = vmatprep.mubr.f32.mxu0 0.0
    %2817 = vmatmul.mubr.f32.gmra.mrb[0].mxu0 %v2735
    %v2818 = vpop.f32.mrb[0].mxu0
    %v2819 = vadd.f32 %v2720, %v2818
    %v2820 = vpop.f32.mrb[0].mxu0
    %2821 = vdwg.mxu0
    %s2822 = scalar_lea.vmem [#allocation20], 24
    %v2823 = vld [vmem:[%s2822] sm:$0xff]
    %v2824 = vld [vmem:[#allocation22 + $0x3] sm:$0x1]
    %v2825 = vlaneseq
    %v2826 = vshrl.u32 %v2825, 7
    %v2827 = vsub.s32 0, %v2826
    %v2828 = vrot.slane %v2824, %v2827
    %2829 = vmatprep.subr.mxu0 0.0
    %2830 = vmatpush1.msra.mxu0 %v2823
    %2831 = vmatprep.subr.mxu0 0.0
    %2832 = vmatpush1.msra.mxu0 0.0
    %2833 = vmatprep.subr.mxu0 0.0
    %2834 = vmatpush1.msra.mxu0 0.0
    %2835 = vmatprep.subr.mxu0 0.0
    %2836 = vmatpush1.msra.mxu0 0.0
    %2837 = vmatprep.subr.mxu0 0.0
    %2838 = vmatpush1.msra.mxu0 0.0
    %2839 = vmatprep.subr.mxu0 0.0
    %2840 = vmatpush1.msra.mxu0 0.0
    %2841 = vmatprep.subr.mxu0 0.0
    %2842 = vmatpush1.msra.mxu0 0.0
    %2843 = vmatprep.subr.mxu0 0.0
    %2844 = vmatpush1.msra.mxu0 0.0
    %2845 = vmatprep.subr.mxu0 0.0
    %2846 = vmatpush1.msra.mxu0 0.0
    %2847 = vmatprep.subr.mxu0 0.0
    %2848 = vmatpush1.msra.mxu0 0.0
    %2849 = vmatprep.subr.mxu0 0.0
    %2850 = vmatpush1.msra.mxu0 0.0
    %2851 = vmatprep.subr.mxu0 0.0
    %2852 = vmatpush1.msra.mxu0 0.0
    %2853 = vmatprep.subr.mxu0 0.0
    %2854 = vmatpush1.msra.mxu0 0.0
    %2855 = vmatprep.subr.mxu0 0.0
    %2856 = vmatpush1.msra.mxu0 0.0
    %2857 = vmatprep.subr.mxu0 0.0
    %2858 = vmatpush1.msra.mxu0 0.0
    %2859 = vmatprep.subr.mxu0 0.0
    %2860 = vmatpush1.msra.mxu0 0.0
    %2861 = vmatprep.subr.mxu0 0.0
    %2862 = vmatpush1.msra.mxu0 0.0
    %2863 = vmatprep.subr.mxu0 0.0
    %2864 = vmatpush1.msra.mxu0 0.0
    %2865 = vmatprep.subr.mxu0 0.0
    %2866 = vmatpush1.msra.mxu0 0.0
    %2867 = vmatprep.subr.mxu0 0.0
    %2868 = vmatpush1.msra.mxu0 0.0
    %2869 = vmatprep.subr.mxu0 0.0
    %2870 = vmatpush1.msra.mxu0 0.0
    %2871 = vmatprep.subr.mxu0 0.0
    %2872 = vmatpush1.msra.mxu0 0.0
    %2873 = vmatprep.subr.mxu0 0.0
    %2874 = vmatpush1.msra.mxu0 0.0
    %2875 = vmatprep.subr.mxu0 0.0
    %2876 = vmatpush1.msra.mxu0 0.0
    %2877 = vmatprep.subr.mxu0 0.0
    %2878 = vmatpush1.msra.mxu0 0.0
    %2879 = vmatprep.subr.mxu0 0.0
    %2880 = vmatpush1.msra.mxu0 0.0
    %2881 = vmatprep.subr.mxu0 0.0
    %2882 = vmatpush1.msra.mxu0 0.0
    %2883 = vmatprep.subr.mxu0 0.0
    %2884 = vmatpush1.msra.mxu0 0.0
    %2885 = vmatprep.subr.mxu0 0.0
    %2886 = vmatpush1.msra.mxu0 0.0
    %2887 = vmatprep.subr.mxu0 0.0
    %2888 = vmatpush1.msra.mxu0 0.0
    %2889 = vmatprep.subr.mxu0 0.0
    %2890 = vmatpush1.msra.mxu0 0.0
    %2891 = vmatprep.subr.mxu0 0.0
    %2892 = vmatpush1.msra.mxu0 0.0
    %2893 = vmatprep.mubr.f32.mxu0 0.0
    %2894 = vmatmul.mubr.f32.gmra.mrb[0].mxu0 %v2729
    %v2895 = vpop.f32.mrb[0].mxu0
    %v2896 = vadd.f32 %v2828, %v2895
    %v2897 = vpop.f32.mrb[0].mxu0
    %2898 = vmatprep.mubr.f32.mxu0 0.0
    %2899 = vmatmul.mubr.f32.gmra.mrb[0].mxu0 %v2731
    %v2900 = vpop.f32.mrb[0].mxu0
    %v2901 = vadd.f32 %v2828, %v2900
    %v2902 = vpop.f32.mrb[0].mxu0
    %2903 = vmatprep.mubr.f32.mxu0 0.0
    %2904 = vmatmul.mubr.f32.gmra.mrb[0].mxu0 %v2733
    %v2905 = vpop.f32.mrb[0].mxu0
    %v2906 = vadd.f32 %v2828, %v2905
    %v2907 = vpop.f32.mrb[0].mxu0
    %2908 = vmatprep.mubr.f32.mxu0 0.0
    %2909 = vmatmul.mubr.f32.gmra.mrb[0].mxu0 %v2735
    %v2910 = vpop.f32.mrb[0].mxu0
    %v2911 = vadd.f32 %v2828, %v2910
    %v2912 = vpop.f32.mrb[0].mxu0
    %2913 = vdwg.mxu0
    %vm2914 = vcmp.gt.f32.partialorder %v2896, 0.0
    %vm2915 = vcmp.gt.f32.partialorder %v2901, 0.0
    %vm2916 = vcmp.gt.f32.partialorder %v2906, 0.0
    %vm2917 = vcmp.gt.f32.partialorder %v2911, 0.0
    %v2918 = vmul.f32 %v2896, 1.442695
    %v2919 = vpow.pop %v2918
    %v2920 = vmul.f32 %v2901, 1.442695
    %v2921 = vpow.pop %v2920
    %v2922 = vmul.f32 %v2906, 1.442695
    %v2923 = vpow.pop %v2922
    %v2924 = vmul.f32 %v2911, 1.442695
    %v2925 = vpow.pop %v2924
    %v2926 = vsub.f32 %v2919, 1.0
    %v2927 = vsub.f32 %v2921, 1.0
    %v2928 = vsub.f32 %v2923, 1.0
    %v2929 = vsub.f32 %v2925, 1.0
    %v2930 = vsel %vm2914, %v2896, %v2926
    %v2931 = vsel %vm2915, %v2901, %v2927
    %v2932 = vsel %vm2916, %v2906, %v2928
    %v2933 = vsel %vm2917, %v2911, %v2929
    %s2934 = scalar_lea.vmem %s17, 96
    %v2935 = vld [vmem:[%s2934] sm:$0xff]
    %v2936 = vld [vmem:[%s2934 + $0x8] sm:$0xff]
    %v2937 = vld [vmem:[%s2934 + $0x10] sm:$0xff]
    %v2938 = vld [vmem:[%s2934 + $0x18] sm:$0xff]
    %v2939 = vld [vmem:[%s18 + $0x3] sm:$0x1]
    %v2940 = vlaneseq
    %v2941 = vshrl.u32 %v2940, 7
    %v2942 = vsub.s32 0, %v2941
    %v2943 = vrot.slane %v2939, %v2942
    %v2945 = vsel %vm283, %v2930, 0
    %v2948 = vsel %vm283, %v2931, 0
    %v2951 = vsel %vm283, %v2932, 0
    %v2954 = vsel %vm283, %v2933, 0
    %2956 = vmatprep.subr.mxu0 0.0
    %2957 = vmatpush1.msra.mxu0 %v2935
    %2958 = vmatprep.subr.mxu0 0.0
    %2959 = vmatpush1.msra.mxu0 %v2936
    %2960 = vmatprep.subr.mxu0 0.0
    %2961 = vmatpush1.msra.mxu0 %v2937
    %2962 = vmatprep.subr.mxu0 0.0
    %2963 = vmatpush1.msra.mxu0 %v2938
    %2964 = vmatprep.subr.mxu0 0.0
    %2965 = vmatpush1.msra.mxu0 0.0
    %2966 = vmatprep.subr.mxu0 0.0
    %2967 = vmatpush1.msra.mxu0 0.0
    %2968 = vmatprep.subr.mxu0 0.0
    %2969 = vmatpush1.msra.mxu0 0.0
    %2970 = vmatprep.subr.mxu0 0.0
    %2971 = vmatpush1.msra.mxu0 0.0
    %2972 = vmatprep.subr.mxu0 0.0
    %2973 = vmatpush1.msra.mxu0 0.0
    %2974 = vmatprep.subr.mxu0 0.0
    %2975 = vmatpush1.msra.mxu0 0.0
    %2976 = vmatprep.subr.mxu0 0.0
    %2977 = vmatpush1.msra.mxu0 0.0
    %2978 = vmatprep.subr.mxu0 0.0
    %2979 = vmatpush1.msra.mxu0 0.0
    %2980 = vmatprep.subr.mxu0 0.0
    %2981 = vmatpush1.msra.mxu0 0.0
    %2982 = vmatprep.subr.mxu0 0.0
    %2983 = vmatpush1.msra.mxu0 0.0
    %2984 = vmatprep.subr.mxu0 0.0
    %2985 = vmatpush1.msra.mxu0 0.0
    %2986 = vmatprep.subr.mxu0 0.0
    %2987 = vmatpush1.msra.mxu0 0.0
    %2988 = vmatprep.subr.mxu0 0.0
    %2989 = vmatpush1.msra.mxu0 0.0
    %2990 = vmatprep.subr.mxu0 0.0
    %2991 = vmatpush1.msra.mxu0 0.0
    %2992 = vmatprep.subr.mxu0 0.0
    %2993 = vmatpush1.msra.mxu0 0.0
    %2994 = vmatprep.subr.mxu0 0.0
    %2995 = vmatpush1.msra.mxu0 0.0
    %2996 = vmatprep.subr.mxu0 0.0
    %2997 = vmatpush1.msra.mxu0 0.0
    %2998 = vmatprep.subr.mxu0 0.0
    %2999 = vmatpush1.msra.mxu0 0.0
    %3000 = vmatprep.subr.mxu0 0.0
    %3001 = vmatpush1.msra.mxu0 0.0
    %3002 = vmatprep.subr.mxu0 0.0
    %3003 = vmatpush1.msra.mxu0 0.0
    %3004 = vmatprep.subr.mxu0 0.0
    %3005 = vmatpush1.msra.mxu0 0.0
    %3006 = vmatprep.subr.mxu0 0.0
    %3007 = vmatpush1.msra.mxu0 0.0
    %3008 = vmatprep.subr.mxu0 0.0
    %3009 = vmatpush1.msra.mxu0 0.0
    %3010 = vmatprep.subr.mxu0 0.0
    %3011 = vmatpush1.msra.mxu0 0.0
    %3012 = vmatprep.subr.mxu0 0.0
    %3013 = vmatpush1.msra.mxu0 0.0
    %3014 = vmatprep.subr.mxu0 0.0
    %3015 = vmatpush1.msra.mxu0 0.0
    %3016 = vmatprep.subr.mxu0 0.0
    %3017 = vmatpush1.msra.mxu0 0.0
    %3018 = vmatprep.subr.mxu0 0.0
    %3019 = vmatpush1.msra.mxu0 0.0
    %3020 = vmatprep.mubr.f32.mxu0 0.0
    %3021 = vmatmul.mubr.f32.gmra.mrb[0].mxu0 %v2945
    %v3022 = vpop.f32.mrb[0].mxu0
    %v3023 = vadd.f32 %v2943, %v3022
    %v3024 = vpop.f32.mrb[0].mxu0
    %3025 = vmatprep.mubr.f32.mxu0 0.0
    %3026 = vmatmul.mubr.f32.gmra.mrb[0].mxu0 %v2948
    %v3027 = vpop.f32.mrb[0].mxu0
    %v3028 = vadd.f32 %v2943, %v3027
    %v3029 = vpop.f32.mrb[0].mxu0
    %3030 = vmatprep.mubr.f32.mxu0 0.0
    %3031 = vmatmul.mubr.f32.gmra.mrb[0].mxu0 %v2951
    %v3032 = vpop.f32.mrb[0].mxu0
    %v3033 = vadd.f32 %v2943, %v3032
    %v3034 = vpop.f32.mrb[0].mxu0
    %3035 = vmatprep.mubr.f32.mxu0 0.0
    %3036 = vmatmul.mubr.f32.gmra.mrb[0].mxu0 %v2954
    %v3037 = vpop.f32.mrb[0].mxu0
    %v3038 = vadd.f32 %v2943, %v3037
    %v3039 = vpop.f32.mrb[0].mxu0
    %3040 = vdwg.mxu0
    %s3041 = scalar_lea.vmem [#allocation25], 96
    %v3042 = vld [vmem:[%s3041] sm:$0xff]
    %v3043 = vld [vmem:[%s3041 + $0x8] sm:$0xff]
    %v3044 = vld [vmem:[%s3041 + $0x10] sm:$0xff]
    %v3045 = vld [vmem:[%s3041 + $0x18] sm:$0xff]
    %v3046 = vld [vmem:[%s22 + $0x3] sm:$0x1]
    %v3047 = vlaneseq
    %v3048 = vshrl.u32 %v3047, 7
    %v3049 = vsub.s32 0, %v3048
    %v3050 = vrot.slane %v3046, %v3049
    %v3052 = vsel %vm283, %v3023, 0
    %v3055 = vsel %vm283, %v3028, 0
    %v3058 = vsel %vm283, %v3033, 0
    %v3061 = vsel %vm283, %v3038, 0
    %3063 = vmatprep.subr.mxu0 0.0
    %3064 = vmatpush1.msra.mxu0 %v3042
    %3065 = vmatprep.subr.mxu0 0.0
    %3066 = vmatpush1.msra.mxu0 %v3043
    %3067 = vmatprep.subr.mxu0 0.0
    %3068 = vmatpush1.msra.mxu0 %v3044
    %3069 = vmatprep.subr.mxu0 0.0
    %3070 = vmatpush1.msra.mxu0 %v3045
    %3071 = vmatprep.subr.mxu0 0.0
    %3072 = vmatpush1.msra.mxu0 0.0
    %3073 = vmatprep.subr.mxu0 0.0
    %3074 = vmatpush1.msra.mxu0 0.0
    %3075 = vmatprep.subr.mxu0 0.0
    %3076 = vmatpush1.msra.mxu0 0.0
    %3077 = vmatprep.subr.mxu0 0.0
    %3078 = vmatpush1.msra.mxu0 0.0
    %3079 = vmatprep.subr.mxu0 0.0
    %3080 = vmatpush1.msra.mxu0 0.0
    %3081 = vmatprep.subr.mxu0 0.0
    %3082 = vmatpush1.msra.mxu0 0.0
    %3083 = vmatprep.subr.mxu0 0.0
    %3084 = vmatpush1.msra.mxu0 0.0
    %3085 = vmatprep.subr.mxu0 0.0
    %3086 = vmatpush1.msra.mxu0 0.0
    %3087 = vmatprep.subr.mxu0 0.0
    %3088 = vmatpush1.msra.mxu0 0.0
    %3089 = vmatprep.subr.mxu0 0.0
    %3090 = vmatpush1.msra.mxu0 0.0
    %3091 = vmatprep.subr.mxu0 0.0
    %3092 = vmatpush1.msra.mxu0 0.0
    %3093 = vmatprep.subr.mxu0 0.0
    %3094 = vmatpush1.msra.mxu0 0.0
    %3095 = vmatprep.subr.mxu0 0.0
    %3096 = vmatpush1.msra.mxu0 0.0
    %3097 = vmatprep.subr.mxu0 0.0
    %3098 = vmatpush1.msra.mxu0 0.0
    %3099 = vmatprep.subr.mxu0 0.0
    %3100 = vmatpush1.msra.mxu0 0.0
    %3101 = vmatprep.subr.mxu0 0.0
    %3102 = vmatpush1.msra.mxu0 0.0
    %3103 = vmatprep.subr.mxu0 0.0
    %3104 = vmatpush1.msra.mxu0 0.0
    %3105 = vmatprep.subr.mxu0 0.0
    %3106 = vmatpush1.msra.mxu0 0.0
    %3107 = vmatprep.subr.mxu0 0.0
    %3108 = vmatpush1.msra.mxu0 0.0
    %3109 = vmatprep.subr.mxu0 0.0
    %3110 = vmatpush1.msra.mxu0 0.0
    %3111 = vmatprep.subr.mxu0 0.0
    %3112 = vmatpush1.msra.mxu0 0.0
    %3113 = vmatprep.subr.mxu0 0.0
    %3114 = vmatpush1.msra.mxu0 0.0
    %3115 = vmatprep.subr.mxu0 0.0
    %3116 = vmatpush1.msra.mxu0 0.0
    %3117 = vmatprep.subr.mxu0 0.0
    %3118 = vmatpush1.msra.mxu0 0.0
    %3119 = vmatprep.subr.mxu0 0.0
    %3120 = vmatpush1.msra.mxu0 0.0
    %3121 = vmatprep.subr.mxu0 0.0
    %3122 = vmatpush1.msra.mxu0 0.0
    %3123 = vmatprep.subr.mxu0 0.0
    %3124 = vmatpush1.msra.mxu0 0.0
    %3125 = vmatprep.subr.mxu0 0.0
    %3126 = vmatpush1.msra.mxu0 0.0
    %3127 = vmatprep.mubr.f32.mxu0 0.0
    %3128 = vmatmul.mubr.f32.gmra.mrb[0].mxu0 %v3052
    %v3129 = vpop.f32.mrb[0].mxu0
    %v3130 = vadd.f32 %v3050, %v3129
    %v3131 = vpop.f32.mrb[0].mxu0
    %3132 = vmatprep.mubr.f32.mxu0 0.0
    %3133 = vmatmul.mubr.f32.gmra.mrb[0].mxu0 %v3055
    %v3134 = vpop.f32.mrb[0].mxu0
    %v3135 = vadd.f32 %v3050, %v3134
    %v3136 = vpop.f32.mrb[0].mxu0
    %3137 = vmatprep.mubr.f32.mxu0 0.0
    %3138 = vmatmul.mubr.f32.gmra.mrb[0].mxu0 %v3058
    %v3139 = vpop.f32.mrb[0].mxu0
    %v3140 = vadd.f32 %v3050, %v3139
    %v3141 = vpop.f32.mrb[0].mxu0
    %3142 = vmatprep.mubr.f32.mxu0 0.0
    %3143 = vmatmul.mubr.f32.gmra.mrb[0].mxu0 %v3061
    %v3144 = vpop.f32.mrb[0].mxu0
    %v3145 = vadd.f32 %v3050, %v3144
    %v3146 = vpop.f32.mrb[0].mxu0
    %3147 = vdwg.mxu0
    %v3148 = vsub.f32 0.0, %v3130
    %v3149 = vsub.f32 0.0, %v3135
    %v3150 = vsub.f32 0.0, %v3140
    %v3151 = vsub.f32 0.0, %v3145
    %v3152 = vmul.f32 %v3148, 1.442695
    %v3153 = vpow.pop %v3152
    %v3154 = vmul.f32 %v3149, 1.442695
    %v3155 = vpow.pop %v3154
    %v3156 = vmul.f32 %v3150, 1.442695
    %v3157 = vpow.pop %v3156
    %v3158 = vmul.f32 %v3151, 1.442695
    %v3159 = vpow.pop %v3158
    %v3160 = vadd.f32 %v3153, 1.0
    %v3161 = vadd.f32 %v3155, 1.0
    %v3162 = vadd.f32 %v3157, 1.0
    %v3163 = vadd.f32 %v3159, 1.0
    %v3164 = vrcp.pop %v3160
    %v3165 = vmul.f32 1.0, %v3164
    %v3166 = vrcp.pop %v3161
    %v3167 = vmul.f32 1.0, %v3166
    %v3168 = vrcp.pop %v3162
    %v3169 = vmul.f32 1.0, %v3168
    %v3170 = vrcp.pop %v3163
    %v3171 = vmul.f32 1.0, %v3170
    %s3172 = scalar_lea.vmem [#allocation23], 96
    %v3173 = vld [vmem:[%s3172] sm:$0xff]
    %v3174 = vld [vmem:[%s3172 + $0x8] sm:$0xff]
    %v3175 = vld [vmem:[%s3172 + $0x10] sm:$0xff]
    %v3176 = vld [vmem:[%s3172 + $0x18] sm:$0xff]
    %v3177 = vld [vmem:[%s20 + $0x3] sm:$0x1]
    %v3178 = vlaneseq
    %v3179 = vshrl.u32 %v3178, 7
    %v3180 = vsub.s32 0, %v3179
    %v3181 = vrot.slane %v3177, %v3180
    %3182 = vmatprep.subr.mxu0 0.0
    %3183 = vmatpush1.msra.mxu0 %v3173
    %3184 = vmatprep.subr.mxu0 0.0
    %3185 = vmatpush1.msra.mxu0 %v3174
    %3186 = vmatprep.subr.mxu0 0.0
    %3187 = vmatpush1.msra.mxu0 %v3175
    %3188 = vmatprep.subr.mxu0 0.0
    %3189 = vmatpush1.msra.mxu0 %v3176
    %3190 = vmatprep.subr.mxu0 0.0
    %3191 = vmatpush1.msra.mxu0 0.0
    %3192 = vmatprep.subr.mxu0 0.0
    %3193 = vmatpush1.msra.mxu0 0.0
    %3194 = vmatprep.subr.mxu0 0.0
    %3195 = vmatpush1.msra.mxu0 0.0
    %3196 = vmatprep.subr.mxu0 0.0
    %3197 = vmatpush1.msra.mxu0 0.0
    %3198 = vmatprep.subr.mxu0 0.0
    %3199 = vmatpush1.msra.mxu0 0.0
    %3200 = vmatprep.subr.mxu0 0.0
    %3201 = vmatpush1.msra.mxu0 0.0
    %3202 = vmatprep.subr.mxu0 0.0
    %3203 = vmatpush1.msra.mxu0 0.0
    %3204 = vmatprep.subr.mxu0 0.0
    %3205 = vmatpush1.msra.mxu0 0.0
    %3206 = vmatprep.subr.mxu0 0.0
    %3207 = vmatpush1.msra.mxu0 0.0
    %3208 = vmatprep.subr.mxu0 0.0
    %3209 = vmatpush1.msra.mxu0 0.0
    %3210 = vmatprep.subr.mxu0 0.0
    %3211 = vmatpush1.msra.mxu0 0.0
    %3212 = vmatprep.subr.mxu0 0.0
    %3213 = vmatpush1.msra.mxu0 0.0
    %3214 = vmatprep.subr.mxu0 0.0
    %3215 = vmatpush1.msra.mxu0 0.0
    %3216 = vmatprep.subr.mxu0 0.0
    %3217 = vmatpush1.msra.mxu0 0.0
    %3218 = vmatprep.subr.mxu0 0.0
    %3219 = vmatpush1.msra.mxu0 0.0
    %3220 = vmatprep.subr.mxu0 0.0
    %3221 = vmatpush1.msra.mxu0 0.0
    %3222 = vmatprep.subr.mxu0 0.0
    %3223 = vmatpush1.msra.mxu0 0.0
    %3224 = vmatprep.subr.mxu0 0.0
    %3225 = vmatpush1.msra.mxu0 0.0
    %3226 = vmatprep.subr.mxu0 0.0
    %3227 = vmatpush1.msra.mxu0 0.0
    %3228 = vmatprep.subr.mxu0 0.0
    %3229 = vmatpush1.msra.mxu0 0.0
    %3230 = vmatprep.subr.mxu0 0.0
    %3231 = vmatpush1.msra.mxu0 0.0
    %3232 = vmatprep.subr.mxu0 0.0
    %3233 = vmatpush1.msra.mxu0 0.0
    %3234 = vmatprep.subr.mxu0 0.0
    %3235 = vmatpush1.msra.mxu0 0.0
    %3236 = vmatprep.subr.mxu0 0.0
    %3237 = vmatpush1.msra.mxu0 0.0
    %3238 = vmatprep.subr.mxu0 0.0
    %3239 = vmatpush1.msra.mxu0 0.0
    %3240 = vmatprep.subr.mxu0 0.0
    %3241 = vmatpush1.msra.mxu0 0.0
    %3242 = vmatprep.subr.mxu0 0.0
    %3243 = vmatpush1.msra.mxu0 0.0
    %3244 = vmatprep.subr.mxu0 0.0
    %3245 = vmatpush1.msra.mxu0 0.0
    %3246 = vmatprep.mubr.f32.mxu0 0.0
    %3247 = vmatmul.mubr.f32.gmra.mrb[0].mxu0 %v3052
    %v3248 = vpop.f32.mrb[0].mxu0
    %v3249 = vadd.f32 %v3181, %v3248
    %v3250 = vpop.f32.mrb[0].mxu0
    %3251 = vmatprep.mubr.f32.mxu0 0.0
    %3252 = vmatmul.mubr.f32.gmra.mrb[0].mxu0 %v3055
    %v3253 = vpop.f32.mrb[0].mxu0
    %v3254 = vadd.f32 %v3181, %v3253
    %v3255 = vpop.f32.mrb[0].mxu0
    %3256 = vmatprep.mubr.f32.mxu0 0.0
    %3257 = vmatmul.mubr.f32.gmra.mrb[0].mxu0 %v3058
    %v3258 = vpop.f32.mrb[0].mxu0
    %v3259 = vadd.f32 %v3181, %v3258
    %v3260 = vpop.f32.mrb[0].mxu0
    %3261 = vmatprep.mubr.f32.mxu0 0.0
    %3262 = vmatmul.mubr.f32.gmra.mrb[0].mxu0 %v3061
    %v3263 = vpop.f32.mrb[0].mxu0
    %v3264 = vadd.f32 %v3181, %v3263
    %v3265 = vpop.f32.mrb[0].mxu0
    %3266 = vdwg.mxu0
    %v3267 = vmul.f32 %v3165, %v3249
    %v3268 = vmul.f32 %v3167, %v3254
    %v3269 = vmul.f32 %v3169, %v3259
    %v3270 = vmul.f32 %v3171, %v3264
    %v3271 = vadd.f32 %v3267, %v2804
    %v3272 = vadd.f32 %v3268, %v2809
    %v3273 = vadd.f32 %v3269, %v2814
    %v3274 = vadd.f32 %v3270, %v2819
    %v3275 = vld [vmem:[%s23 + $0x3] sm:$0x1]
    %v3276 = vlaneseq
    %v3277 = vshrl.u32 %v3276, 7
    %v3278 = vsub.s32 0, %v3277
    %v3279 = vrot.slane %v3275, %v3278
    %v3280 = vmul.f32 %v3271, %v3279
    %v3281 = vmul.f32 %v3272, %v3279
    %v3282 = vmul.f32 %v3273, %v3279
    %v3283 = vmul.f32 %v3274, %v3279
    %v3284 = vld [vmem:[%s24 + $0x3] sm:$0x1]
    %v3285 = vlaneseq
    %v3286 = vshrl.u32 %v3285, 7
    %v3287 = vsub.s32 0, %v3286
    %v3288 = vrot.slane %v3284, %v3287
    %v3289 = vadd.f32 %v3280, %v3288
    %v3290 = vadd.f32 %v3281, %v3288
    %v3291 = vadd.f32 %v3282, %v3288
    %v3292 = vadd.f32 %v3283, %v3288
    %3293 = vset.pattern.permute.xlu0 3
    %3294 = vperm.xlu0 %3293, %v905
    %v3295 = vpop.permute.xlu0 %3294
    %3297 = vset.pattern.permute.xlu0 3
    %3298 = vperm.xlu0 %3297, %v906
    %v3299 = vpop.permute.xlu0 %3298
    %3301 = vset.pattern.permute.xlu0 3
    %3302 = vperm.xlu0 %3301, %v907
    %v3303 = vpop.permute.xlu0 %3302
    %3305 = vset.pattern.permute.xlu0 3
    %3306 = vperm.xlu0 %3305, %v908
    %v3307 = vpop.permute.xlu0 %3306
    %v3309 = vmul.f32 %v3289, %v3295
    %v3310 = vmul.f32 %v3290, %v3299
    %v3311 = vmul.f32 %v3291, %v3303
    %v3312 = vmul.f32 %v3292, %v3307
    %v3313 = vadd.f32 %v2710, %v3309
    %v3314 = vadd.f32 %v2711, %v3310
    %v3315 = vadd.f32 %v2712, %v3311
    %v3316 = vadd.f32 %v2713, %v3312
    %3317 = vst.msk [vmem:[#allocation26] sm:$0xff] %vm283, %v3313
    %3318 = vst.msk [vmem:[#allocation26 + $0x8] sm:$0xff] %vm283, %v3314
    %3319 = vst.msk [vmem:[#allocation26 + $0x10] sm:$0xff] %vm283, %v3315
    %3320 = vst.msk [vmem:[#allocation26 + $0x18] sm:$0xff] %vm283, %v3316
    // Predicated region
    $region162: #{tpu_custom_call.1} parent=1 // pred_check
      _
    $region163: #{tpu_custom_call.1} parent=1 // pred_check_branch
      %3322 = sbr.rel (0) target = $region165
    $region164: #{tpu_custom_call.1} parent=1 // pred_region
      %s3324 = ssub.s32 512, 512
      %3325 = vsyncadd [#allocation4], %s3324
      %s3326 = sshll.u32 [#allocation26], 4
      %s3327 = int_to_ptr.vmem [resolvable:$true] %s3326
      %3332 = dma.vmem_to_hbm [thread:$0]  %s3327, 512, %s25, [#allocation4], 128, 128, 8
    $region165: #{tpu_custom_call.1} parent=1 // pred_fallthru
      _
    // Predicated region
    $region166: #{tpu_custom_call.1} parent=1 // pred_check
      _
    $region167: #{tpu_custom_call.1} parent=1 // pred_check_branch
      %3334 = sbr.rel (0) target = $region169
    $region168: #{tpu_custom_call.1} parent=1 // pred_region
      _
    $region169: #{tpu_custom_call.1} parent=1 // pred_fallthru
      _
    // Predicated region
    $region170: #{tpu_custom_call.1} parent=1 // pred_check
      _
    $region171: #{tpu_custom_call.1} parent=1 // pred_check_branch
      %3336 = sbr.rel (0) target = $region173
    $region172: #{tpu_custom_call.1} parent=1 // pred_region
      %3337 = dma.done [#allocation4], 512
    $region173: #{tpu_custom_call.1} parent=1 // pred_fallthru
      _
    // Predicated region
    $region174: #{tpu_custom_call.1} parent=1 // pred_check
      _
    $region175: #{tpu_custom_call.1} parent=1 // pred_check_branch
      %3339 = sbr.rel (0) target = $region177
    $region176: #{tpu_custom_call.1} parent=1 // pred_region
      _
    $region177: #{tpu_custom_call.1} parent=1 // pred_fallthru
      _
    %3340 = vsyncpa [#allocation3], 1
    %3341 = vsyncpa [#allocation6], 1
    %3342 = vsyncpa [#allocation9], 1
    %3343 = vsyncpa [#allocation12], 1
    %3344 = vsyncpa [#allocation15], 1
    %3345 = vsyncpa [#allocation18], 1
    %3346 = vsyncpa [#allocation21], 1
    %3347 = vsyncpa [#allocation24], 1
    %3348 = vsyncpa [#allocation4], 1

</llo_original>
